<compile_context>
chip_gen: v7x
topology: tpu7x:2x2x1
jax: 0.10.0
libtpu: 0.0.40
codegen_flags: <defaults>
</compile_context>

<pallas_src>
import jax
import jax.numpy as jnp
from jax.experimental import pallas as pl
from jax.experimental.pallas import tpu as pltpu

HIDDEN = 32            # conv_out_channels == lstm_out_channels
NUM_CONV_LAYERS = 3    # GatedGraphConv num_layers
OUT_DIM = 4            # final Linear(32, 4)
LANE = 128             # 4*HIDDEN == one full vreg lane width


# --------------------------------------------------------------------------------------------
# Shared encoder math (traced inside the kernels): 3 GatedGraphConv steps with a shared GRU
# cell (gate order r, z, n), one LSTM step, ReLU, Linear(32->4) padded to 128 lanes.
# Returns h_full (n, 128) f32 where lanes 0:4 are h and lanes 4:128 are exactly zero.
# --------------------------------------------------------------------------------------------
def _encoder_math(x_ref, a_ref, wf_ref, wx_ref, gb_ref, lwx_ref, lwh_ref, lb_ref,
                  h0_ref, c0_ref, linw_ref, linb_ref):
    H = HIDDEN
    x = x_ref[...]                    # (n, H)  f32, zero-padded node features
    A = a_ref[...]                    # (n, n)  bf16, adjacency with 1/in_degree folded in
    wx = wx_ref[...]                  # (H, 4H) bf16, x-side gate weights [r|z|0|n_h]
    gb = gb_ref[...]                  # (1, 4H) f32, pre-summed gate biases

    for layer in range(NUM_CONV_LAYERS):            # unrolled: static 3 iterations
        xb = x.astype(jnp.bfloat16)
        # ggc_w folded into agg-side gate weights: A @ (x @ Wfused[l]) == (A @ x @ ggc_w) @ W_agg
        t = jnp.dot(xb, wf_ref[layer], preferred_element_type=jnp.float32)          # (n, 4H)
        agg_g = jnp.dot(A, t.astype(jnp.bfloat16), preferred_element_type=jnp.float32)
        x_g = jnp.dot(xb, wx, preferred_element_type=jnp.float32)
        g = agg_g + x_g + gb                                                         # (n, 4H)
        r = jax.nn.sigmoid(g[:, 0:H])
        z = jax.nn.sigmoid(g[:, H:2 * H])
        n = jnp.tanh(g[:, 2 * H:3 * H] + r * g[:, 3 * H:4 * H])
        x = (1.0 - z) * n + z * x

    # single-step LSTM, gates [i|f|g|o], split matmuls instead of a [x|h0] concat
    xb = x.astype(jnp.bfloat16)
    lg = (jnp.dot(xb, lwx_ref[...], preferred_element_type=jnp.float32)
          + jnp.dot(h0_ref[...], lwh_ref[...], preferred_element_type=jnp.float32)
          + lb_ref[...])
    i_g = jax.nn.sigmoid(lg[:, 0:H])
    f_g = jax.nn.sigmoid(lg[:, H:2 * H])
    g_g = jnp.tanh(lg[:, 2 * H:3 * H])
    o_g = jax.nn.sigmoid(lg[:, 3 * H:4 * H])
    c1 = f_g * c0_ref[...] + i_g * g_g
    hr = jnp.maximum(o_g * jnp.tanh(c1), 0.0)        # ReLU(LSTM output)

    # Linear(32,4) padded to 128 lanes (cols 4:128 of W and b are zero) -> lane-dense h
    h_full = (jnp.dot(hr.astype(jnp.bfloat16), linw_ref[...],
                      preferred_element_type=jnp.float32) + linb_ref[...])
    return h_full


# --------------------------------------------------------------------------------------------
# Kernel A (small/medium graphs): encoder + adj fully fused, single launch.
# --------------------------------------------------------------------------------------------
def _fused_kernel(x_ref, a_ref, wf_ref, wx_ref, gb_ref, lwx_ref, lwh_ref, lb_ref,
                  h0_ref, c0_ref, linw_ref, linb_ref, h_ref, adj_ref):
    h_full = _encoder_math(x_ref, a_ref, wf_ref, wx_ref, gb_ref, lwx_ref, lwh_ref, lb_ref,
                           h0_ref, c0_ref, linw_ref, linb_ref)
    h_ref[...] = h_full
    hb = h_full.astype(jnp.bfloat16)
    # adj = sigmoid(h @ h.T): contract lane dims directly, no transposed copy materialized;
    # zero pad lanes contribute 0, so this is exact including lin_b.
    logits = jax.lax.dot_general(hb, hb, (((1,), (1,)), ((), ())),
                                 preferred_element_type=jnp.float32)
    adj_ref[...] = jax.nn.sigmoid(logits).astype(jnp.bfloat16)


# --------------------------------------------------------------------------------------------
# Kernel B1 (large graphs): encoder only, lane-dense (n_pad, 128) f32 output.
# --------------------------------------------------------------------------------------------
def _encoder_kernel(x_ref, a_ref, wf_ref, wx_ref, gb_ref, lwx_ref, lwh_ref, lb_ref,
                    h0_ref, c0_ref, linw_ref, linb_ref, h_ref):
    h_ref[...] = _encoder_math(x_ref, a_ref, wf_ref, wx_ref, gb_ref, lwx_ref, lwh_ref, lb_ref,
                               h0_ref, c0_ref, linw_ref, linb_ref)


# --------------------------------------------------------------------------------------------
# Kernel B2 (large graphs): adj tiles. Row + column tiled ("parallel" x "parallel"),
# lane-dense bf16 output blocks.
# --------------------------------------------------------------------------------------------
def _adj_kernel(hrow_ref, hcol_ref, adj_ref):
    rows = hrow_ref[...].astype(jnp.bfloat16)
    cols = hcol_ref[...].astype(jnp.bfloat16)
    logits = jax.lax.dot_general(rows, cols, (((1,), (1,)), ((), ())),
                                 preferred_element_type=jnp.float32)
    adj_ref[...] = jax.nn.sigmoid(logits).astype(jnp.bfloat16)


def _pack_params(params):
    """Fold / pack gate-split weights into fused 128-lane matrices (bf16) + f32 biases."""
    H = HIDDEN
    z = jnp.zeros((H, H), jnp.float32)

    wih, whh = params["gru_wih"], params["gru_whh"]          # (3,H,H), gates (r, z, n)
    bih, bhh = params["gru_bih"], params["gru_bhh"]          # (3,1,H)
    w_agg = jnp.concatenate([wih[0], wih[1], wih[2], z], axis=1)    # agg side: [r|z|n_i|0]
    w_x = jnp.concatenate([whh[0], whh[1], z, whh[2]], axis=1)      # x   side: [r|z|0|n_h]
    gru_b = jnp.concatenate([bih[0] + bhh[0], bih[1] + bhh[1], bih[2], bhh[2]], axis=1)
    # fold the GatedGraphConv propagation weight into the agg-side gate weights (per layer)
    wfused = jnp.einsum("lij,jk->lik", params["ggc_w"], w_agg)      # (3, H, 4H)

    lwih, lwhh = params["lstm_wih"], params["lstm_whh"]      # (4,H,H), gates (i, f, g, o)
    lbih, lbhh = params["lstm_bih"], params["lstm_bhh"]
    lstm_wx = jnp.concatenate([lwih[k] for k in range(4)], axis=1)
    lstm_wh = jnp.concatenate([lwhh[k] for k in range(4)], axis=1)
    lstm_b = jnp.concatenate([lbih[k] + lbhh[k] for k in range(4)], axis=1)

    lin_w_pad = jnp.zeros((H, LANE), jnp.float32).at[:, :OUT_DIM].set(params["lin_w"])
    lin_b_pad = jnp.zeros((1, LANE), jnp.float32).at[:, :OUT_DIM].set(params["lin_b"])

    return (wfused.astype(jnp.bfloat16), w_x.astype(jnp.bfloat16), gru_b,
            lstm_wx.astype(jnp.bfloat16), lstm_wh.astype(jnp.bfloat16), lstm_b,
            lin_w_pad.astype(jnp.bfloat16), lin_b_pad)


def _vmem_cap_bytes():
    """Generation-aware scoped-VMEM ceiling (leave ~25% headroom for compiler scratch)."""
    try:
        info = pltpu.get_tpu_info()
        cap = getattr(info, "vmem_capacity_bytes", None)
        if cap:
            return int(cap) * 3 // 4
    except Exception:
        pass
    return 48 << 20


def _pick_tile(n, candidates):
    for t in candidates:
        if n % t == 0:
            return t
    return 128


def recurrent_dygr_encoder(x, edge_index, edge_weight, h0, c0, params):
    """Wrapper: densify the graph (glue), pack weights, run the Pallas kernels."""
    N, F = x.shape
    assert F <= HIDDEN, "GatedGraphConv requires in_channels <= out_channels"
    n_pad = max(LANE, ((N + LANE - 1) // LANE) * LANE)       # lane-dense adj / h_full rows

    x_pad = jnp.zeros((n_pad, HIDDEN), jnp.float32).at[:N, :F].set(x.astype(jnp.float32))
    h0_pad = jnp.zeros((n_pad, HIDDEN), jnp.float32).at[:N].set(
        h0.astype(jnp.float32)).astype(jnp.bfloat16)
    c0_pad = jnp.zeros((n_pad, HIDDEN), jnp.float32).at[:N].set(c0.astype(jnp.float32))

    # TODO(synk): the per-edge scatter_mean is expressed as a dense adjacency matmul; the
    # scatter-add that builds A / in-degree stays in plain JAX (data-dependent scatter has no
    # clean rectangular BlockSpec form at this size).
    src, dst = edge_index[0], edge_index[1]
    A = jnp.zeros((n_pad, n_pad), jnp.float32).at[dst, src].add(edge_weight.astype(jnp.float32))
    deg = jnp.zeros((n_pad,), jnp.float32).at[dst].add(1.0)
    A_scaled = (A * (1.0 / jnp.maximum(deg, 1.0))[:, None]).astype(jnp.bfloat16)

    wf, wx, gb, lwx, lwh, lb, linw, linb = _pack_params(params)
    inputs = (x_pad, A_scaled, wf, wx, gb, lwx, lwh, lb, h0_pad, c0_pad, linw, linb)

    vmem = pl.BlockSpec(memory_space=pltpu.MemorySpace.VMEM)
    in_bytes = sum(a.nbytes for a in inputs)
    cap = _vmem_cap_bytes()

    if n_pad <= 1024:
        # -------- single fused launch: encoder + adj, no inter-kernel HBM round trip --------
        out_bytes = n_pad * LANE * 4 + n_pad * n_pad * 2
        scratch = n_pad * n_pad * 4 + 8 * n_pad * LANE * 4     # f32 logits + gate temporaries
        vmem_limit = int(min(max(2 * (in_bytes + out_bytes + scratch), 32 << 20), cap))
        h_full, adj_pad = pl.pallas_call(
            _fused_kernel,
            out_shape=(jax.ShapeDtypeStruct((n_pad, LANE), jnp.float32),
                       jax.ShapeDtypeStruct((n_pad, n_pad), jnp.bfloat16)),
            in_specs=[vmem] * len(inputs),
            out_specs=(vmem, vmem),
            compiler_params=pltpu.CompilerParams(vmem_limit_bytes=vmem_limit),
        )(*inputs)
    else:
        # -------- large graphs: encoder kernel + row/col tiled adj kernel --------
        # TODO(synk): for very large N (A bf16 no longer fits VMEM, esp. v7x 64 MiB) the A@t
        # aggregation should stream dst-row tiles of A via memory_space=pl.ANY +
        # pltpu.emit_pipeline; the cross-layer all-node dependency keeps this whole-array here.
        out_bytes = n_pad * LANE * 4
        scratch = 8 * n_pad * LANE * 4
        vmem_limit = int(min(max(2 * (in_bytes + out_bytes + scratch), 32 << 20), cap))
        h_full = pl.pallas_call(
            _encoder_kernel,
            out_shape=jax.ShapeDtypeStruct((n_pad, LANE), jnp.float32),
            in_specs=[vmem] * len(inputs),
            out_specs=vmem,
            compiler_params=pltpu.CompilerParams(vmem_limit_bytes=vmem_limit),
        )(*inputs)

        tile_r = _pick_tile(n_pad, (512, 256, 128))
        tile_c = _pick_tile(n_pad, (2048, 1024, 512, 256, 128))
        adj_pad = pl.pallas_call(
            _adj_kernel,
            grid=(n_pad // tile_r, n_pad // tile_c),
            in_specs=[pl.BlockSpec((tile_r, LANE), lambda i, j: (i, 0)),
                      pl.BlockSpec((tile_c, LANE), lambda i, j: (j, 0))],
            out_specs=pl.BlockSpec((tile_r, tile_c), lambda i, j: (i, j)),
            out_shape=jax.ShapeDtypeStruct((n_pad, n_pad), jnp.bfloat16),
            compiler_params=pltpu.CompilerParams(
                dimension_semantics=("parallel", "parallel"),
                vmem_limit_bytes=32 << 20),
        )(h_full, h_full)

    h = h_full[:N, :OUT_DIM]            # lanes 4:128 are exactly zero padding
    adj = adj_pad[:N, :N]               # padded rows/cols (sigmoid(0)=0.5) sliced off
    return h, adj


def init_params(key):
    """Deterministic synthetic parameter init (shapes follow the PyTorch module __init__)."""
    ks = jax.random.split(key, 10)

    def uni(k, shape, bound):
        return jax.random.uniform(k, shape, jnp.float32, -bound, bound)

    hid = HIDDEN
    gk = 1.0 / float(hid) ** 0.5
    xav = (6.0 / (hid + OUT_DIM)) ** 0.5  # xavier_uniform bound for Linear(32, 4)

    return dict(
        # GatedGraphConv propagation weights: (num_layers, H, H), used as x @ W[l]
        ggc_w=uni(ks[0], (NUM_CONV_LAYERS, hid, hid), gk),
        # GRUCell weights (shared across propagation steps), gate-split (r, z, n)
        gru_wih=uni(ks[1], (3, hid, hid), gk),
        gru_whh=uni(ks[2], (3, hid, hid), gk),
        gru_bih=uni(ks[3], (3, 1, hid), gk),
        gru_bhh=uni(ks[4], (3, 1, hid), gk),
        # LSTM weights, gate-split (i, f, g, o), stored as (gate, in, out)
        lstm_wih=uni(ks[5], (4, hid, hid), gk),
        lstm_whh=uni(ks[6], (4, hid, hid), gk),
        lstm_bih=uni(ks[7], (4, 1, hid), gk),
        lstm_bhh=uni(ks[8], (4, 1, hid), gk),
        # Linear(32 -> 4): xavier_uniform weight, zero bias (per reset_parameters)
        lin_w=uni(ks[9], (hid, OUT_DIM), xav),
        lin_b=jnp.zeros((1, OUT_DIM), jnp.float32),
    )


def _reference(x, edge_index, edge_weight, h0, c0, params):
    """Pure-JAX (f32, unfused) mirror of the PyTorch forward for correctness checking."""
    N, F = x.shape
    xc = jnp.pad(x.astype(jnp.float32), ((0, 0), (0, HIDDEN - F)))
    src, dst = edge_index[0], edge_index[1]
    A = jnp.zeros((N, N), jnp.float32).at[dst, src].add(edge_weight.astype(jnp.float32))
    deg_inv = (1.0 / jnp.maximum(jnp.zeros((N,), jnp.float32).at[dst].add(1.0), 1.0))[:, None]

    for l in range(NUM_CONV_LAYERS):
        m = xc @ params["ggc_w"][l]
        agg = (A @ m) * deg_inv
        r = jax.nn.sigmoid(agg @ params["gru_wih"][0] + params["gru_bih"][0]
                           + xc @ params["gru_whh"][0] + params["gru_bhh"][0])
        z = jax.nn.sigmoid(agg @ params["gru_wih"][1] + params["gru_bih"][1]
                           + xc @ params["gru_whh"][1] + params["gru_bhh"][1])
        n = jnp.tanh(agg @ params["gru_wih"][2] + params["gru_bih"][2]
                     + r * (xc @ params["gru_whh"][2] + params["gru_bhh"][2]))
        xc = (1.0 - z) * n + z * xc

    def lg(k):
        return (xc @ params["lstm_wih"][k] + params["lstm_bih"][k]
                + h0 @ params["lstm_whh"][k] + params["lstm_bhh"][k])

    i_g, f_g = jax.nn.sigmoid(lg(0)), jax.nn.sigmoid(lg(1))
    g_g, o_g = jnp.tanh(lg(2)), jax.nn.sigmoid(lg(3))
    c1 = f_g * c0 + i_g * g_g
    h1 = o_g * jnp.tanh(c1)
    h = jnp.maximum(h1, 0.0) @ params["lin_w"] + params["lin_b"]
    adj = jax.nn.sigmoid(h @ h.T)
    return h, adj


if __name__ == "__main__":
    key = jax.random.PRNGKey(0)
    kx, ke, kw, kh, kc, kp = jax.random.split(key, 6)

    N, F, E = 16, 4, 48                       # nodes, node_features, edges
    x = jax.random.normal(kx, (N, F), jnp.float32)
    edge_index = jax.random.randint(ke, (2, E), 0, N)
    edge_weight = jax.random.uniform(kw, (E,), jnp.float32, 0.1, 1.0)
    h0 = jax.random.normal(kh, (N, HIDDEN), jnp.float32)
    c0 = jax.random.normal(kc, (N, HIDDEN), jnp.float32)
    params = init_params(kp)

    h, adj = recurrent_dygr_encoder(x, edge_index, edge_weight, h0, c0, params)
    jax.block_until_ready((h, adj))

    h_ref, adj_ref = _reference(x, edge_index, edge_weight, h0, c0, params)
    assert h.shape == (N, OUT_DIM) and adj.shape == (N, N)
    # bf16 MXU operands + bf16 adj output -> tolerance loosened from 1e-4
    assert jnp.allclose(h, h_ref, atol=5e-2), "h mismatch vs reference"
    assert jnp.allclose(adj.astype(jnp.float32), adj_ref, atol=5e-2), "adj mismatch vs reference"

    print("KERNEL_OK")
</pallas_src>

<mosaic_0001>
module attributes {stable_mosaic.version = 11 : i64} {
  func.func @_fused_kernel(%arg0: memref<128x32xf32, #tpu.memory_space<vmem>>, %arg1: memref<128x128xbf16, #tpu.memory_space<vmem>>, %arg2: memref<3x32x128xbf16, #tpu.memory_space<vmem>>, %arg3: memref<32x128xbf16, #tpu.memory_space<vmem>>, %arg4: memref<1x128xf32, #tpu.memory_space<vmem>>, %arg5: memref<32x128xbf16, #tpu.memory_space<vmem>>, %arg6: memref<32x128xbf16, #tpu.memory_space<vmem>>, %arg7: memref<1x128xf32, #tpu.memory_space<vmem>>, %arg8: memref<128x32xbf16, #tpu.memory_space<vmem>>, %arg9: memref<128x32xf32, #tpu.memory_space<vmem>>, %arg10: memref<32x128xbf16, #tpu.memory_space<vmem>>, %arg11: memref<1x128xf32, #tpu.memory_space<vmem>>, %arg12: memref<128x128xf32, #tpu.memory_space<vmem>>, %arg13: memref<128x128xbf16, #tpu.memory_space<vmem>>) attributes {dimension_semantics = [], scalar_prefetch = 0 : i64, scratch_operands = 0 : i64, tpu.core_type = #tpu.core_type<tc>} {
    %c0 = arith.constant 0 : index
    %c0_0 = arith.constant 0 : index
    %0 = vector.load %arg0[%c0, %c0_0] : memref<128x32xf32, #tpu.memory_space<vmem>>, vector<128x32xf32>
    %c0_1 = arith.constant 0 : index
    %c0_2 = arith.constant 0 : index
    %1 = vector.load %arg1[%c0_1, %c0_2] : memref<128x128xbf16, #tpu.memory_space<vmem>>, vector<128x128xbf16>
    %c0_3 = arith.constant 0 : index
    %c0_4 = arith.constant 0 : index
    %2 = vector.load %arg3[%c0_3, %c0_4] : memref<32x128xbf16, #tpu.memory_space<vmem>>, vector<32x128xbf16>
    %c0_5 = arith.constant 0 : index
    %c0_6 = arith.constant 0 : index
    %3 = vector.load %arg4[%c0_5, %c0_6] : memref<1x128xf32, #tpu.memory_space<vmem>>, vector<1x128xf32>
    %4 = arith.truncf %0 : vector<128x32xf32> to vector<128x32xbf16>
    %c0_7 = arith.constant 0 : index
    %c0_8 = arith.constant 0 : index
    %c0_9 = arith.constant 0 : index
    %5 = vector.load %arg2[%c0_7, %c0_8, %c0_9] : memref<3x32x128xbf16, #tpu.memory_space<vmem>>, vector<1x32x128xbf16>
    %6 = vector.shape_cast %5 : vector<1x32x128xbf16> to vector<32x128xbf16>
    %cst = arith.constant dense<0.000000e+00> : vector<128x128xf32>
    %7 = tpu.matmul %4, %6, %cst {dimension_numbers = #tpu.dot_dimension_numbers<[1], [0], [0], [1], [0, 0, 1, 1], [], []>} : vector<128x32xbf16>, vector<32x128xbf16>, vector<128x128xf32> -> vector<128x128xf32>
    %8 = arith.truncf %7 : vector<128x128xf32> to vector<128x128xbf16>
    %cst_10 = arith.constant dense<0.000000e+00> : vector<128x128xf32>
    %9 = tpu.matmul %1, %8, %cst_10 {dimension_numbers = #tpu.dot_dimension_numbers<[1], [0], [0], [1], [0, 0, 1, 1], [], []>} : vector<128x128xbf16>, vector<128x128xbf16>, vector<128x128xf32> -> vector<128x128xf32>
    %cst_11 = arith.constant dense<0.000000e+00> : vector<128x128xf32>
    %10 = tpu.matmul %4, %2, %cst_11 {dimension_numbers = #tpu.dot_dimension_numbers<[1], [0], [0], [1], [0, 0, 1, 1], [], []>} : vector<128x32xbf16>, vector<32x128xbf16>, vector<128x128xf32> -> vector<128x128xf32>
    %11 = arith.addf %9, %10 : vector<128x128xf32>
    %12 = vector.broadcast %3 : vector<1x128xf32> to vector<128x128xf32>
    %13 = arith.addf %11, %12 : vector<128x128xf32>
    %14 = vector.extract_strided_slice %13 {offsets = [0, 0], sizes = [128, 32], strides = [1, 1]} : vector<128x128xf32> to vector<128x32xf32>
    %15 = arith.negf %14 : vector<128x32xf32>
    %16 = math.exp %15 : vector<128x32xf32>
    %cst_12 = arith.constant 1.000000e+00 : f32
    %17 = vector.broadcast %cst_12 : f32 to vector<128x32xf32>
    %18 = arith.addf %17, %16 : vector<128x32xf32>
    %19 = arith.divf %17, %18 : vector<128x32xf32>
    %20 = vector.extract_strided_slice %13 {offsets = [0, 32], sizes = [128, 32], strides = [1, 1]} : vector<128x128xf32> to vector<128x32xf32>
    %21 = arith.negf %20 : vector<128x32xf32>
    %22 = math.exp %21 : vector<128x32xf32>
    %cst_13 = arith.constant 1.000000e+00 : f32
    %23 = vector.broadcast %cst_13 : f32 to vector<128x32xf32>
    %24 = arith.addf %23, %22 : vector<128x32xf32>
    %25 = arith.divf %23, %24 : vector<128x32xf32>
    %26 = vector.extract_strided_slice %13 {offsets = [0, 64], sizes = [128, 32], strides = [1, 1]} : vector<128x128xf32> to vector<128x32xf32>
    %27 = vector.extract_strided_slice %13 {offsets = [0, 96], sizes = [128, 32], strides = [1, 1]} : vector<128x128xf32> to vector<128x32xf32>
    %28 = arith.mulf %19, %27 : vector<128x32xf32>
    %29 = arith.addf %26, %28 : vector<128x32xf32>
    %30 = math.tanh %29 : vector<128x32xf32>
    %cst_14 = arith.constant 1.000000e+00 : f32
    %31 = vector.broadcast %cst_14 : f32 to vector<128x32xf32>
    %32 = arith.subf %31, %25 : vector<128x32xf32>
    %33 = arith.mulf %32, %30 : vector<128x32xf32>
    %34 = arith.mulf %25, %0 : vector<128x32xf32>
    %35 = arith.addf %33, %34 : vector<128x32xf32>
    %36 = arith.truncf %35 : vector<128x32xf32> to vector<128x32xbf16>
    %c1 = arith.constant 1 : index
    %c0_15 = arith.constant 0 : index
    %c0_16 = arith.constant 0 : index
    %37 = vector.load %arg2[%c1, %c0_15, %c0_16] : memref<3x32x128xbf16, #tpu.memory_space<vmem>>, vector<1x32x128xbf16>
    %38 = vector.shape_cast %37 : vector<1x32x128xbf16> to vector<32x128xbf16>
    %cst_17 = arith.constant dense<0.000000e+00> : vector<128x128xf32>
    %39 = tpu.matmul %36, %38, %cst_17 {dimension_numbers = #tpu.dot_dimension_numbers<[1], [0], [0], [1], [0, 0, 1, 1], [], []>} : vector<128x32xbf16>, vector<32x128xbf16>, vector<128x128xf32> -> vector<128x128xf32>
    %40 = arith.truncf %39 : vector<128x128xf32> to vector<128x128xbf16>
    %cst_18 = arith.constant dense<0.000000e+00> : vector<128x128xf32>
    %41 = tpu.matmul %1, %40, %cst_18 {dimension_numbers = #tpu.dot_dimension_numbers<[1], [0], [0], [1], [0, 0, 1, 1], [], []>} : vector<128x128xbf16>, vector<128x128xbf16>, vector<128x128xf32> -> vector<128x128xf32>
    %cst_19 = arith.constant dense<0.000000e+00> : vector<128x128xf32>
    %42 = tpu.matmul %36, %2, %cst_19 {dimension_numbers = #tpu.dot_dimension_numbers<[1], [0], [0], [1], [0, 0, 1, 1], [], []>} : vector<128x32xbf16>, vector<32x128xbf16>, vector<128x128xf32> -> vector<128x128xf32>
    %43 = arith.addf %41, %42 : vector<128x128xf32>
    %44 = vector.broadcast %3 : vector<1x128xf32> to vector<128x128xf32>
    %45 = arith.addf %43, %44 : vector<128x128xf32>
    %46 = vector.extract_strided_slice %45 {offsets = [0, 0], sizes = [128, 32], strides = [1, 1]} : vector<128x128xf32> to vector<128x32xf32>
    %47 = arith.negf %46 : vector<128x32xf32>
    %48 = math.exp %47 : vector<128x32xf32>
    %cst_20 = arith.constant 1.000000e+00 : f32
    %49 = vector.broadcast %cst_20 : f32 to vector<128x32xf32>
    %50 = arith.addf %49, %48 : vector<128x32xf32>
    %51 = arith.divf %49, %50 : vector<128x32xf32>
    %52 = vector.extract_strided_slice %45 {offsets = [0, 32], sizes = [128, 32], strides = [1, 1]} : vector<128x128xf32> to vector<128x32xf32>
    %53 = arith.negf %52 : vector<128x32xf32>
    %54 = math.exp %53 : vector<128x32xf32>
    %cst_21 = arith.constant 1.000000e+00 : f32
    %55 = vector.broadcast %cst_21 : f32 to vector<128x32xf32>
    %56 = arith.addf %55, %54 : vector<128x32xf32>
    %57 = arith.divf %55, %56 : vector<128x32xf32>
    %58 = vector.extract_strided_slice %45 {offsets = [0, 64], sizes = [128, 32], strides = [1, 1]} : vector<128x128xf32> to vector<128x32xf32>
    %59 = vector.extract_strided_slice %45 {offsets = [0, 96], sizes = [128, 32], strides = [1, 1]} : vector<128x128xf32> to vector<128x32xf32>
    %60 = arith.mulf %51, %59 : vector<128x32xf32>
    %61 = arith.addf %58, %60 : vector<128x32xf32>
    %62 = math.tanh %61 : vector<128x32xf32>
    %cst_22 = arith.constant 1.000000e+00 : f32
    %63 = vector.broadcast %cst_22 : f32 to vector<128x32xf32>
    %64 = arith.subf %63, %57 : vector<128x32xf32>
    %65 = arith.mulf %64, %62 : vector<128x32xf32>
    %66 = arith.mulf %57, %35 : vector<128x32xf32>
    %67 = arith.addf %65, %66 : vector<128x32xf32>
    %68 = arith.truncf %67 : vector<128x32xf32> to vector<128x32xbf16>
    %c2 = arith.constant 2 : index
    %c0_23 = arith.constant 0 : index
    %c0_24 = arith.constant 0 : index
    %69 = vector.load %arg2[%c2, %c0_23, %c0_24] : memref<3x32x128xbf16, #tpu.memory_space<vmem>>, vector<1x32x128xbf16>
    %70 = vector.shape_cast %69 : vector<1x32x128xbf16> to vector<32x128xbf16>
    %cst_25 = arith.constant dense<0.000000e+00> : vector<128x128xf32>
    %71 = tpu.matmul %68, %70, %cst_25 {dimension_numbers = #tpu.dot_dimension_numbers<[1], [0], [0], [1], [0, 0, 1, 1], [], []>} : vector<128x32xbf16>, vector<32x128xbf16>, vector<128x128xf32> -> vector<128x128xf32>
    %72 = arith.truncf %71 : vector<128x128xf32> to vector<128x128xbf16>
    %cst_26 = arith.constant dense<0.000000e+00> : vector<128x128xf32>
    %73 = tpu.matmul %1, %72, %cst_26 {dimension_numbers = #tpu.dot_dimension_numbers<[1], [0], [0], [1], [0, 0, 1, 1], [], []>} : vector<128x128xbf16>, vector<128x128xbf16>, vector<128x128xf32> -> vector<128x128xf32>
    %cst_27 = arith.constant dense<0.000000e+00> : vector<128x128xf32>
    %74 = tpu.matmul %68, %2, %cst_27 {dimension_numbers = #tpu.dot_dimension_numbers<[1], [0], [0], [1], [0, 0, 1, 1], [], []>} : vector<128x32xbf16>, vector<32x128xbf16>, vector<128x128xf32> -> vector<128x128xf32>
    %75 = arith.addf %73, %74 : vector<128x128xf32>
    %76 = vector.broadcast %3 : vector<1x128xf32> to vector<128x128xf32>
    %77 = arith.addf %75, %76 : vector<128x128xf32>
    %78 = vector.extract_strided_slice %77 {offsets = [0, 0], sizes = [128, 32], strides = [1, 1]} : vector<128x128xf32> to vector<128x32xf32>
    %79 = arith.negf %78 : vector<128x32xf32>
    %80 = math.exp %79 : vector<128x32xf32>
    %cst_28 = arith.constant 1.000000e+00 : f32
    %81 = vector.broadcast %cst_28 : f32 to vector<128x32xf32>
    %82 = arith.addf %81, %80 : vector<128x32xf32>
    %83 = arith.divf %81, %82 : vector<128x32xf32>
    %84 = vector.extract_strided_slice %77 {offsets = [0, 32], sizes = [128, 32], strides = [1, 1]} : vector<128x128xf32> to vector<128x32xf32>
    %85 = arith.negf %84 : vector<128x32xf32>
    %86 = math.exp %85 : vector<128x32xf32>
    %cst_29 = arith.constant 1.000000e+00 : f32
    %87 = vector.broadcast %cst_29 : f32 to vector<128x32xf32>
    %88 = arith.addf %87, %86 : vector<128x32xf32>
    %89 = arith.divf %87, %88 : vector<128x32xf32>
    %90 = vector.extract_strided_slice %77 {offsets = [0, 64], sizes = [128, 32], strides = [1, 1]} : vector<128x128xf32> to vector<128x32xf32>
    %91 = vector.extract_strided_slice %77 {offsets = [0, 96], sizes = [128, 32], strides = [1, 1]} : vector<128x128xf32> to vector<128x32xf32>
    %92 = arith.mulf %83, %91 : vector<128x32xf32>
    %93 = arith.addf %90, %92 : vector<128x32xf32>
    %94 = math.tanh %93 : vector<128x32xf32>
    %cst_30 = arith.constant 1.000000e+00 : f32
    %95 = vector.broadcast %cst_30 : f32 to vector<128x32xf32>
    %96 = arith.subf %95, %89 : vector<128x32xf32>
    %97 = arith.mulf %96, %94 : vector<128x32xf32>
    %98 = arith.mulf %89, %67 : vector<128x32xf32>
    %99 = arith.addf %97, %98 : vector<128x32xf32>
    %100 = arith.truncf %99 : vector<128x32xf32> to vector<128x32xbf16>
    %c0_31 = arith.constant 0 : index
    %c0_32 = arith.constant 0 : index
    %101 = vector.load %arg5[%c0_31, %c0_32] : memref<32x128xbf16, #tpu.memory_space<vmem>>, vector<32x128xbf16>
    %cst_33 = arith.constant dense<0.000000e+00> : vector<128x128xf32>
    %102 = tpu.matmul %100, %101, %cst_33 {dimension_numbers = #tpu.dot_dimension_numbers<[1], [0], [0], [1], [0, 0, 1, 1], [], []>} : vector<128x32xbf16>, vector<32x128xbf16>, vector<128x128xf32> -> vector<128x128xf32>
    %c0_34 = arith.constant 0 : index
    %c0_35 = arith.constant 0 : index
    %103 = vector.load %arg8[%c0_34, %c0_35] : memref<128x32xbf16, #tpu.memory_space<vmem>>, vector<128x32xbf16>
    %c0_36 = arith.constant 0 : index
    %c0_37 = arith.constant 0 : index
    %104 = vector.load %arg6[%c0_36, %c0_37] : memref<32x128xbf16, #tpu.memory_space<vmem>>, vector<32x128xbf16>
    %cst_38 = arith.constant dense<0.000000e+00> : vector<128x128xf32>
    %105 = tpu.matmul %103, %104, %cst_38 {dimension_numbers = #tpu.dot_dimension_numbers<[1], [0], [0], [1], [0, 0, 1, 1], [], []>} : vector<128x32xbf16>, vector<32x128xbf16>, vector<128x128xf32> -> vector<128x128xf32>
    %106 = arith.addf %102, %105 : vector<128x128xf32>
    %c0_39 = arith.constant 0 : index
    %c0_40 = arith.constant 0 : index
    %107 = vector.load %arg7[%c0_39, %c0_40] : memref<1x128xf32, #tpu.memory_space<vmem>>, vector<1x128xf32>
    %108 = vector.broadcast %107 : vector<1x128xf32> to vector<128x128xf32>
    %109 = arith.addf %106, %108 : vector<128x128xf32>
    %110 = vector.extract_strided_slice %109 {offsets = [0, 0], sizes = [128, 32], strides = [1, 1]} : vector<128x128xf32> to vector<128x32xf32>
    %111 = arith.negf %110 : vector<128x32xf32>
    %112 = math.exp %111 : vector<128x32xf32>
    %cst_41 = arith.constant 1.000000e+00 : f32
    %113 = vector.broadcast %cst_41 : f32 to vector<128x32xf32>
    %114 = arith.addf %113, %112 : vector<128x32xf32>
    %115 = arith.divf %113, %114 : vector<128x32xf32>
    %116 = vector.extract_strided_slice %109 {offsets = [0, 32], sizes = [128, 32], strides = [1, 1]} : vector<128x128xf32> to vector<128x32xf32>
    %117 = arith.negf %116 : vector<128x32xf32>
    %118 = math.exp %117 : vector<128x32xf32>
    %cst_42 = arith.constant 1.000000e+00 : f32
    %119 = vector.broadcast %cst_42 : f32 to vector<128x32xf32>
    %120 = arith.addf %119, %118 : vector<128x32xf32>
    %121 = arith.divf %119, %120 : vector<128x32xf32>
    %122 = vector.extract_strided_slice %109 {offsets = [0, 64], sizes = [128, 32], strides = [1, 1]} : vector<128x128xf32> to vector<128x32xf32>
    %123 = math.tanh %122 : vector<128x32xf32>
    %124 = vector.extract_strided_slice %109 {offsets = [0, 96], sizes = [128, 32], strides = [1, 1]} : vector<128x128xf32> to vector<128x32xf32>
    %125 = arith.negf %124 : vector<128x32xf32>
    %126 = math.exp %125 : vector<128x32xf32>
    %cst_43 = arith.constant 1.000000e+00 : f32
    %127 = vector.broadcast %cst_43 : f32 to vector<128x32xf32>
    %128 = arith.addf %127, %126 : vector<128x32xf32>
    %129 = arith.divf %127, %128 : vector<128x32xf32>
    %c0_44 = arith.constant 0 : index
    %c0_45 = arith.constant 0 : index
    %130 = vector.load %arg9[%c0_44, %c0_45] : memref<128x32xf32, #tpu.memory_space<vmem>>, vector<128x32xf32>
    %131 = arith.mulf %121, %130 : vector<128x32xf32>
    %132 = arith.mulf %115, %123 : vector<128x32xf32>
    %133 = arith.addf %131, %132 : vector<128x32xf32>
    %134 = math.tanh %133 : vector<128x32xf32>
    %135 = arith.mulf %129, %134 : vector<128x32xf32>
    %cst_46 = arith.constant 0.000000e+00 : f32
    %136 = vector.broadcast %cst_46 : f32 to vector<128x32xf32>
    %137 = arith.maximumf %135, %136 : vector<128x32xf32>
    %138 = arith.truncf %137 : vector<128x32xf32> to vector<128x32xbf16>
    %c0_47 = arith.constant 0 : index
    %c0_48 = arith.constant 0 : index
    %139 = vector.load %arg10[%c0_47, %c0_48] : memref<32x128xbf16, #tpu.memory_space<vmem>>, vector<32x128xbf16>
    %cst_49 = arith.constant dense<0.000000e+00> : vector<128x128xf32>
    %140 = tpu.matmul %138, %139, %cst_49 {dimension_numbers = #tpu.dot_dimension_numbers<[1], [0], [0], [1], [0, 0, 1, 1], [], []>} : vector<128x32xbf16>, vector<32x128xbf16>, vector<128x128xf32> -> vector<128x128xf32>
    %c0_50 = arith.constant 0 : index
    %c0_51 = arith.constant 0 : index
    %141 = vector.load %arg11[%c0_50, %c0_51] : memref<1x128xf32, #tpu.memory_space<vmem>>, vector<1x128xf32>
    %142 = vector.broadcast %141 : vector<1x128xf32> to vector<128x128xf32>
    %143 = arith.addf %140, %142 : vector<128x128xf32>
    %c0_52 = arith.constant 0 : index
    %c0_53 = arith.constant 0 : index
    %144 = vector.load %arg12[%c0_52, %c0_53] : memref<128x128xf32, #tpu.memory_space<vmem>>, vector<128x128xf32>
    tpu.vector_store %arg12[%c0_52, %c0_53], %143 {strides = array<i32>} : memref<128x128xf32, #tpu.memory_space<vmem>>, vector<128x128xf32>,
    %145 = arith.truncf %143 : vector<128x128xf32> to vector<128x128xbf16>
    %cst_54 = arith.constant dense<0.000000e+00> : vector<128x128xf32>
    %146 = tpu.matmul %145, %145, %cst_54 {dimension_numbers = #tpu.dot_dimension_numbers<[1], [1], [0], [0], [0, 0, 1, 0], [], []>} : vector<128x128xbf16>, vector<128x128xbf16>, vector<128x128xf32> -> vector<128x128xf32>
    %147 = arith.negf %146 : vector<128x128xf32>
    %148 = math.exp %147 : vector<128x128xf32>
    %cst_55 = arith.constant 1.000000e+00 : f32
    %149 = vector.broadcast %cst_55 : f32 to vector<128x128xf32>
    %150 = arith.addf %149, %148 : vector<128x128xf32>
    %151 = arith.divf %149, %150 : vector<128x128xf32>
    %152 = arith.truncf %151 : vector<128x128xf32> to vector<128x128xbf16>
    %c0_56 = arith.constant 0 : index
    %c0_57 = arith.constant 0 : index
    %153 = vector.load %arg13[%c0_56, %c0_57] : memref<128x128xbf16, #tpu.memory_space<vmem>>, vector<128x128xbf16>
    tpu.vector_store %arg13[%c0_56, %c0_57], %152 {strides = array<i32>} : memref<128x128xbf16, #tpu.memory_space<vmem>>, vector<128x128xbf16>,
    return
  }
}

</mosaic_0001>

<llo_original>
// kernel: tpu_custom_call.1
$region0: #{tpu_custom_call.1}
  #allocation0 [shape = 'u32[]', space=smem, size = 0x4, offset = 0x4, fixed_abs, tag = 'smem constant byte address 0x4 - core index']
  #allocation1 [shape = 'u32[144,128]{1,0:T(1,128)}', space=vmem, size = 0x12000, scoped, tag = 'internal scratch']
  %s0 = inlined_call_operand.vmem [shape: f32[128,32], index: 0, kind: input, shape index: {}]
  %s1 = inlined_call_operand.vmem [shape: bf16[128,128], index: 1, kind: input, shape index: {}]
  %s2 = inlined_call_operand.vmem [shape: bf16[3,32,128], index: 2, kind: input, shape index: {}]
  %s3 = inlined_call_operand.vmem [shape: bf16[32,128], index: 3, kind: input, shape index: {}]
  %s4 = inlined_call_operand.vmem [shape: f32[1,128], index: 4, kind: input, shape index: {}]
  %s5 = inlined_call_operand.vmem [shape: bf16[32,128], index: 5, kind: input, shape index: {}]
  %s6 = inlined_call_operand.vmem [shape: bf16[32,128], index: 6, kind: input, shape index: {}]
  %s7 = inlined_call_operand.vmem [shape: f32[1,128], index: 7, kind: input, shape index: {}]
  %s8 = inlined_call_operand.vmem [shape: bf16[128,32], index: 8, kind: input, shape index: {}]
  %s9 = inlined_call_operand.vmem [shape: f32[128,32], index: 9, kind: input, shape index: {}]
  %s10 = inlined_call_operand.vmem [shape: bf16[32,128], index: 10, kind: input, shape index: {}]
  %s11 = inlined_call_operand.vmem [shape: f32[1,128], index: 11, kind: input, shape index: {}]
  %s12 = inlined_call_operand.hbm [shape: f32[128,128], index: 12, kind: output, shape index: {0}]
  %s13 = inlined_call_operand.hbm [shape: bf16[128,128], index: 13, kind: output, shape index: {1}]
  %14 = xla_tuple %s12, %s13
  %s15 = sld [smem:[#allocation0]]
  $region66: #{tpu_custom_call.1} parent=0
    _
  %s17 = ssub.s32 1, %s15
  %s18 = scalar_select 0, %s17, %s15
  $region1: #{tpu_custom_call.1} parent=0
    #allocation2 [shape = 'u8[65536]{0}', space=vmem, size = 0x10000, scoped, tag = 'output window, operand 0, single buffered']
    #allocation3 [shape = 's32[1]{0}', space=sflag, size = 0x4, scoped, tag = 'scoped memory for tpu_custom_call.1']
    #allocation4 [shape = 'u8[32768]{0}', space=vmem, size = 0x8000, scoped, tag = 'output window, operand 1, single buffered']
    #allocation5 [shape = 's32[1]{0}', space=sflag, size = 0x4, scoped, tag = 'scoped memory for tpu_custom_call.1']
    %19 = vsyncpa [#allocation3], 0
    %20 = vsyncpa [#allocation5], 0
    // Predicated region
    $region2: #{tpu_custom_call.1} parent=1 // pred_check
      _
    $region3: #{tpu_custom_call.1} parent=1 // pred_check_branch
      %22 = sbr.rel (0) target = $region5
    $region4: #{tpu_custom_call.1} parent=1 // pred_region
      _
    $region5: #{tpu_custom_call.1} parent=1 // pred_fallthru
      _
    // Predicated region
    $region6: #{tpu_custom_call.1} parent=1 // pred_check
      _
    $region7: #{tpu_custom_call.1} parent=1 // pred_check_branch
      %24 = sbr.rel (0) target = $region9
    $region8: #{tpu_custom_call.1} parent=1 // pred_region
      _
    $region9: #{tpu_custom_call.1} parent=1 // pred_fallthru
      _
    // Predicated region
    $region10: #{tpu_custom_call.1} parent=1 // pred_check
      _
    $region11: #{tpu_custom_call.1} parent=1 // pred_check_branch
      %26 = sbr.rel (0) target = $region13
    $region12: #{tpu_custom_call.1} parent=1 // pred_region
      _
    $region13: #{tpu_custom_call.1} parent=1 // pred_fallthru
      _
    // Predicated region
    $region14: #{tpu_custom_call.1} parent=1 // pred_check
      _
    $region15: #{tpu_custom_call.1} parent=1 // pred_check_branch
      %28 = sbr.rel (0) target = $region17
    $region16: #{tpu_custom_call.1} parent=1 // pred_region
      _
    $region17: #{tpu_custom_call.1} parent=1 // pred_fallthru
      _
    // Predicated region
    $region18: #{tpu_custom_call.1} parent=1 // pred_check
      _
    $region19: #{tpu_custom_call.1} parent=1 // pred_check_branch
      %30 = sbr.rel (0) target = $region21
    $region20: #{tpu_custom_call.1} parent=1 // pred_region
      _
    $region21: #{tpu_custom_call.1} parent=1 // pred_fallthru
      _
    // Predicated region
    $region22: #{tpu_custom_call.1} parent=1 // pred_check
      _
    $region23: #{tpu_custom_call.1} parent=1 // pred_check_branch
      %32 = sbr.rel (0) target = $region25
    $region24: #{tpu_custom_call.1} parent=1 // pred_region
      _
    $region25: #{tpu_custom_call.1} parent=1 // pred_fallthru
      _
    // Predicated region
    $region26: #{tpu_custom_call.1} parent=1 // pred_check
      _
    $region27: #{tpu_custom_call.1} parent=1 // pred_check_branch
      %34 = sbr.rel (0) target = $region29
    $region28: #{tpu_custom_call.1} parent=1 // pred_region
      _
    $region29: #{tpu_custom_call.1} parent=1 // pred_fallthru
      _
    // Predicated region
    $region30: #{tpu_custom_call.1} parent=1 // pred_check
      _
    $region31: #{tpu_custom_call.1} parent=1 // pred_check_branch
      %36 = sbr.rel (0) target = $region33
    $region32: #{tpu_custom_call.1} parent=1 // pred_region
      _
    $region33: #{tpu_custom_call.1} parent=1 // pred_fallthru
      _
    // Predicated region
    $region34: #{tpu_custom_call.1} parent=1 // pred_check
      _
    $region35: #{tpu_custom_call.1} parent=1 // pred_check_branch
      %38 = sbr.rel (0) target = $region37
    $region36: #{tpu_custom_call.1} parent=1 // pred_region
      _
    $region37: #{tpu_custom_call.1} parent=1 // pred_fallthru
      _
    // Predicated region
    $region38: #{tpu_custom_call.1} parent=1 // pred_check
      _
    $region39: #{tpu_custom_call.1} parent=1 // pred_check_branch
      %40 = sbr.rel (0) target = $region41
    $region40: #{tpu_custom_call.1} parent=1 // pred_region
      _
    $region41: #{tpu_custom_call.1} parent=1 // pred_fallthru
      _
    // Predicated region
    $region42: #{tpu_custom_call.1} parent=1 // pred_check
      _
    $region43: #{tpu_custom_call.1} parent=1 // pred_check_branch
      %42 = sbr.rel (0) target = $region45
    $region44: #{tpu_custom_call.1} parent=1 // pred_region
      _
    $region45: #{tpu_custom_call.1} parent=1 // pred_fallthru
      _
    // Predicated region
    $region46: #{tpu_custom_call.1} parent=1 // pred_check
      _
    $region47: #{tpu_custom_call.1} parent=1 // pred_check_branch
      %44 = sbr.rel (0) target = $region49
    $region48: #{tpu_custom_call.1} parent=1 // pred_region
      _
    $region49: #{tpu_custom_call.1} parent=1 // pred_fallthru
      _
    %v46 = vld [vmem:[%s0] sm:$0xff]
    %v47 = vld [vmem:[%s0 + $0x8] sm:$0xff]
    %v48 = vld [vmem:[%s0 + $0x10] sm:$0xff]
    %v49 = vld [vmem:[%s0 + $0x18] sm:$0xff]
    %v50 = vld [vmem:[%s0 + $0x20] sm:$0xff]
    %v51 = vld [vmem:[%s0 + $0x28] sm:$0xff]
    %v52 = vld [vmem:[%s0 + $0x30] sm:$0xff]
    %v53 = vld [vmem:[%s0 + $0x38] sm:$0xff]
    %v54 = vld [vmem:[%s0 + $0x40] sm:$0xff]
    %v55 = vld [vmem:[%s0 + $0x48] sm:$0xff]
    %v56 = vld [vmem:[%s0 + $0x50] sm:$0xff]
    %v57 = vld [vmem:[%s0 + $0x58] sm:$0xff]
    %v58 = vld [vmem:[%s0 + $0x60] sm:$0xff]
    %v59 = vld [vmem:[%s0 + $0x68] sm:$0xff]
    %v60 = vld [vmem:[%s0 + $0x70] sm:$0xff]
    %v61 = vld [vmem:[%s0 + $0x78] sm:$0xff]
    %v62 = vld [vmem:[%s1] sm:$0xf]
    %v63 = vld [vmem:[%s1 + $0x4] sm:$0xf]
    %v64 = vld [vmem:[%s1 + $0x8] sm:$0xf]
    %v65 = vld [vmem:[%s1 + $0xc] sm:$0xf]
    %v66 = vld [vmem:[%s1 + $0x10] sm:$0xf]
    %v67 = vld [vmem:[%s1 + $0x14] sm:$0xf]
    %v68 = vld [vmem:[%s1 + $0x18] sm:$0xf]
    %v69 = vld [vmem:[%s1 + $0x1c] sm:$0xf]
    %v70 = vld [vmem:[%s1 + $0x20] sm:$0xf]
    %v71 = vld [vmem:[%s1 + $0x24] sm:$0xf]
    %v72 = vld [vmem:[%s1 + $0x28] sm:$0xf]
    %v73 = vld [vmem:[%s1 + $0x2c] sm:$0xf]
    %v74 = vld [vmem:[%s1 + $0x30] sm:$0xf]
    %v75 = vld [vmem:[%s1 + $0x34] sm:$0xf]
    %v76 = vld [vmem:[%s1 + $0x38] sm:$0xf]
    %v77 = vld [vmem:[%s1 + $0x3c] sm:$0xf]
    %v78 = vld [vmem:[%s3] sm:$0xf]
    %v79 = vld [vmem:[%s3 + $0x4] sm:$0xf]
    %v80 = vld [vmem:[%s3 + $0x8] sm:$0xf]
    %v81 = vld [vmem:[%s3 + $0xc] sm:$0xf]
    %v82 = vld [vmem:[%s4] sm:$0x1]
    %v83 = vpack.c.bf16 %v47, %v46
    %v84 = vpack.c.bf16 %v49, %v48
    %v85 = vpack.c.bf16 %v51, %v50
    %v86 = vpack.c.bf16 %v53, %v52
    %v87 = vpack.c.bf16 %v55, %v54
    %v88 = vpack.c.bf16 %v57, %v56
    %v89 = vpack.c.bf16 %v59, %v58
    %v90 = vpack.c.bf16 %v61, %v60
    %v91 = vld [vmem:[%s2] sm:$0xf]
    %v92 = vld [vmem:[%s2 + $0x4] sm:$0xf]
    %v93 = vld [vmem:[%s2 + $0x8] sm:$0xf]
    %v94 = vld [vmem:[%s2 + $0xc] sm:$0xf]
    %v99 = vunpack.c.l.b16 %v91
    %v100 = vunpack.c.l.b16 %v92
    %v101 = vunpack.c.l.b16 %v93
    %v102 = vunpack.c.l.b16 %v94
    %v103 = vpack.c.b16 %v100, %v99
    %v104 = vpack.c.b16 %v102, %v101
    %vm107 = vcmask 261120
    %v109 = vsel %vm107, %v83, 0
    %v112 = vsel %vm107, %v84, 0
    %v115 = vsel %vm107, %v85, 0
    %v118 = vsel %vm107, %v86, 0
    %v121 = vsel %vm107, %v87, 0
    %v124 = vsel %vm107, %v88, 0
    %v127 = vsel %vm107, %v89, 0
    %v130 = vsel %vm107, %v90, 0
    %132 = vmatprep.subr.bf16.mxu0 0
    %133 = vmatpush1.bf16.msra.mxu0 %v103
    %134 = vmatprep.subr.bf16.mxu0 0
    %135 = vmatpush1.bf16.msra.mxu0 %v104
    %136 = vmatprep.subr.bf16.mxu0 0
    %137 = vmatpush1.bf16.msra.mxu0 0
    %138 = vmatprep.subr.bf16.mxu0 0
    %139 = vmatpush1.bf16.msra.mxu0 0
    %140 = vmatprep.subr.bf16.mxu0 0
    %141 = vmatpush1.bf16.msra.mxu0 0
    %142 = vmatprep.subr.bf16.mxu0 0
    %143 = vmatpush1.bf16.msra.mxu0 0
    %144 = vmatprep.subr.bf16.mxu0 0
    %145 = vmatpush1.bf16.msra.mxu0 0
    %146 = vmatprep.subr.bf16.mxu0 0
    %147 = vmatpush1.bf16.msra.mxu0 0
    %148 = vmatprep.subr.bf16.mxu0 0
    %149 = vmatpush1.bf16.msra.mxu0 0
    %150 = vmatprep.subr.bf16.mxu0 0
    %151 = vmatpush1.bf16.msra.mxu0 0
    %152 = vmatprep.subr.bf16.mxu0 0
    %153 = vmatpush1.bf16.msra.mxu0 0
    %154 = vmatprep.subr.bf16.mxu0 0
    %155 = vmatpush1.bf16.msra.mxu0 0
    %156 = vmatprep.subr.bf16.mxu0 0
    %157 = vmatpush1.bf16.msra.mxu0 0
    %158 = vmatprep.subr.bf16.mxu0 0
    %159 = vmatpush1.bf16.msra.mxu0 0
    %160 = vmatprep.subr.bf16.mxu0 0
    %161 = vmatpush1.bf16.msra.mxu0 0
    %162 = vmatprep.subr.bf16.mxu0 0
    %163 = vmatpush1.bf16.msra.mxu0 0
    %164 = vmatprep.mubr.bf16.mxu0 0
    %165 = vmatmul.mubr.bf16.gmra.mrb[0].mxu0 %v109
    %v166 = vpop.f32.mrb[0].mxu0
    %v167 = vadd.f32 0.0, %v166
    %v168 = vpop.f32.mrb[0].mxu0
    %v169 = vpop.f32.mrb[0].mxu0
    %v170 = vadd.f32 0.0, %v169
    %v171 = vpop.f32.mrb[0].mxu0
    %172 = vmatprep.mubr.bf16.mxu0 0
    %173 = vmatmul.mubr.bf16.gmra.mrb[0].mxu0 %v112
    %v174 = vpop.f32.mrb[0].mxu0
    %v175 = vadd.f32 0.0, %v174
    %v176 = vpop.f32.mrb[0].mxu0
    %v177 = vpop.f32.mrb[0].mxu0
    %v178 = vadd.f32 0.0, %v177
    %v179 = vpop.f32.mrb[0].mxu0
    %180 = vmatprep.mubr.bf16.mxu0 0
    %181 = vmatmul.mubr.bf16.gmra.mrb[0].mxu0 %v115
    %v182 = vpop.f32.mrb[0].mxu0
    %v183 = vadd.f32 0.0, %v182
    %v184 = vpop.f32.mrb[0].mxu0
    %v185 = vpop.f32.mrb[0].mxu0
    %v186 = vadd.f32 0.0, %v185
    %v187 = vpop.f32.mrb[0].mxu0
    %188 = vmatprep.mubr.bf16.mxu0 0
    %189 = vmatmul.mubr.bf16.gmra.mrb[0].mxu0 %v118
    %v190 = vpop.f32.mrb[0].mxu0
    %v191 = vadd.f32 0.0, %v190
    %v192 = vpop.f32.mrb[0].mxu0
    %v193 = vpop.f32.mrb[0].mxu0
    %v194 = vadd.f32 0.0, %v193
    %v195 = vpop.f32.mrb[0].mxu0
    %196 = vmatprep.mubr.bf16.mxu0 0
    %197 = vmatmul.mubr.bf16.gmra.mrb[0].mxu0 %v121
    %v198 = vpop.f32.mrb[0].mxu0
    %v199 = vadd.f32 0.0, %v198
    %v200 = vpop.f32.mrb[0].mxu0
    %v201 = vpop.f32.mrb[0].mxu0
    %v202 = vadd.f32 0.0, %v201
    %v203 = vpop.f32.mrb[0].mxu0
    %204 = vmatprep.mubr.bf16.mxu0 0
    %205 = vmatmul.mubr.bf16.gmra.mrb[0].mxu0 %v124
    %v206 = vpop.f32.mrb[0].mxu0
    %v207 = vadd.f32 0.0, %v206
    %v208 = vpop.f32.mrb[0].mxu0
    %v209 = vpop.f32.mrb[0].mxu0
    %v210 = vadd.f32 0.0, %v209
    %v211 = vpop.f32.mrb[0].mxu0
    %212 = vmatprep.mubr.bf16.mxu0 0
    %213 = vmatmul.mubr.bf16.gmra.mrb[0].mxu0 %v127
    %v214 = vpop.f32.mrb[0].mxu0
    %v215 = vadd.f32 0.0, %v214
    %v216 = vpop.f32.mrb[0].mxu0
    %v217 = vpop.f32.mrb[0].mxu0
    %v218 = vadd.f32 0.0, %v217
    %v219 = vpop.f32.mrb[0].mxu0
    %220 = vmatprep.mubr.bf16.mxu0 0
    %221 = vmatmul.mubr.bf16.gmra.mrb[0].mxu0 %v130
    %v222 = vpop.f32.mrb[0].mxu0
    %v223 = vadd.f32 0.0, %v222
    %v224 = vpop.f32.mrb[0].mxu0
    %v225 = vpop.f32.mrb[0].mxu0
    %v226 = vadd.f32 0.0, %v225
    %v227 = vpop.f32.mrb[0].mxu0
    %228 = vdwg.mxu0
    %v229 = vpack.c.bf16 %v170, %v167
    %v230 = vpack.c.bf16 %v178, %v175
    %v231 = vpack.c.bf16 %v186, %v183
    %v232 = vpack.c.bf16 %v194, %v191
    %v233 = vpack.c.bf16 %v202, %v199
    %v234 = vpack.c.bf16 %v210, %v207
    %v235 = vpack.c.bf16 %v218, %v215
    %v236 = vpack.c.bf16 %v226, %v223
    %v241 = vunpack.c.l.b16 %v78
    %v242 = vunpack.c.l.b16 %v79
    %v243 = vunpack.c.l.b16 %v80
    %v244 = vunpack.c.l.b16 %v81
    %v245 = vpack.c.b16 %v242, %v241
    %v246 = vpack.c.b16 %v244, %v243
    %249 = vmatprep.subr.bf16.mxu0 0
    %250 = vmatpush1.bf16.msra.mxu0 %v245
    %251 = vmatprep.subr.bf16.mxu0 0
    %252 = vmatpush1.bf16.msra.mxu0 %v246
    %253 = vmatprep.subr.bf16.mxu0 0
    %254 = vmatpush1.bf16.msra.mxu0 0
    %255 = vmatprep.subr.bf16.mxu0 0
    %256 = vmatpush1.bf16.msra.mxu0 0
    %257 = vmatprep.subr.bf16.mxu0 0
    %258 = vmatpush1.bf16.msra.mxu0 0
    %259 = vmatprep.subr.bf16.mxu0 0
    %260 = vmatpush1.bf16.msra.mxu0 0
    %261 = vmatprep.subr.bf16.mxu0 0
    %262 = vmatpush1.bf16.msra.mxu0 0
    %263 = vmatprep.subr.bf16.mxu0 0
    %264 = vmatpush1.bf16.msra.mxu0 0
    %265 = vmatprep.subr.bf16.mxu0 0
    %266 = vmatpush1.bf16.msra.mxu0 0
    %267 = vmatprep.subr.bf16.mxu0 0
    %268 = vmatpush1.bf16.msra.mxu0 0
    %269 = vmatprep.subr.bf16.mxu0 0
    %270 = vmatpush1.bf16.msra.mxu0 0
    %271 = vmatprep.subr.bf16.mxu0 0
    %272 = vmatpush1.bf16.msra.mxu0 0
    %273 = vmatprep.subr.bf16.mxu0 0
    %274 = vmatpush1.bf16.msra.mxu0 0
    %275 = vmatprep.subr.bf16.mxu0 0
    %276 = vmatpush1.bf16.msra.mxu0 0
    %277 = vmatprep.subr.bf16.mxu0 0
    %278 = vmatpush1.bf16.msra.mxu0 0
    %279 = vmatprep.subr.bf16.mxu0 0
    %280 = vmatpush1.bf16.msra.mxu0 0
    %281 = vmatprep.mubr.bf16.mxu0 0
    %282 = vmatmul.mubr.bf16.gmra.mrb[0].mxu0 %v109
    %v283 = vpop.f32.mrb[0].mxu0
    %v284 = vadd.f32 0.0, %v283
    %v285 = vpop.f32.mrb[0].mxu0
    %v286 = vpop.f32.mrb[0].mxu0
    %v287 = vadd.f32 0.0, %v286
    %v288 = vpop.f32.mrb[0].mxu0
    %289 = vmatprep.mubr.bf16.mxu0 0
    %290 = vmatmul.mubr.bf16.gmra.mrb[0].mxu0 %v112
    %v291 = vpop.f32.mrb[0].mxu0
    %v292 = vadd.f32 0.0, %v291
    %v293 = vpop.f32.mrb[0].mxu0
    %v294 = vpop.f32.mrb[0].mxu0
    %v295 = vadd.f32 0.0, %v294
    %v296 = vpop.f32.mrb[0].mxu0
    %297 = vmatprep.mubr.bf16.mxu0 0
    %298 = vmatmul.mubr.bf16.gmra.mrb[0].mxu0 %v115
    %v299 = vpop.f32.mrb[0].mxu0
    %v300 = vadd.f32 0.0, %v299
    %v301 = vpop.f32.mrb[0].mxu0
    %v302 = vpop.f32.mrb[0].mxu0
    %v303 = vadd.f32 0.0, %v302
    %v304 = vpop.f32.mrb[0].mxu0
    %305 = vmatprep.mubr.bf16.mxu0 0
    %306 = vmatmul.mubr.bf16.gmra.mrb[0].mxu0 %v118
    %v307 = vpop.f32.mrb[0].mxu0
    %v308 = vadd.f32 0.0, %v307
    %v309 = vpop.f32.mrb[0].mxu0
    %v310 = vpop.f32.mrb[0].mxu0
    %v311 = vadd.f32 0.0, %v310
    %v312 = vpop.f32.mrb[0].mxu0
    %313 = vmatprep.mubr.bf16.mxu0 0
    %314 = vmatmul.mubr.bf16.gmra.mrb[0].mxu0 %v121
    %v315 = vpop.f32.mrb[0].mxu0
    %v316 = vadd.f32 0.0, %v315
    %v317 = vpop.f32.mrb[0].mxu0
    %v318 = vpop.f32.mrb[0].mxu0
    %v319 = vadd.f32 0.0, %v318
    %v320 = vpop.f32.mrb[0].mxu0
    %321 = vmatprep.mubr.bf16.mxu0 0
    %322 = vmatmul.mubr.bf16.gmra.mrb[0].mxu0 %v124
    %v323 = vpop.f32.mrb[0].mxu0
    %v324 = vadd.f32 0.0, %v323
    %v325 = vpop.f32.mrb[0].mxu0
    %v326 = vpop.f32.mrb[0].mxu0
    %v327 = vadd.f32 0.0, %v326
    %v328 = vpop.f32.mrb[0].mxu0
    %329 = vmatprep.mubr.bf16.mxu0 0
    %330 = vmatmul.mubr.bf16.gmra.mrb[0].mxu0 %v127
    %v331 = vpop.f32.mrb[0].mxu0
    %v332 = vadd.f32 0.0, %v331
    %v333 = vpop.f32.mrb[0].mxu0
    %v334 = vpop.f32.mrb[0].mxu0
    %v335 = vadd.f32 0.0, %v334
    %v336 = vpop.f32.mrb[0].mxu0
    %337 = vmatprep.mubr.bf16.mxu0 0
    %338 = vmatmul.mubr.bf16.gmra.mrb[0].mxu0 %v130
    %v339 = vpop.f32.mrb[0].mxu0
    %v340 = vadd.f32 0.0, %v339
    %v341 = vpop.f32.mrb[0].mxu0
    %v342 = vpop.f32.mrb[0].mxu0
    %v343 = vadd.f32 0.0, %v342
    %v344 = vpop.f32.mrb[0].mxu0
    %345 = vdwg.mxu0
    %v362 = vunpack.c.l.b16 %v62
    %v363 = vunpack.c.l.b16 %v63
    %v364 = vunpack.c.l.b16 %v64
    %v365 = vunpack.c.l.b16 %v65
    %v366 = vunpack.c.l.b16 %v66
    %v367 = vunpack.c.l.b16 %v67
    %v368 = vunpack.c.l.b16 %v68
    %v369 = vunpack.c.l.b16 %v69
    %v370 = vunpack.c.l.b16 %v70
    %v371 = vunpack.c.l.b16 %v71
    %v372 = vunpack.c.l.b16 %v72
    %v373 = vunpack.c.l.b16 %v73
    %v374 = vunpack.c.l.b16 %v74
    %v375 = vunpack.c.l.b16 %v75
    %v376 = vunpack.c.l.b16 %v76
    %v377 = vunpack.c.l.b16 %v77
    %v378 = vpack.c.b16 %v363, %v362
    %v379 = vpack.c.b16 %v365, %v364
    %v380 = vpack.c.b16 %v367, %v366
    %v381 = vpack.c.b16 %v369, %v368
    %v382 = vpack.c.b16 %v371, %v370
    %v383 = vpack.c.b16 %v373, %v372
    %v384 = vpack.c.b16 %v375, %v374
    %v385 = vpack.c.b16 %v377, %v376
    %394 = vmatprep.subr.bf16.mxu0 0
    %395 = vmatpush1.bf16.msra.mxu0 %v229
    %396 = vmatprep.subr.bf16.mxu0 0
    %397 = vmatpush1.bf16.msra.mxu0 %v230
    %398 = vmatprep.subr.bf16.mxu0 0
    %399 = vmatpush1.bf16.msra.mxu0 %v231
    %400 = vmatprep.subr.bf16.mxu0 0
    %401 = vmatpush1.bf16.msra.mxu0 %v232
    %402 = vmatprep.subr.bf16.mxu0 0
    %403 = vmatpush1.bf16.msra.mxu0 %v233
    %404 = vmatprep.subr.bf16.mxu0 0
    %405 = vmatpush1.bf16.msra.mxu0 %v234
    %406 = vmatprep.subr.bf16.mxu0 0
    %407 = vmatpush1.bf16.msra.mxu0 %v235
    %408 = vmatprep.subr.bf16.mxu0 0
    %409 = vmatpush1.bf16.msra.mxu0 %v236
    %410 = vmatprep.subr.bf16.mxu0 0
    %411 = vmatpush1.bf16.msra.mxu0 0
    %412 = vmatprep.subr.bf16.mxu0 0
    %413 = vmatpush1.bf16.msra.mxu0 0
    %414 = vmatprep.subr.bf16.mxu0 0
    %415 = vmatpush1.bf16.msra.mxu0 0
    %416 = vmatprep.subr.bf16.mxu0 0
    %417 = vmatpush1.bf16.msra.mxu0 0
    %418 = vmatprep.subr.bf16.mxu0 0
    %419 = vmatpush1.bf16.msra.mxu0 0
    %420 = vmatprep.subr.bf16.mxu0 0
    %421 = vmatpush1.bf16.msra.mxu0 0
    %422 = vmatprep.subr.bf16.mxu0 0
    %423 = vmatpush1.bf16.msra.mxu0 0
    %424 = vmatprep.subr.bf16.mxu0 0
    %425 = vmatpush1.bf16.msra.mxu0 0
    %426 = vmatprep.mubr.bf16.mxu0 0
    %427 = vmatmul.mubr.bf16.gmra.mrb[0].mxu0 %v378
    %v428 = vpop.f32.mrb[0].mxu0
    %v429 = vadd.f32 %v284, %v428
    %v430 = vpop.f32.mrb[0].mxu0
    %v431 = vpop.f32.mrb[0].mxu0
    %v432 = vadd.f32 %v287, %v431
    %v433 = vpop.f32.mrb[0].mxu0
    %434 = vmatprep.mubr.bf16.mxu0 0
    %435 = vmatmul.mubr.bf16.gmra.mrb[0].mxu0 %v379
    %v436 = vpop.f32.mrb[0].mxu0
    %v437 = vadd.f32 %v292, %v436
    %v438 = vpop.f32.mrb[0].mxu0
    %v439 = vpop.f32.mrb[0].mxu0
    %v440 = vadd.f32 %v295, %v439
    %v441 = vpop.f32.mrb[0].mxu0
    %442 = vmatprep.mubr.bf16.mxu0 0
    %443 = vmatmul.mubr.bf16.gmra.mrb[0].mxu0 %v380
    %v444 = vpop.f32.mrb[0].mxu0
    %v445 = vadd.f32 %v300, %v444
    %v446 = vpop.f32.mrb[0].mxu0
    %v447 = vpop.f32.mrb[0].mxu0
    %v448 = vadd.f32 %v303, %v447
    %v449 = vpop.f32.mrb[0].mxu0
    %450 = vmatprep.mubr.bf16.mxu0 0
    %451 = vmatmul.mubr.bf16.gmra.mrb[0].mxu0 %v381
    %v452 = vpop.f32.mrb[0].mxu0
    %v453 = vadd.f32 %v308, %v452
    %v454 = vpop.f32.mrb[0].mxu0
    %v455 = vpop.f32.mrb[0].mxu0
    %v456 = vadd.f32 %v311, %v455
    %v457 = vpop.f32.mrb[0].mxu0
    %458 = vmatprep.mubr.bf16.mxu0 0
    %459 = vmatmul.mubr.bf16.gmra.mrb[0].mxu0 %v382
    %v460 = vpop.f32.mrb[0].mxu0
    %v461 = vadd.f32 %v316, %v460
    %v462 = vpop.f32.mrb[0].mxu0
    %v463 = vpop.f32.mrb[0].mxu0
    %v464 = vadd.f32 %v319, %v463
    %v465 = vpop.f32.mrb[0].mxu0
    %466 = vmatprep.mubr.bf16.mxu0 0
    %467 = vmatmul.mubr.bf16.gmra.mrb[0].mxu0 %v383
    %v468 = vpop.f32.mrb[0].mxu0
    %v469 = vadd.f32 %v324, %v468
    %v470 = vpop.f32.mrb[0].mxu0
    %v471 = vpop.f32.mrb[0].mxu0
    %v472 = vadd.f32 %v327, %v471
    %v473 = vpop.f32.mrb[0].mxu0
    %474 = vmatprep.mubr.bf16.mxu0 0
    %475 = vmatmul.mubr.bf16.gmra.mrb[0].mxu0 %v384
    %v476 = vpop.f32.mrb[0].mxu0
    %v477 = vadd.f32 %v332, %v476
    %v478 = vpop.f32.mrb[0].mxu0
    %v479 = vpop.f32.mrb[0].mxu0
    %v480 = vadd.f32 %v335, %v479
    %v481 = vpop.f32.mrb[0].mxu0
    %482 = vmatprep.mubr.bf16.mxu0 0
    %483 = vmatmul.mubr.bf16.gmra.mrb[0].mxu0 %v385
    %v484 = vpop.f32.mrb[0].mxu0
    %v485 = vadd.f32 %v340, %v484
    %v486 = vpop.f32.mrb[0].mxu0
    %v487 = vpop.f32.mrb[0].mxu0
    %v488 = vadd.f32 %v343, %v487
    %v489 = vpop.f32.mrb[0].mxu0
    %490 = vdwg.mxu0
    %v492 = vlaneseq
    %v493 = vshrl.u32 %v492, 7
    %v494 = vsub.s32 0, %v493
    %v495 = vrot.slane %v82, %v494
    %v497 = vadd.f32 %v429, %v495
    %v498 = vadd.f32 %v432, %v495
    %v499 = vadd.f32 %v437, %v495
    %v500 = vadd.f32 %v440, %v495
    %v501 = vadd.f32 %v445, %v495
    %v502 = vadd.f32 %v448, %v495
    %v503 = vadd.f32 %v453, %v495
    %v504 = vadd.f32 %v456, %v495
    %v505 = vadd.f32 %v461, %v495
    %v506 = vadd.f32 %v464, %v495
    %v507 = vadd.f32 %v469, %v495
    %v508 = vadd.f32 %v472, %v495
    %v509 = vadd.f32 %v477, %v495
    %v510 = vadd.f32 %v480, %v495
    %v511 = vadd.f32 %v485, %v495
    %v512 = vadd.f32 %v488, %v495
    %v513 = vxor.u32 %v497, 2147483648
    %v514 = vxor.u32 %v498, 2147483648
    %v515 = vxor.u32 %v499, 2147483648
    %v516 = vxor.u32 %v500, 2147483648
    %v517 = vxor.u32 %v501, 2147483648
    %v518 = vxor.u32 %v502, 2147483648
    %v519 = vxor.u32 %v503, 2147483648
    %v520 = vxor.u32 %v504, 2147483648
    %v521 = vxor.u32 %v505, 2147483648
    %v522 = vxor.u32 %v506, 2147483648
    %v523 = vxor.u32 %v507, 2147483648
    %v524 = vxor.u32 %v508, 2147483648
    %v525 = vxor.u32 %v509, 2147483648
    %v526 = vxor.u32 %v510, 2147483648
    %v527 = vxor.u32 %v511, 2147483648
    %v528 = vxor.u32 %v512, 2147483648
    %v529 = vmul.f32 %v513, 1.442695
    %v530 = vpow.pop %v529
    %v531 = vmul.f32 %v514, 1.442695
    %v532 = vpow.pop %v531
    %v533 = vmul.f32 %v515, 1.442695
    %v534 = vpow.pop %v533
    %v535 = vmul.f32 %v516, 1.442695
    %v536 = vpow.pop %v535
    %v537 = vmul.f32 %v517, 1.442695
    %v538 = vpow.pop %v537
    %v539 = vmul.f32 %v518, 1.442695
    %v540 = vpow.pop %v539
    %v541 = vmul.f32 %v519, 1.442695
    %v542 = vpow.pop %v541
    %v543 = vmul.f32 %v520, 1.442695
    %v544 = vpow.pop %v543
    %v545 = vmul.f32 %v521, 1.442695
    %v546 = vpow.pop %v545
    %v547 = vmul.f32 %v522, 1.442695
    %v548 = vpow.pop %v547
    %v549 = vmul.f32 %v523, 1.442695
    %v550 = vpow.pop %v549
    %v551 = vmul.f32 %v524, 1.442695
    %v552 = vpow.pop %v551
    %v553 = vmul.f32 %v525, 1.442695
    %v554 = vpow.pop %v553
    %v555 = vmul.f32 %v526, 1.442695
    %v556 = vpow.pop %v555
    %v557 = vmul.f32 %v527, 1.442695
    %v558 = vpow.pop %v557
    %v559 = vmul.f32 %v528, 1.442695
    %v560 = vpow.pop %v559
    %v561 = vadd.f32 %v530, 1.0
    %v562 = vadd.f32 %v532, 1.0
    %v563 = vadd.f32 %v534, 1.0
    %v564 = vadd.f32 %v536, 1.0
    %v565 = vadd.f32 %v538, 1.0
    %v566 = vadd.f32 %v540, 1.0
    %v567 = vadd.f32 %v542, 1.0
    %v568 = vadd.f32 %v544, 1.0
    %v569 = vadd.f32 %v546, 1.0
    %v570 = vadd.f32 %v548, 1.0
    %v571 = vadd.f32 %v550, 1.0
    %v572 = vadd.f32 %v552, 1.0
    %v573 = vadd.f32 %v554, 1.0
    %v574 = vadd.f32 %v556, 1.0
    %v575 = vadd.f32 %v558, 1.0
    %v576 = vadd.f32 %v560, 1.0
    %v577 = vrcp.pop %v561
    %v578 = vmul.f32 1.0, %v577
    %v579 = vrcp.pop %v562
    %v580 = vmul.f32 1.0, %v579
    %v581 = vrcp.pop %v563
    %v582 = vmul.f32 1.0, %v581
    %v583 = vrcp.pop %v564
    %v584 = vmul.f32 1.0, %v583
    %v585 = vrcp.pop %v565
    %v586 = vmul.f32 1.0, %v585
    %v587 = vrcp.pop %v566
    %v588 = vmul.f32 1.0, %v587
    %v589 = vrcp.pop %v567
    %v590 = vmul.f32 1.0, %v589
    %v591 = vrcp.pop %v568
    %v592 = vmul.f32 1.0, %v591
    %v593 = vrcp.pop %v569
    %v594 = vmul.f32 1.0, %v593
    %v595 = vrcp.pop %v570
    %v596 = vmul.f32 1.0, %v595
    %v597 = vrcp.pop %v571
    %v598 = vmul.f32 1.0, %v597
    %v599 = vrcp.pop %v572
    %v600 = vmul.f32 1.0, %v599
    %v601 = vrcp.pop %v573
    %v602 = vmul.f32 1.0, %v601
    %v603 = vrcp.pop %v574
    %v604 = vmul.f32 1.0, %v603
    %v605 = vrcp.pop %v575
    %v606 = vmul.f32 1.0, %v605
    %v607 = vrcp.pop %v576
    %v608 = vmul.f32 1.0, %v607
    %625 = vrot.lane.b32.xlu0 %v497, 32
    %v626 = vpop.permute.xlu0 %625
    %627 = vrot.lane.b32.xlu0 %v498, 32
    %v628 = vpop.permute.xlu0 %627
    %629 = vrot.lane.b32.xlu0 %v499, 32
    %v630 = vpop.permute.xlu0 %629
    %631 = vrot.lane.b32.xlu0 %v500, 32
    %v632 = vpop.permute.xlu0 %631
    %633 = vrot.lane.b32.xlu0 %v501, 32
    %v634 = vpop.permute.xlu0 %633
    %635 = vrot.lane.b32.xlu0 %v502, 32
    %v636 = vpop.permute.xlu0 %635
    %637 = vrot.lane.b32.xlu0 %v503, 32
    %v638 = vpop.permute.xlu0 %637
    %639 = vrot.lane.b32.xlu0 %v504, 32
    %v640 = vpop.permute.xlu0 %639
    %641 = vrot.lane.b32.xlu0 %v505, 32
    %v642 = vpop.permute.xlu0 %641
    %643 = vrot.lane.b32.xlu0 %v506, 32
    %v644 = vpop.permute.xlu0 %643
    %645 = vrot.lane.b32.xlu0 %v507, 32
    %v646 = vpop.permute.xlu0 %645
    %647 = vrot.lane.b32.xlu0 %v508, 32
    %v648 = vpop.permute.xlu0 %647
    %649 = vrot.lane.b32.xlu0 %v509, 32
    %v650 = vpop.permute.xlu0 %649
    %651 = vrot.lane.b32.xlu0 %v510, 32
    %v652 = vpop.permute.xlu0 %651
    %653 = vrot.lane.b32.xlu0 %v511, 32
    %v654 = vpop.permute.xlu0 %653
    %655 = vrot.lane.b32.xlu0 %v512, 32
    %v656 = vpop.permute.xlu0 %655
    %v673 = vmul.f32 %v578, %v626
    %v674 = vmul.f32 %v580, %v628
    %v675 = vmul.f32 %v582, %v630
    %v676 = vmul.f32 %v584, %v632
    %v677 = vmul.f32 %v586, %v634
    %v678 = vmul.f32 %v588, %v636
    %v679 = vmul.f32 %v590, %v638
    %v680 = vmul.f32 %v592, %v640
    %v681 = vmul.f32 %v594, %v642
    %v682 = vmul.f32 %v596, %v644
    %v683 = vmul.f32 %v598, %v646
    %v684 = vmul.f32 %v600, %v648
    %v685 = vmul.f32 %v602, %v650
    %v686 = vmul.f32 %v604, %v652
    %v687 = vmul.f32 %v606, %v654
    %v688 = vmul.f32 %v608, %v656
    %705 = vrot.lane.b32.xlu0 %v673, 64
    %v706 = vpop.permute.xlu0 %705
    %707 = vrot.lane.b32.xlu0 %v674, 64
    %v708 = vpop.permute.xlu0 %707
    %709 = vrot.lane.b32.xlu0 %v675, 64
    %v710 = vpop.permute.xlu0 %709
    %711 = vrot.lane.b32.xlu0 %v676, 64
    %v712 = vpop.permute.xlu0 %711
    %713 = vrot.lane.b32.xlu0 %v677, 64
    %v714 = vpop.permute.xlu0 %713
    %715 = vrot.lane.b32.xlu0 %v678, 64
    %v716 = vpop.permute.xlu0 %715
    %717 = vrot.lane.b32.xlu0 %v679, 64
    %v718 = vpop.permute.xlu0 %717
    %719 = vrot.lane.b32.xlu0 %v680, 64
    %v720 = vpop.permute.xlu0 %719
    %721 = vrot.lane.b32.xlu0 %v681, 64
    %v722 = vpop.permute.xlu0 %721
    %723 = vrot.lane.b32.xlu0 %v682, 64
    %v724 = vpop.permute.xlu0 %723
    %725 = vrot.lane.b32.xlu0 %v683, 64
    %v726 = vpop.permute.xlu0 %725
    %727 = vrot.lane.b32.xlu0 %v684, 64
    %v728 = vpop.permute.xlu0 %727
    %729 = vrot.lane.b32.xlu0 %v685, 64
    %v730 = vpop.permute.xlu0 %729
    %731 = vrot.lane.b32.xlu0 %v686, 64
    %v732 = vpop.permute.xlu0 %731
    %733 = vrot.lane.b32.xlu0 %v687, 64
    %v734 = vpop.permute.xlu0 %733
    %735 = vrot.lane.b32.xlu0 %v688, 64
    %v736 = vpop.permute.xlu0 %735
    %v753 = vadd.f32 %v497, %v706
    %v754 = vadd.f32 %v498, %v708
    %v755 = vadd.f32 %v499, %v710
    %v756 = vadd.f32 %v500, %v712
    %v757 = vadd.f32 %v501, %v714
    %v758 = vadd.f32 %v502, %v716
    %v759 = vadd.f32 %v503, %v718
    %v760 = vadd.f32 %v504, %v720
    %v761 = vadd.f32 %v505, %v722
    %v762 = vadd.f32 %v506, %v724
    %v763 = vadd.f32 %v507, %v726
    %v764 = vadd.f32 %v508, %v728
    %v765 = vadd.f32 %v509, %v730
    %v766 = vadd.f32 %v510, %v732
    %v767 = vadd.f32 %v511, %v734
    %v768 = vadd.f32 %v512, %v736
    %v769 = vtanh.pop %v753
    %v770 = vtanh.pop %v754
    %v771 = vtanh.pop %v755
    %v772 = vtanh.pop %v756
    %v773 = vtanh.pop %v757
    %v774 = vtanh.pop %v758
    %v775 = vtanh.pop %v759
    %v776 = vtanh.pop %v760
    %v777 = vtanh.pop %v761
    %v778 = vtanh.pop %v762
    %v779 = vtanh.pop %v763
    %v780 = vtanh.pop %v764
    %v781 = vtanh.pop %v765
    %v782 = vtanh.pop %v766
    %v783 = vtanh.pop %v767
    %v784 = vtanh.pop %v768
    %v785 = vsub.f32 1.0, %v578
    %v786 = vsub.f32 1.0, %v580
    %v787 = vsub.f32 1.0, %v582
    %v788 = vsub.f32 1.0, %v584
    %v789 = vsub.f32 1.0, %v586
    %v790 = vsub.f32 1.0, %v588
    %v791 = vsub.f32 1.0, %v590
    %v792 = vsub.f32 1.0, %v592
    %v793 = vsub.f32 1.0, %v594
    %v794 = vsub.f32 1.0, %v596
    %v795 = vsub.f32 1.0, %v598
    %v796 = vsub.f32 1.0, %v600
    %v797 = vsub.f32 1.0, %v602
    %v798 = vsub.f32 1.0, %v604
    %v799 = vsub.f32 1.0, %v606
    %v800 = vsub.f32 1.0, %v608
    %817 = vrot.lane.b32.xlu0 %v769, 96
    %v818 = vpop.permute.xlu0 %817
    %819 = vrot.lane.b32.xlu0 %v770, 96
    %v820 = vpop.permute.xlu0 %819
    %821 = vrot.lane.b32.xlu0 %v771, 96
    %v822 = vpop.permute.xlu0 %821
    %823 = vrot.lane.b32.xlu0 %v772, 96
    %v824 = vpop.permute.xlu0 %823
    %825 = vrot.lane.b32.xlu0 %v773, 96
    %v826 = vpop.permute.xlu0 %825
    %827 = vrot.lane.b32.xlu0 %v774, 96
    %v828 = vpop.permute.xlu0 %827
    %829 = vrot.lane.b32.xlu0 %v775, 96
    %v830 = vpop.permute.xlu0 %829
    %831 = vrot.lane.b32.xlu0 %v776, 96
    %v832 = vpop.permute.xlu0 %831
    %833 = vrot.lane.b32.xlu0 %v777, 96
    %v834 = vpop.permute.xlu0 %833
    %835 = vrot.lane.b32.xlu0 %v778, 96
    %v836 = vpop.permute.xlu0 %835
    %837 = vrot.lane.b32.xlu0 %v779, 96
    %v838 = vpop.permute.xlu0 %837
    %839 = vrot.lane.b32.xlu0 %v780, 96
    %v840 = vpop.permute.xlu0 %839
    %841 = vrot.lane.b32.xlu0 %v781, 96
    %v842 = vpop.permute.xlu0 %841
    %843 = vrot.lane.b32.xlu0 %v782, 96
    %v844 = vpop.permute.xlu0 %843
    %845 = vrot.lane.b32.xlu0 %v783, 96
    %v846 = vpop.permute.xlu0 %845
    %847 = vrot.lane.b32.xlu0 %v784, 96
    %v848 = vpop.permute.xlu0 %847
    %v865 = vmul.f32 %v785, %v818
    %v866 = vmul.f32 %v786, %v820
    %v867 = vmul.f32 %v787, %v822
    %v868 = vmul.f32 %v788, %v824
    %v869 = vmul.f32 %v789, %v826
    %v870 = vmul.f32 %v790, %v828
    %v871 = vmul.f32 %v791, %v830
    %v872 = vmul.f32 %v792, %v832
    %v873 = vmul.f32 %v793, %v834
    %v874 = vmul.f32 %v794, %v836
    %v875 = vmul.f32 %v795, %v838
    %v876 = vmul.f32 %v796, %v840
    %v877 = vmul.f32 %v797, %v842
    %v878 = vmul.f32 %v798, %v844
    %v879 = vmul.f32 %v799, %v846
    %v880 = vmul.f32 %v800, %v848
    %897 = vrot.lane.b32.xlu0 %v46, 32
    %v898 = vpop.permute.xlu0 %897
    %899 = vrot.lane.b32.xlu0 %v47, 32
    %v900 = vpop.permute.xlu0 %899
    %901 = vrot.lane.b32.xlu0 %v48, 32
    %v902 = vpop.permute.xlu0 %901
    %903 = vrot.lane.b32.xlu0 %v49, 32
    %v904 = vpop.permute.xlu0 %903
    %905 = vrot.lane.b32.xlu0 %v50, 32
    %v906 = vpop.permute.xlu0 %905
    %907 = vrot.lane.b32.xlu0 %v51, 32
    %v908 = vpop.permute.xlu0 %907
    %909 = vrot.lane.b32.xlu0 %v52, 32
    %v910 = vpop.permute.xlu0 %909
    %911 = vrot.lane.b32.xlu0 %v53, 32
    %v912 = vpop.permute.xlu0 %911
    %913 = vrot.lane.b32.xlu0 %v54, 32
    %v914 = vpop.permute.xlu0 %913
    %915 = vrot.lane.b32.xlu0 %v55, 32
    %v916 = vpop.permute.xlu0 %915
    %917 = vrot.lane.b32.xlu0 %v56, 32
    %v918 = vpop.permute.xlu0 %917
    %919 = vrot.lane.b32.xlu0 %v57, 32
    %v920 = vpop.permute.xlu0 %919
    %921 = vrot.lane.b32.xlu0 %v58, 32
    %v922 = vpop.permute.xlu0 %921
    %923 = vrot.lane.b32.xlu0 %v59, 32
    %v924 = vpop.permute.xlu0 %923
    %925 = vrot.lane.b32.xlu0 %v60, 32
    %v926 = vpop.permute.xlu0 %925
    %927 = vrot.lane.b32.xlu0 %v61, 32
    %v928 = vpop.permute.xlu0 %927
    %v945 = vmul.f32 %v578, %v898
    %v946 = vmul.f32 %v580, %v900
    %v947 = vmul.f32 %v582, %v902
    %v948 = vmul.f32 %v584, %v904
    %v949 = vmul.f32 %v586, %v906
    %v950 = vmul.f32 %v588, %v908
    %v951 = vmul.f32 %v590, %v910
    %v952 = vmul.f32 %v592, %v912
    %v953 = vmul.f32 %v594, %v914
    %v954 = vmul.f32 %v596, %v916
    %v955 = vmul.f32 %v598, %v918
    %v956 = vmul.f32 %v600, %v920
    %v957 = vmul.f32 %v602, %v922
    %v958 = vmul.f32 %v604, %v924
    %v959 = vmul.f32 %v606, %v926
    %v960 = vmul.f32 %v608, %v928
    %v961 = vadd.f32 %v865, %v945
    %v962 = vadd.f32 %v866, %v946
    %v963 = vadd.f32 %v867, %v947
    %v964 = vadd.f32 %v868, %v948
    %v965 = vadd.f32 %v869, %v949
    %v966 = vadd.f32 %v870, %v950
    %v967 = vadd.f32 %v871, %v951
    %v968 = vadd.f32 %v872, %v952
    %v969 = vadd.f32 %v873, %v953
    %v970 = vadd.f32 %v874, %v954
    %v971 = vadd.f32 %v875, %v955
    %v972 = vadd.f32 %v876, %v956
    %v973 = vadd.f32 %v877, %v957
    %v974 = vadd.f32 %v878, %v958
    %v975 = vadd.f32 %v879, %v959
    %v976 = vadd.f32 %v880, %v960
    %v977 = vpack.c.bf16 %v962, %v961
    %v978 = vpack.c.bf16 %v964, %v963
    %v979 = vpack.c.bf16 %v966, %v965
    %v980 = vpack.c.bf16 %v968, %v967
    %v981 = vpack.c.bf16 %v970, %v969
    %v982 = vpack.c.bf16 %v972, %v971
    %v983 = vpack.c.bf16 %v974, %v973
    %v984 = vpack.c.bf16 %v976, %v975
    %s985 = scalar_lea.vmem %s2, 16
    %v986 = vld [vmem:[%s985] sm:$0xf]
    %v987 = vld [vmem:[%s985 + $0x4] sm:$0xf]
    %v988 = vld [vmem:[%s985 + $0x8] sm:$0xf]
    %v989 = vld [vmem:[%s985 + $0xc] sm:$0xf]
    %998 = vrot.lane.b32.xlu0 %v977, 96
    %v999 = vpop.permute.xlu0 %998
    %1000 = vrot.lane.b32.xlu0 %v978, 96
    %v1001 = vpop.permute.xlu0 %1000
    %1002 = vrot.lane.b32.xlu0 %v979, 96
    %v1003 = vpop.permute.xlu0 %1002
    %1004 = vrot.lane.b32.xlu0 %v980, 96
    %v1005 = vpop.permute.xlu0 %1004
    %1006 = vrot.lane.b32.xlu0 %v981, 96
    %v1007 = vpop.permute.xlu0 %1006
    %1008 = vrot.lane.b32.xlu0 %v982, 96
    %v1009 = vpop.permute.xlu0 %1008
    %1010 = vrot.lane.b32.xlu0 %v983, 96
    %v1011 = vpop.permute.xlu0 %1010
    %1012 = vrot.lane.b32.xlu0 %v984, 96
    %v1013 = vpop.permute.xlu0 %1012
    %v1018 = vunpack.c.l.b16 %v986
    %v1019 = vunpack.c.l.b16 %v987
    %v1020 = vunpack.c.l.b16 %v988
    %v1021 = vunpack.c.l.b16 %v989
    %v1022 = vpack.c.b16 %v1019, %v1018
    %v1023 = vpack.c.b16 %v1021, %v1020
    %v1027 = vsel %vm107, %v999, 0
    %v1030 = vsel %vm107, %v1001, 0
    %v1033 = vsel %vm107, %v1003, 0
    %v1036 = vsel %vm107, %v1005, 0
    %v1039 = vsel %vm107, %v1007, 0
    %v1042 = vsel %vm107, %v1009, 0
    %v1045 = vsel %vm107, %v1011, 0
    %v1048 = vsel %vm107, %v1013, 0
    %1050 = vmatprep.subr.bf16.mxu0 0
    %1051 = vmatpush1.bf16.msra.mxu0 %v1022
    %1052 = vmatprep.subr.bf16.mxu0 0
    %1053 = vmatpush1.bf16.msra.mxu0 %v1023
    %1054 = vmatprep.subr.bf16.mxu0 0
    %1055 = vmatpush1.bf16.msra.mxu0 0
    %1056 = vmatprep.subr.bf16.mxu0 0
    %1057 = vmatpush1.bf16.msra.mxu0 0
    %1058 = vmatprep.subr.bf16.mxu0 0
    %1059 = vmatpush1.bf16.msra.mxu0 0
    %1060 = vmatprep.subr.bf16.mxu0 0
    %1061 = vmatpush1.bf16.msra.mxu0 0
    %1062 = vmatprep.subr.bf16.mxu0 0
    %1063 = vmatpush1.bf16.msra.mxu0 0
    %1064 = vmatprep.subr.bf16.mxu0 0
    %1065 = vmatpush1.bf16.msra.mxu0 0
    %1066 = vmatprep.subr.bf16.mxu0 0
    %1067 = vmatpush1.bf16.msra.mxu0 0
    %1068 = vmatprep.subr.bf16.mxu0 0
    %1069 = vmatpush1.bf16.msra.mxu0 0
    %1070 = vmatprep.subr.bf16.mxu0 0
    %1071 = vmatpush1.bf16.msra.mxu0 0
    %1072 = vmatprep.subr.bf16.mxu0 0
    %1073 = vmatpush1.bf16.msra.mxu0 0
    %1074 = vmatprep.subr.bf16.mxu0 0
    %1075 = vmatpush1.bf16.msra.mxu0 0
    %1076 = vmatprep.subr.bf16.mxu0 0
    %1077 = vmatpush1.bf16.msra.mxu0 0
    %1078 = vmatprep.subr.bf16.mxu0 0
    %1079 = vmatpush1.bf16.msra.mxu0 0
    %1080 = vmatprep.subr.bf16.mxu0 0
    %1081 = vmatpush1.bf16.msra.mxu0 0
    %1082 = vmatprep.mubr.bf16.mxu0 0
    %1083 = vmatmul.mubr.bf16.gmra.mrb[0].mxu0 %v1027
    %v1084 = vpop.f32.mrb[0].mxu0
    %v1085 = vadd.f32 0.0, %v1084
    %v1086 = vpop.f32.mrb[0].mxu0
    %v1087 = vpop.f32.mrb[0].mxu0
    %v1088 = vadd.f32 0.0, %v1087
    %v1089 = vpop.f32.mrb[0].mxu0
    %1090 = vmatprep.mubr.bf16.mxu0 0
    %1091 = vmatmul.mubr.bf16.gmra.mrb[0].mxu0 %v1030
    %v1092 = vpop.f32.mrb[0].mxu0
    %v1093 = vadd.f32 0.0, %v1092
    %v1094 = vpop.f32.mrb[0].mxu0
    %v1095 = vpop.f32.mrb[0].mxu0
    %v1096 = vadd.f32 0.0, %v1095
    %v1097 = vpop.f32.mrb[0].mxu0
    %1098 = vmatprep.mubr.bf16.mxu0 0
    %1099 = vmatmul.mubr.bf16.gmra.mrb[0].mxu0 %v1033
    %v1100 = vpop.f32.mrb[0].mxu0
    %v1101 = vadd.f32 0.0, %v1100
    %v1102 = vpop.f32.mrb[0].mxu0
    %v1103 = vpop.f32.mrb[0].mxu0
    %v1104 = vadd.f32 0.0, %v1103
    %v1105 = vpop.f32.mrb[0].mxu0
    %1106 = vmatprep.mubr.bf16.mxu0 0
    %1107 = vmatmul.mubr.bf16.gmra.mrb[0].mxu0 %v1036
    %v1108 = vpop.f32.mrb[0].mxu0
    %v1109 = vadd.f32 0.0, %v1108
    %v1110 = vpop.f32.mrb[0].mxu0
    %v1111 = vpop.f32.mrb[0].mxu0
    %v1112 = vadd.f32 0.0, %v1111
    %v1113 = vpop.f32.mrb[0].mxu0
    %1114 = vmatprep.mubr.bf16.mxu0 0
    %1115 = vmatmul.mubr.bf16.gmra.mrb[0].mxu0 %v1039
    %v1116 = vpop.f32.mrb[0].mxu0
    %v1117 = vadd.f32 0.0, %v1116
    %v1118 = vpop.f32.mrb[0].mxu0
    %v1119 = vpop.f32.mrb[0].mxu0
    %v1120 = vadd.f32 0.0, %v1119
    %v1121 = vpop.f32.mrb[0].mxu0
    %1122 = vmatprep.mubr.bf16.mxu0 0
    %1123 = vmatmul.mubr.bf16.gmra.mrb[0].mxu0 %v1042
    %v1124 = vpop.f32.mrb[0].mxu0
    %v1125 = vadd.f32 0.0, %v1124
    %v1126 = vpop.f32.mrb[0].mxu0
    %v1127 = vpop.f32.mrb[0].mxu0
    %v1128 = vadd.f32 0.0, %v1127
    %v1129 = vpop.f32.mrb[0].mxu0
    %1130 = vmatprep.mubr.bf16.mxu0 0
    %1131 = vmatmul.mubr.bf16.gmra.mrb[0].mxu0 %v1045
    %v1132 = vpop.f32.mrb[0].mxu0
    %v1133 = vadd.f32 0.0, %v1132
    %v1134 = vpop.f32.mrb[0].mxu0
    %v1135 = vpop.f32.mrb[0].mxu0
    %v1136 = vadd.f32 0.0, %v1135
    %v1137 = vpop.f32.mrb[0].mxu0
    %1138 = vmatprep.mubr.bf16.mxu0 0
    %1139 = vmatmul.mubr.bf16.gmra.mrb[0].mxu0 %v1048
    %v1140 = vpop.f32.mrb[0].mxu0
    %v1141 = vadd.f32 0.0, %v1140
    %v1142 = vpop.f32.mrb[0].mxu0
    %v1143 = vpop.f32.mrb[0].mxu0
    %v1144 = vadd.f32 0.0, %v1143
    %v1145 = vpop.f32.mrb[0].mxu0
    %1146 = vdwg.mxu0
    %v1147 = vpack.c.bf16 %v1088, %v1085
    %v1148 = vpack.c.bf16 %v1096, %v1093
    %v1149 = vpack.c.bf16 %v1104, %v1101
    %v1150 = vpack.c.bf16 %v1112, %v1109
    %v1151 = vpack.c.bf16 %v1120, %v1117
    %v1152 = vpack.c.bf16 %v1128, %v1125
    %v1153 = vpack.c.bf16 %v1136, %v1133
    %v1154 = vpack.c.bf16 %v1144, %v1141
    %1155 = vmatprep.subr.bf16.mxu0 0
    %1156 = vmatpush1.bf16.msra.mxu0 %v245
    %1157 = vmatprep.subr.bf16.mxu0 0
    %1158 = vmatpush1.bf16.msra.mxu0 %v246
    %1159 = vmatprep.subr.bf16.mxu0 0
    %1160 = vmatpush1.bf16.msra.mxu0 0
    %1161 = vmatprep.subr.bf16.mxu0 0
    %1162 = vmatpush1.bf16.msra.mxu0 0
    %1163 = vmatprep.subr.bf16.mxu0 0
    %1164 = vmatpush1.bf16.msra.mxu0 0
    %1165 = vmatprep.subr.bf16.mxu0 0
    %1166 = vmatpush1.bf16.msra.mxu0 0
    %1167 = vmatprep.subr.bf16.mxu0 0
    %1168 = vmatpush1.bf16.msra.mxu0 0
    %1169 = vmatprep.subr.bf16.mxu0 0
    %1170 = vmatpush1.bf16.msra.mxu0 0
    %1171 = vmatprep.subr.bf16.mxu0 0
    %1172 = vmatpush1.bf16.msra.mxu0 0
    %1173 = vmatprep.subr.bf16.mxu0 0
    %1174 = vmatpush1.bf16.msra.mxu0 0
    %1175 = vmatprep.subr.bf16.mxu0 0
    %1176 = vmatpush1.bf16.msra.mxu0 0
    %1177 = vmatprep.subr.bf16.mxu0 0
    %1178 = vmatpush1.bf16.msra.mxu0 0
    %1179 = vmatprep.subr.bf16.mxu0 0
    %1180 = vmatpush1.bf16.msra.mxu0 0
    %1181 = vmatprep.subr.bf16.mxu0 0
    %1182 = vmatpush1.bf16.msra.mxu0 0
    %1183 = vmatprep.subr.bf16.mxu0 0
    %1184 = vmatpush1.bf16.msra.mxu0 0
    %1185 = vmatprep.subr.bf16.mxu0 0
    %1186 = vmatpush1.bf16.msra.mxu0 0
    %1187 = vmatprep.mubr.bf16.mxu0 0
    %1188 = vmatmul.mubr.bf16.gmra.mrb[0].mxu0 %v1027
    %v1189 = vpop.f32.mrb[0].mxu0
    %v1190 = vadd.f32 0.0, %v1189
    %v1191 = vpop.f32.mrb[0].mxu0
    %v1192 = vpop.f32.mrb[0].mxu0
    %v1193 = vadd.f32 0.0, %v1192
    %v1194 = vpop.f32.mrb[0].mxu0
    %1195 = vmatprep.mubr.bf16.mxu0 0
    %1196 = vmatmul.mubr.bf16.gmra.mrb[0].mxu0 %v1030
    %v1197 = vpop.f32.mrb[0].mxu0
    %v1198 = vadd.f32 0.0, %v1197
    %v1199 = vpop.f32.mrb[0].mxu0
    %v1200 = vpop.f32.mrb[0].mxu0
    %v1201 = vadd.f32 0.0, %v1200
    %v1202 = vpop.f32.mrb[0].mxu0
    %1203 = vmatprep.mubr.bf16.mxu0 0
    %1204 = vmatmul.mubr.bf16.gmra.mrb[0].mxu0 %v1033
    %v1205 = vpop.f32.mrb[0].mxu0
    %v1206 = vadd.f32 0.0, %v1205
    %v1207 = vpop.f32.mrb[0].mxu0
    %v1208 = vpop.f32.mrb[0].mxu0
    %v1209 = vadd.f32 0.0, %v1208
    %v1210 = vpop.f32.mrb[0].mxu0
    %1211 = vmatprep.mubr.bf16.mxu0 0
    %1212 = vmatmul.mubr.bf16.gmra.mrb[0].mxu0 %v1036
    %v1213 = vpop.f32.mrb[0].mxu0
    %v1214 = vadd.f32 0.0, %v1213
    %v1215 = vpop.f32.mrb[0].mxu0
    %v1216 = vpop.f32.mrb[0].mxu0
    %v1217 = vadd.f32 0.0, %v1216
    %v1218 = vpop.f32.mrb[0].mxu0
    %1219 = vmatprep.mubr.bf16.mxu0 0
    %1220 = vmatmul.mubr.bf16.gmra.mrb[0].mxu0 %v1039
    %v1221 = vpop.f32.mrb[0].mxu0
    %v1222 = vadd.f32 0.0, %v1221
    %v1223 = vpop.f32.mrb[0].mxu0
    %v1224 = vpop.f32.mrb[0].mxu0
    %v1225 = vadd.f32 0.0, %v1224
    %v1226 = vpop.f32.mrb[0].mxu0
    %1227 = vmatprep.mubr.bf16.mxu0 0
    %1228 = vmatmul.mubr.bf16.gmra.mrb[0].mxu0 %v1042
    %v1229 = vpop.f32.mrb[0].mxu0
    %v1230 = vadd.f32 0.0, %v1229
    %v1231 = vpop.f32.mrb[0].mxu0
    %v1232 = vpop.f32.mrb[0].mxu0
    %v1233 = vadd.f32 0.0, %v1232
    %v1234 = vpop.f32.mrb[0].mxu0
    %1235 = vmatprep.mubr.bf16.mxu0 0
    %1236 = vmatmul.mubr.bf16.gmra.mrb[0].mxu0 %v1045
    %v1237 = vpop.f32.mrb[0].mxu0
    %v1238 = vadd.f32 0.0, %v1237
    %v1239 = vpop.f32.mrb[0].mxu0
    %v1240 = vpop.f32.mrb[0].mxu0
    %v1241 = vadd.f32 0.0, %v1240
    %v1242 = vpop.f32.mrb[0].mxu0
    %1243 = vmatprep.mubr.bf16.mxu0 0
    %1244 = vmatmul.mubr.bf16.gmra.mrb[0].mxu0 %v1048
    %v1245 = vpop.f32.mrb[0].mxu0
    %v1246 = vadd.f32 0.0, %v1245
    %v1247 = vpop.f32.mrb[0].mxu0
    %v1248 = vpop.f32.mrb[0].mxu0
    %v1249 = vadd.f32 0.0, %v1248
    %v1250 = vpop.f32.mrb[0].mxu0
    %1251 = vdwg.mxu0
    %1252 = vmatprep.subr.bf16.mxu0 0
    %1253 = vmatpush1.bf16.msra.mxu0 %v1147
    %1254 = vmatprep.subr.bf16.mxu0 0
    %1255 = vmatpush1.bf16.msra.mxu0 %v1148
    %1256 = vmatprep.subr.bf16.mxu0 0
    %1257 = vmatpush1.bf16.msra.mxu0 %v1149
    %1258 = vmatprep.subr.bf16.mxu0 0
    %1259 = vmatpush1.bf16.msra.mxu0 %v1150
    %1260 = vmatprep.subr.bf16.mxu0 0
    %1261 = vmatpush1.bf16.msra.mxu0 %v1151
    %1262 = vmatprep.subr.bf16.mxu0 0
    %1263 = vmatpush1.bf16.msra.mxu0 %v1152
    %1264 = vmatprep.subr.bf16.mxu0 0
    %1265 = vmatpush1.bf16.msra.mxu0 %v1153
    %1266 = vmatprep.subr.bf16.mxu0 0
    %1267 = vmatpush1.bf16.msra.mxu0 %v1154
    %1268 = vmatprep.subr.bf16.mxu0 0
    %1269 = vmatpush1.bf16.msra.mxu0 0
    %1270 = vmatprep.subr.bf16.mxu0 0
    %1271 = vmatpush1.bf16.msra.mxu0 0
    %1272 = vmatprep.subr.bf16.mxu0 0
    %1273 = vmatpush1.bf16.msra.mxu0 0
    %1274 = vmatprep.subr.bf16.mxu0 0
    %1275 = vmatpush1.bf16.msra.mxu0 0
    %1276 = vmatprep.subr.bf16.mxu0 0
    %1277 = vmatpush1.bf16.msra.mxu0 0
    %1278 = vmatprep.subr.bf16.mxu0 0
    %1279 = vmatpush1.bf16.msra.mxu0 0
    %1280 = vmatprep.subr.bf16.mxu0 0
    %1281 = vmatpush1.bf16.msra.mxu0 0
    %1282 = vmatprep.subr.bf16.mxu0 0
    %1283 = vmatpush1.bf16.msra.mxu0 0
    %1284 = vmatprep.mubr.bf16.mxu0 0
    %1285 = vmatmul.mubr.bf16.gmra.mrb[0].mxu0 %v378
    %v1286 = vpop.f32.mrb[0].mxu0
    %v1287 = vadd.f32 %v1190, %v1286
    %v1288 = vpop.f32.mrb[0].mxu0
    %v1289 = vpop.f32.mrb[0].mxu0
    %v1290 = vadd.f32 %v1193, %v1289
    %v1291 = vpop.f32.mrb[0].mxu0
    %1292 = vmatprep.mubr.bf16.mxu0 0
    %1293 = vmatmul.mubr.bf16.gmra.mrb[0].mxu0 %v379
    %v1294 = vpop.f32.mrb[0].mxu0
    %v1295 = vadd.f32 %v1198, %v1294
    %v1296 = vpop.f32.mrb[0].mxu0
    %v1297 = vpop.f32.mrb[0].mxu0
    %v1298 = vadd.f32 %v1201, %v1297
    %v1299 = vpop.f32.mrb[0].mxu0
    %1300 = vmatprep.mubr.bf16.mxu0 0
    %1301 = vmatmul.mubr.bf16.gmra.mrb[0].mxu0 %v380
    %v1302 = vpop.f32.mrb[0].mxu0
    %v1303 = vadd.f32 %v1206, %v1302
    %v1304 = vpop.f32.mrb[0].mxu0
    %v1305 = vpop.f32.mrb[0].mxu0
    %v1306 = vadd.f32 %v1209, %v1305
    %v1307 = vpop.f32.mrb[0].mxu0
    %1308 = vmatprep.mubr.bf16.mxu0 0
    %1309 = vmatmul.mubr.bf16.gmra.mrb[0].mxu0 %v381
    %v1310 = vpop.f32.mrb[0].mxu0
    %v1311 = vadd.f32 %v1214, %v1310
    %v1312 = vpop.f32.mrb[0].mxu0
    %v1313 = vpop.f32.mrb[0].mxu0
    %v1314 = vadd.f32 %v1217, %v1313
    %v1315 = vpop.f32.mrb[0].mxu0
    %1316 = vmatprep.mubr.bf16.mxu0 0
    %1317 = vmatmul.mubr.bf16.gmra.mrb[0].mxu0 %v382
    %v1318 = vpop.f32.mrb[0].mxu0
    %v1319 = vadd.f32 %v1222, %v1318
    %v1320 = vpop.f32.mrb[0].mxu0
    %v1321 = vpop.f32.mrb[0].mxu0
    %v1322 = vadd.f32 %v1225, %v1321
    %v1323 = vpop.f32.mrb[0].mxu0
    %1324 = vmatprep.mubr.bf16.mxu0 0
    %1325 = vmatmul.mubr.bf16.gmra.mrb[0].mxu0 %v383
    %v1326 = vpop.f32.mrb[0].mxu0
    %v1327 = vadd.f32 %v1230, %v1326
    %v1328 = vpop.f32.mrb[0].mxu0
    %v1329 = vpop.f32.mrb[0].mxu0
    %v1330 = vadd.f32 %v1233, %v1329
    %v1331 = vpop.f32.mrb[0].mxu0
    %1332 = vmatprep.mubr.bf16.mxu0 0
    %1333 = vmatmul.mubr.bf16.gmra.mrb[0].mxu0 %v384
    %v1334 = vpop.f32.mrb[0].mxu0
    %v1335 = vadd.f32 %v1238, %v1334
    %v1336 = vpop.f32.mrb[0].mxu0
    %v1337 = vpop.f32.mrb[0].mxu0
    %v1338 = vadd.f32 %v1241, %v1337
    %v1339 = vpop.f32.mrb[0].mxu0
    %1340 = vmatprep.mubr.bf16.mxu0 0
    %1341 = vmatmul.mubr.bf16.gmra.mrb[0].mxu0 %v385
    %v1342 = vpop.f32.mrb[0].mxu0
    %v1343 = vadd.f32 %v1246, %v1342
    %v1344 = vpop.f32.mrb[0].mxu0
    %v1345 = vpop.f32.mrb[0].mxu0
    %v1346 = vadd.f32 %v1249, %v1345
    %v1347 = vpop.f32.mrb[0].mxu0
    %1348 = vdwg.mxu0
    %v1349 = vadd.f32 %v1287, %v495
    %v1350 = vadd.f32 %v1290, %v495
    %v1351 = vadd.f32 %v1295, %v495
    %v1352 = vadd.f32 %v1298, %v495
    %v1353 = vadd.f32 %v1303, %v495
    %v1354 = vadd.f32 %v1306, %v495
    %v1355 = vadd.f32 %v1311, %v495
    %v1356 = vadd.f32 %v1314, %v495
    %v1357 = vadd.f32 %v1319, %v495
    %v1358 = vadd.f32 %v1322, %v495
    %v1359 = vadd.f32 %v1327, %v495
    %v1360 = vadd.f32 %v1330, %v495
    %v1361 = vadd.f32 %v1335, %v495
    %v1362 = vadd.f32 %v1338, %v495
    %v1363 = vadd.f32 %v1343, %v495
    %v1364 = vadd.f32 %v1346, %v495
    %v1365 = vxor.u32 %v1349, 2147483648
    %v1366 = vxor.u32 %v1350, 2147483648
    %v1367 = vxor.u32 %v1351, 2147483648
    %v1368 = vxor.u32 %v1352, 2147483648
    %v1369 = vxor.u32 %v1353, 2147483648
    %v1370 = vxor.u32 %v1354, 2147483648
    %v1371 = vxor.u32 %v1355, 2147483648
    %v1372 = vxor.u32 %v1356, 2147483648
    %v1373 = vxor.u32 %v1357, 2147483648
    %v1374 = vxor.u32 %v1358, 2147483648
    %v1375 = vxor.u32 %v1359, 2147483648
    %v1376 = vxor.u32 %v1360, 2147483648
    %v1377 = vxor.u32 %v1361, 2147483648
    %v1378 = vxor.u32 %v1362, 2147483648
    %v1379 = vxor.u32 %v1363, 2147483648
    %v1380 = vxor.u32 %v1364, 2147483648
    %v1381 = vmul.f32 %v1365, 1.442695
    %v1382 = vpow.pop %v1381
    %v1383 = vmul.f32 %v1366, 1.442695
    %v1384 = vpow.pop %v1383
    %v1385 = vmul.f32 %v1367, 1.442695
    %v1386 = vpow.pop %v1385
    %v1387 = vmul.f32 %v1368, 1.442695
    %v1388 = vpow.pop %v1387
    %v1389 = vmul.f32 %v1369, 1.442695
    %v1390 = vpow.pop %v1389
    %v1391 = vmul.f32 %v1370, 1.442695
    %v1392 = vpow.pop %v1391
    %v1393 = vmul.f32 %v1371, 1.442695
    %v1394 = vpow.pop %v1393
    %v1395 = vmul.f32 %v1372, 1.442695
    %v1396 = vpow.pop %v1395
    %v1397 = vmul.f32 %v1373, 1.442695
    %v1398 = vpow.pop %v1397
    %v1399 = vmul.f32 %v1374, 1.442695
    %v1400 = vpow.pop %v1399
    %v1401 = vmul.f32 %v1375, 1.442695
    %v1402 = vpow.pop %v1401
    %v1403 = vmul.f32 %v1376, 1.442695
    %v1404 = vpow.pop %v1403
    %v1405 = vmul.f32 %v1377, 1.442695
    %v1406 = vpow.pop %v1405
    %v1407 = vmul.f32 %v1378, 1.442695
    %v1408 = vpow.pop %v1407
    %v1409 = vmul.f32 %v1379, 1.442695
    %v1410 = vpow.pop %v1409
    %v1411 = vmul.f32 %v1380, 1.442695
    %v1412 = vpow.pop %v1411
    %v1413 = vadd.f32 %v1382, 1.0
    %v1414 = vadd.f32 %v1384, 1.0
    %v1415 = vadd.f32 %v1386, 1.0
    %v1416 = vadd.f32 %v1388, 1.0
    %v1417 = vadd.f32 %v1390, 1.0
    %v1418 = vadd.f32 %v1392, 1.0
    %v1419 = vadd.f32 %v1394, 1.0
    %v1420 = vadd.f32 %v1396, 1.0
    %v1421 = vadd.f32 %v1398, 1.0
    %v1422 = vadd.f32 %v1400, 1.0
    %v1423 = vadd.f32 %v1402, 1.0
    %v1424 = vadd.f32 %v1404, 1.0
    %v1425 = vadd.f32 %v1406, 1.0
    %v1426 = vadd.f32 %v1408, 1.0
    %v1427 = vadd.f32 %v1410, 1.0
    %v1428 = vadd.f32 %v1412, 1.0
    %v1429 = vrcp.pop %v1413
    %v1430 = vmul.f32 1.0, %v1429
    %v1431 = vrcp.pop %v1414
    %v1432 = vmul.f32 1.0, %v1431
    %v1433 = vrcp.pop %v1415
    %v1434 = vmul.f32 1.0, %v1433
    %v1435 = vrcp.pop %v1416
    %v1436 = vmul.f32 1.0, %v1435
    %v1437 = vrcp.pop %v1417
    %v1438 = vmul.f32 1.0, %v1437
    %v1439 = vrcp.pop %v1418
    %v1440 = vmul.f32 1.0, %v1439
    %v1441 = vrcp.pop %v1419
    %v1442 = vmul.f32 1.0, %v1441
    %v1443 = vrcp.pop %v1420
    %v1444 = vmul.f32 1.0, %v1443
    %v1445 = vrcp.pop %v1421
    %v1446 = vmul.f32 1.0, %v1445
    %v1447 = vrcp.pop %v1422
    %v1448 = vmul.f32 1.0, %v1447
    %v1449 = vrcp.pop %v1423
    %v1450 = vmul.f32 1.0, %v1449
    %v1451 = vrcp.pop %v1424
    %v1452 = vmul.f32 1.0, %v1451
    %v1453 = vrcp.pop %v1425
    %v1454 = vmul.f32 1.0, %v1453
    %v1455 = vrcp.pop %v1426
    %v1456 = vmul.f32 1.0, %v1455
    %v1457 = vrcp.pop %v1427
    %v1458 = vmul.f32 1.0, %v1457
    %v1459 = vrcp.pop %v1428
    %v1460 = vmul.f32 1.0, %v1459
    %1477 = vrot.lane.b32.xlu0 %v1349, 32
    %v1478 = vpop.permute.xlu0 %1477
    %1479 = vrot.lane.b32.xlu0 %v1350, 32
    %v1480 = vpop.permute.xlu0 %1479
    %1481 = vrot.lane.b32.xlu0 %v1351, 32
    %v1482 = vpop.permute.xlu0 %1481
    %1483 = vrot.lane.b32.xlu0 %v1352, 32
    %v1484 = vpop.permute.xlu0 %1483
    %1485 = vrot.lane.b32.xlu0 %v1353, 32
    %v1486 = vpop.permute.xlu0 %1485
    %1487 = vrot.lane.b32.xlu0 %v1354, 32
    %v1488 = vpop.permute.xlu0 %1487
    %1489 = vrot.lane.b32.xlu0 %v1355, 32
    %v1490 = vpop.permute.xlu0 %1489
    %1491 = vrot.lane.b32.xlu0 %v1356, 32
    %v1492 = vpop.permute.xlu0 %1491
    %1493 = vrot.lane.b32.xlu0 %v1357, 32
    %v1494 = vpop.permute.xlu0 %1493
    %1495 = vrot.lane.b32.xlu0 %v1358, 32
    %v1496 = vpop.permute.xlu0 %1495
    %1497 = vrot.lane.b32.xlu0 %v1359, 32
    %v1498 = vpop.permute.xlu0 %1497
    %1499 = vrot.lane.b32.xlu0 %v1360, 32
    %v1500 = vpop.permute.xlu0 %1499
    %1501 = vrot.lane.b32.xlu0 %v1361, 32
    %v1502 = vpop.permute.xlu0 %1501
    %1503 = vrot.lane.b32.xlu0 %v1362, 32
    %v1504 = vpop.permute.xlu0 %1503
    %1505 = vrot.lane.b32.xlu0 %v1363, 32
    %v1506 = vpop.permute.xlu0 %1505
    %1507 = vrot.lane.b32.xlu0 %v1364, 32
    %v1508 = vpop.permute.xlu0 %1507
    %v1525 = vmul.f32 %v1430, %v1478
    %v1526 = vmul.f32 %v1432, %v1480
    %v1527 = vmul.f32 %v1434, %v1482
    %v1528 = vmul.f32 %v1436, %v1484
    %v1529 = vmul.f32 %v1438, %v1486
    %v1530 = vmul.f32 %v1440, %v1488
    %v1531 = vmul.f32 %v1442, %v1490
    %v1532 = vmul.f32 %v1444, %v1492
    %v1533 = vmul.f32 %v1446, %v1494
    %v1534 = vmul.f32 %v1448, %v1496
    %v1535 = vmul.f32 %v1450, %v1498
    %v1536 = vmul.f32 %v1452, %v1500
    %v1537 = vmul.f32 %v1454, %v1502
    %v1538 = vmul.f32 %v1456, %v1504
    %v1539 = vmul.f32 %v1458, %v1506
    %v1540 = vmul.f32 %v1460, %v1508
    %1557 = vrot.lane.b32.xlu0 %v1525, 64
    %v1558 = vpop.permute.xlu0 %1557
    %1559 = vrot.lane.b32.xlu0 %v1526, 64
    %v1560 = vpop.permute.xlu0 %1559
    %1561 = vrot.lane.b32.xlu0 %v1527, 64
    %v1562 = vpop.permute.xlu0 %1561
    %1563 = vrot.lane.b32.xlu0 %v1528, 64
    %v1564 = vpop.permute.xlu0 %1563
    %1565 = vrot.lane.b32.xlu0 %v1529, 64
    %v1566 = vpop.permute.xlu0 %1565
    %1567 = vrot.lane.b32.xlu0 %v1530, 64
    %v1568 = vpop.permute.xlu0 %1567
    %1569 = vrot.lane.b32.xlu0 %v1531, 64
    %v1570 = vpop.permute.xlu0 %1569
    %1571 = vrot.lane.b32.xlu0 %v1532, 64
    %v1572 = vpop.permute.xlu0 %1571
    %1573 = vrot.lane.b32.xlu0 %v1533, 64
    %v1574 = vpop.permute.xlu0 %1573
    %1575 = vrot.lane.b32.xlu0 %v1534, 64
    %v1576 = vpop.permute.xlu0 %1575
    %1577 = vrot.lane.b32.xlu0 %v1535, 64
    %v1578 = vpop.permute.xlu0 %1577
    %1579 = vrot.lane.b32.xlu0 %v1536, 64
    %v1580 = vpop.permute.xlu0 %1579
    %1581 = vrot.lane.b32.xlu0 %v1537, 64
    %v1582 = vpop.permute.xlu0 %1581
    %1583 = vrot.lane.b32.xlu0 %v1538, 64
    %v1584 = vpop.permute.xlu0 %1583
    %1585 = vrot.lane.b32.xlu0 %v1539, 64
    %v1586 = vpop.permute.xlu0 %1585
    %1587 = vrot.lane.b32.xlu0 %v1540, 64
    %v1588 = vpop.permute.xlu0 %1587
    %v1605 = vadd.f32 %v1349, %v1558
    %v1606 = vadd.f32 %v1350, %v1560
    %v1607 = vadd.f32 %v1351, %v1562
    %v1608 = vadd.f32 %v1352, %v1564
    %v1609 = vadd.f32 %v1353, %v1566
    %v1610 = vadd.f32 %v1354, %v1568
    %v1611 = vadd.f32 %v1355, %v1570
    %v1612 = vadd.f32 %v1356, %v1572
    %v1613 = vadd.f32 %v1357, %v1574
    %v1614 = vadd.f32 %v1358, %v1576
    %v1615 = vadd.f32 %v1359, %v1578
    %v1616 = vadd.f32 %v1360, %v1580
    %v1617 = vadd.f32 %v1361, %v1582
    %v1618 = vadd.f32 %v1362, %v1584
    %v1619 = vadd.f32 %v1363, %v1586
    %v1620 = vadd.f32 %v1364, %v1588
    %v1621 = vtanh.pop %v1605
    %v1622 = vtanh.pop %v1606
    %v1623 = vtanh.pop %v1607
    %v1624 = vtanh.pop %v1608
    %v1625 = vtanh.pop %v1609
    %v1626 = vtanh.pop %v1610
    %v1627 = vtanh.pop %v1611
    %v1628 = vtanh.pop %v1612
    %v1629 = vtanh.pop %v1613
    %v1630 = vtanh.pop %v1614
    %v1631 = vtanh.pop %v1615
    %v1632 = vtanh.pop %v1616
    %v1633 = vtanh.pop %v1617
    %v1634 = vtanh.pop %v1618
    %v1635 = vtanh.pop %v1619
    %v1636 = vtanh.pop %v1620
    %v1637 = vsub.f32 1.0, %v1430
    %v1638 = vsub.f32 1.0, %v1432
    %v1639 = vsub.f32 1.0, %v1434
    %v1640 = vsub.f32 1.0, %v1436
    %v1641 = vsub.f32 1.0, %v1438
    %v1642 = vsub.f32 1.0, %v1440
    %v1643 = vsub.f32 1.0, %v1442
    %v1644 = vsub.f32 1.0, %v1444
    %v1645 = vsub.f32 1.0, %v1446
    %v1646 = vsub.f32 1.0, %v1448
    %v1647 = vsub.f32 1.0, %v1450
    %v1648 = vsub.f32 1.0, %v1452
    %v1649 = vsub.f32 1.0, %v1454
    %v1650 = vsub.f32 1.0, %v1456
    %v1651 = vsub.f32 1.0, %v1458
    %v1652 = vsub.f32 1.0, %v1460
    %1669 = vrot.lane.b32.xlu0 %v1621, 96
    %v1670 = vpop.permute.xlu0 %1669
    %1671 = vrot.lane.b32.xlu0 %v1622, 96
    %v1672 = vpop.permute.xlu0 %1671
    %1673 = vrot.lane.b32.xlu0 %v1623, 96
    %v1674 = vpop.permute.xlu0 %1673
    %1675 = vrot.lane.b32.xlu0 %v1624, 96
    %v1676 = vpop.permute.xlu0 %1675
    %1677 = vrot.lane.b32.xlu0 %v1625, 96
    %v1678 = vpop.permute.xlu0 %1677
    %1679 = vrot.lane.b32.xlu0 %v1626, 96
    %v1680 = vpop.permute.xlu0 %1679
    %1681 = vrot.lane.b32.xlu0 %v1627, 96
    %v1682 = vpop.permute.xlu0 %1681
    %1683 = vrot.lane.b32.xlu0 %v1628, 96
    %v1684 = vpop.permute.xlu0 %1683
    %1685 = vrot.lane.b32.xlu0 %v1629, 96
    %v1686 = vpop.permute.xlu0 %1685
    %1687 = vrot.lane.b32.xlu0 %v1630, 96
    %v1688 = vpop.permute.xlu0 %1687
    %1689 = vrot.lane.b32.xlu0 %v1631, 96
    %v1690 = vpop.permute.xlu0 %1689
    %1691 = vrot.lane.b32.xlu0 %v1632, 96
    %v1692 = vpop.permute.xlu0 %1691
    %1693 = vrot.lane.b32.xlu0 %v1633, 96
    %v1694 = vpop.permute.xlu0 %1693
    %1695 = vrot.lane.b32.xlu0 %v1634, 96
    %v1696 = vpop.permute.xlu0 %1695
    %1697 = vrot.lane.b32.xlu0 %v1635, 96
    %v1698 = vpop.permute.xlu0 %1697
    %1699 = vrot.lane.b32.xlu0 %v1636, 96
    %v1700 = vpop.permute.xlu0 %1699
    %v1717 = vmul.f32 %v1637, %v1670
    %v1718 = vmul.f32 %v1638, %v1672
    %v1719 = vmul.f32 %v1639, %v1674
    %v1720 = vmul.f32 %v1640, %v1676
    %v1721 = vmul.f32 %v1641, %v1678
    %v1722 = vmul.f32 %v1642, %v1680
    %v1723 = vmul.f32 %v1643, %v1682
    %v1724 = vmul.f32 %v1644, %v1684
    %v1725 = vmul.f32 %v1645, %v1686
    %v1726 = vmul.f32 %v1646, %v1688
    %v1727 = vmul.f32 %v1647, %v1690
    %v1728 = vmul.f32 %v1648, %v1692
    %v1729 = vmul.f32 %v1649, %v1694
    %v1730 = vmul.f32 %v1650, %v1696
    %v1731 = vmul.f32 %v1651, %v1698
    %v1732 = vmul.f32 %v1652, %v1700
    %v1733 = vmul.f32 %v1430, %v961
    %v1734 = vmul.f32 %v1432, %v962
    %v1735 = vmul.f32 %v1434, %v963
    %v1736 = vmul.f32 %v1436, %v964
    %v1737 = vmul.f32 %v1438, %v965
    %v1738 = vmul.f32 %v1440, %v966
    %v1739 = vmul.f32 %v1442, %v967
    %v1740 = vmul.f32 %v1444, %v968
    %v1741 = vmul.f32 %v1446, %v969
    %v1742 = vmul.f32 %v1448, %v970
    %v1743 = vmul.f32 %v1450, %v971
    %v1744 = vmul.f32 %v1452, %v972
    %v1745 = vmul.f32 %v1454, %v973
    %v1746 = vmul.f32 %v1456, %v974
    %v1747 = vmul.f32 %v1458, %v975
    %v1748 = vmul.f32 %v1460, %v976
    %v1749 = vadd.f32 %v1717, %v1733
    %v1750 = vadd.f32 %v1718, %v1734
    %v1751 = vadd.f32 %v1719, %v1735
    %v1752 = vadd.f32 %v1720, %v1736
    %v1753 = vadd.f32 %v1721, %v1737
    %v1754 = vadd.f32 %v1722, %v1738
    %v1755 = vadd.f32 %v1723, %v1739
    %v1756 = vadd.f32 %v1724, %v1740
    %v1757 = vadd.f32 %v1725, %v1741
    %v1758 = vadd.f32 %v1726, %v1742
    %v1759 = vadd.f32 %v1727, %v1743
    %v1760 = vadd.f32 %v1728, %v1744
    %v1761 = vadd.f32 %v1729, %v1745
    %v1762 = vadd.f32 %v1730, %v1746
    %v1763 = vadd.f32 %v1731, %v1747
    %v1764 = vadd.f32 %v1732, %v1748
    %v1765 = vpack.c.bf16 %v1750, %v1749
    %v1766 = vpack.c.bf16 %v1752, %v1751
    %v1767 = vpack.c.bf16 %v1754, %v1753
    %v1768 = vpack.c.bf16 %v1756, %v1755
    %v1769 = vpack.c.bf16 %v1758, %v1757
    %v1770 = vpack.c.bf16 %v1760, %v1759
    %v1771 = vpack.c.bf16 %v1762, %v1761
    %v1772 = vpack.c.bf16 %v1764, %v1763
    %s1773 = scalar_lea.vmem %s2, 32
    %v1774 = vld [vmem:[%s1773] sm:$0xf]
    %v1775 = vld [vmem:[%s1773 + $0x4] sm:$0xf]
    %v1776 = vld [vmem:[%s1773 + $0x8] sm:$0xf]
    %v1777 = vld [vmem:[%s1773 + $0xc] sm:$0xf]
    %1786 = vrot.lane.b32.xlu0 %v1765, 96
    %v1787 = vpop.permute.xlu0 %1786
    %1788 = vrot.lane.b32.xlu0 %v1766, 96
    %v1789 = vpop.permute.xlu0 %1788
    %1790 = vrot.lane.b32.xlu0 %v1767, 96
    %v1791 = vpop.permute.xlu0 %1790
    %1792 = vrot.lane.b32.xlu0 %v1768, 96
    %v1793 = vpop.permute.xlu0 %1792
    %1794 = vrot.lane.b32.xlu0 %v1769, 96
    %v1795 = vpop.permute.xlu0 %1794
    %1796 = vrot.lane.b32.xlu0 %v1770, 96
    %v1797 = vpop.permute.xlu0 %1796
    %1798 = vrot.lane.b32.xlu0 %v1771, 96
    %v1799 = vpop.permute.xlu0 %1798
    %1800 = vrot.lane.b32.xlu0 %v1772, 96
    %v1801 = vpop.permute.xlu0 %1800
    %v1806 = vunpack.c.l.b16 %v1774
    %v1807 = vunpack.c.l.b16 %v1775
    %v1808 = vunpack.c.l.b16 %v1776
    %v1809 = vunpack.c.l.b16 %v1777
    %v1810 = vpack.c.b16 %v1807, %v1806
    %v1811 = vpack.c.b16 %v1809, %v1808
    %v1815 = vsel %vm107, %v1787, 0
    %v1818 = vsel %vm107, %v1789, 0
    %v1821 = vsel %vm107, %v1791, 0
    %v1824 = vsel %vm107, %v1793, 0
    %v1827 = vsel %vm107, %v1795, 0
    %v1830 = vsel %vm107, %v1797, 0
    %v1833 = vsel %vm107, %v1799, 0
    %v1836 = vsel %vm107, %v1801, 0
    %1838 = vmatprep.subr.bf16.mxu0 0
    %1839 = vmatpush1.bf16.msra.mxu0 %v1810
    %1840 = vmatprep.subr.bf16.mxu0 0
    %1841 = vmatpush1.bf16.msra.mxu0 %v1811
    %1842 = vmatprep.subr.bf16.mxu0 0
    %1843 = vmatpush1.bf16.msra.mxu0 0
    %1844 = vmatprep.subr.bf16.mxu0 0
    %1845 = vmatpush1.bf16.msra.mxu0 0
    %1846 = vmatprep.subr.bf16.mxu0 0
    %1847 = vmatpush1.bf16.msra.mxu0 0
    %1848 = vmatprep.subr.bf16.mxu0 0
    %1849 = vmatpush1.bf16.msra.mxu0 0
    %1850 = vmatprep.subr.bf16.mxu0 0
    %1851 = vmatpush1.bf16.msra.mxu0 0
    %1852 = vmatprep.subr.bf16.mxu0 0
    %1853 = vmatpush1.bf16.msra.mxu0 0
    %1854 = vmatprep.subr.bf16.mxu0 0
    %1855 = vmatpush1.bf16.msra.mxu0 0
    %1856 = vmatprep.subr.bf16.mxu0 0
    %1857 = vmatpush1.bf16.msra.mxu0 0
    %1858 = vmatprep.subr.bf16.mxu0 0
    %1859 = vmatpush1.bf16.msra.mxu0 0
    %1860 = vmatprep.subr.bf16.mxu0 0
    %1861 = vmatpush1.bf16.msra.mxu0 0
    %1862 = vmatprep.subr.bf16.mxu0 0
    %1863 = vmatpush1.bf16.msra.mxu0 0
    %1864 = vmatprep.subr.bf16.mxu0 0
    %1865 = vmatpush1.bf16.msra.mxu0 0
    %1866 = vmatprep.subr.bf16.mxu0 0
    %1867 = vmatpush1.bf16.msra.mxu0 0
    %1868 = vmatprep.subr.bf16.mxu0 0
    %1869 = vmatpush1.bf16.msra.mxu0 0
    %1870 = vmatprep.mubr.bf16.mxu0 0
    %1871 = vmatmul.mubr.bf16.gmra.mrb[0].mxu0 %v1815
    %v1872 = vpop.f32.mrb[0].mxu0
    %v1873 = vadd.f32 0.0, %v1872
    %v1874 = vpop.f32.mrb[0].mxu0
    %v1875 = vpop.f32.mrb[0].mxu0
    %v1876 = vadd.f32 0.0, %v1875
    %v1877 = vpop.f32.mrb[0].mxu0
    %1878 = vmatprep.mubr.bf16.mxu0 0
    %1879 = vmatmul.mubr.bf16.gmra.mrb[0].mxu0 %v1818
    %v1880 = vpop.f32.mrb[0].mxu0
    %v1881 = vadd.f32 0.0, %v1880
    %v1882 = vpop.f32.mrb[0].mxu0
    %v1883 = vpop.f32.mrb[0].mxu0
    %v1884 = vadd.f32 0.0, %v1883
    %v1885 = vpop.f32.mrb[0].mxu0
    %1886 = vmatprep.mubr.bf16.mxu0 0
    %1887 = vmatmul.mubr.bf16.gmra.mrb[0].mxu0 %v1821
    %v1888 = vpop.f32.mrb[0].mxu0
    %v1889 = vadd.f32 0.0, %v1888
    %v1890 = vpop.f32.mrb[0].mxu0
    %v1891 = vpop.f32.mrb[0].mxu0
    %v1892 = vadd.f32 0.0, %v1891
    %v1893 = vpop.f32.mrb[0].mxu0
    %1894 = vmatprep.mubr.bf16.mxu0 0
    %1895 = vmatmul.mubr.bf16.gmra.mrb[0].mxu0 %v1824
    %v1896 = vpop.f32.mrb[0].mxu0
    %v1897 = vadd.f32 0.0, %v1896
    %v1898 = vpop.f32.mrb[0].mxu0
    %v1899 = vpop.f32.mrb[0].mxu0
    %v1900 = vadd.f32 0.0, %v1899
    %v1901 = vpop.f32.mrb[0].mxu0
    %1902 = vmatprep.mubr.bf16.mxu0 0
    %1903 = vmatmul.mubr.bf16.gmra.mrb[0].mxu0 %v1827
    %v1904 = vpop.f32.mrb[0].mxu0
    %v1905 = vadd.f32 0.0, %v1904
    %v1906 = vpop.f32.mrb[0].mxu0
    %v1907 = vpop.f32.mrb[0].mxu0
    %v1908 = vadd.f32 0.0, %v1907
    %v1909 = vpop.f32.mrb[0].mxu0
    %1910 = vmatprep.mubr.bf16.mxu0 0
    %1911 = vmatmul.mubr.bf16.gmra.mrb[0].mxu0 %v1830
    %v1912 = vpop.f32.mrb[0].mxu0
    %v1913 = vadd.f32 0.0, %v1912
    %v1914 = vpop.f32.mrb[0].mxu0
    %v1915 = vpop.f32.mrb[0].mxu0
    %v1916 = vadd.f32 0.0, %v1915
    %v1917 = vpop.f32.mrb[0].mxu0
    %1918 = vmatprep.mubr.bf16.mxu0 0
    %1919 = vmatmul.mubr.bf16.gmra.mrb[0].mxu0 %v1833
    %v1920 = vpop.f32.mrb[0].mxu0
    %v1921 = vadd.f32 0.0, %v1920
    %v1922 = vpop.f32.mrb[0].mxu0
    %v1923 = vpop.f32.mrb[0].mxu0
    %v1924 = vadd.f32 0.0, %v1923
    %v1925 = vpop.f32.mrb[0].mxu0
    %1926 = vmatprep.mubr.bf16.mxu0 0
    %1927 = vmatmul.mubr.bf16.gmra.mrb[0].mxu0 %v1836
    %v1928 = vpop.f32.mrb[0].mxu0
    %v1929 = vadd.f32 0.0, %v1928
    %v1930 = vpop.f32.mrb[0].mxu0
    %v1931 = vpop.f32.mrb[0].mxu0
    %v1932 = vadd.f32 0.0, %v1931
    %v1933 = vpop.f32.mrb[0].mxu0
    %1934 = vdwg.mxu0
    %v1935 = vpack.c.bf16 %v1876, %v1873
    %v1936 = vpack.c.bf16 %v1884, %v1881
    %v1937 = vpack.c.bf16 %v1892, %v1889
    %v1938 = vpack.c.bf16 %v1900, %v1897
    %v1939 = vpack.c.bf16 %v1908, %v1905
    %v1940 = vpack.c.bf16 %v1916, %v1913
    %v1941 = vpack.c.bf16 %v1924, %v1921
    %v1942 = vpack.c.bf16 %v1932, %v1929
    %1943 = vmatprep.subr.bf16.mxu0 0
    %1944 = vmatpush1.bf16.msra.mxu0 %v245
    %1945 = vmatprep.subr.bf16.mxu0 0
    %1946 = vmatpush1.bf16.msra.mxu0 %v246
    %1947 = vmatprep.subr.bf16.mxu0 0
    %1948 = vmatpush1.bf16.msra.mxu0 0
    %1949 = vmatprep.subr.bf16.mxu0 0
    %1950 = vmatpush1.bf16.msra.mxu0 0
    %1951 = vmatprep.subr.bf16.mxu0 0
    %1952 = vmatpush1.bf16.msra.mxu0 0
    %1953 = vmatprep.subr.bf16.mxu0 0
    %1954 = vmatpush1.bf16.msra.mxu0 0
    %1955 = vmatprep.subr.bf16.mxu0 0
    %1956 = vmatpush1.bf16.msra.mxu0 0
    %1957 = vmatprep.subr.bf16.mxu0 0
    %1958 = vmatpush1.bf16.msra.mxu0 0
    %1959 = vmatprep.subr.bf16.mxu0 0
    %1960 = vmatpush1.bf16.msra.mxu0 0
    %1961 = vmatprep.subr.bf16.mxu0 0
    %1962 = vmatpush1.bf16.msra.mxu0 0
    %1963 = vmatprep.subr.bf16.mxu0 0
    %1964 = vmatpush1.bf16.msra.mxu0 0
    %1965 = vmatprep.subr.bf16.mxu0 0
    %1966 = vmatpush1.bf16.msra.mxu0 0
    %1967 = vmatprep.subr.bf16.mxu0 0
    %1968 = vmatpush1.bf16.msra.mxu0 0
    %1969 = vmatprep.subr.bf16.mxu0 0
    %1970 = vmatpush1.bf16.msra.mxu0 0
    %1971 = vmatprep.subr.bf16.mxu0 0
    %1972 = vmatpush1.bf16.msra.mxu0 0
    %1973 = vmatprep.subr.bf16.mxu0 0
    %1974 = vmatpush1.bf16.msra.mxu0 0
    %1975 = vmatprep.mubr.bf16.mxu0 0
    %1976 = vmatmul.mubr.bf16.gmra.mrb[0].mxu0 %v1815
    %v1977 = vpop.f32.mrb[0].mxu0
    %v1978 = vadd.f32 0.0, %v1977
    %v1979 = vpop.f32.mrb[0].mxu0
    %v1980 = vpop.f32.mrb[0].mxu0
    %v1981 = vadd.f32 0.0, %v1980
    %v1982 = vpop.f32.mrb[0].mxu0
    %1983 = vmatprep.mubr.bf16.mxu0 0
    %1984 = vmatmul.mubr.bf16.gmra.mrb[0].mxu0 %v1818
    %v1985 = vpop.f32.mrb[0].mxu0
    %v1986 = vadd.f32 0.0, %v1985
    %v1987 = vpop.f32.mrb[0].mxu0
    %v1988 = vpop.f32.mrb[0].mxu0
    %v1989 = vadd.f32 0.0, %v1988
    %v1990 = vpop.f32.mrb[0].mxu0
    %1991 = vmatprep.mubr.bf16.mxu0 0
    %1992 = vmatmul.mubr.bf16.gmra.mrb[0].mxu0 %v1821
    %v1993 = vpop.f32.mrb[0].mxu0
    %v1994 = vadd.f32 0.0, %v1993
    %v1995 = vpop.f32.mrb[0].mxu0
    %v1996 = vpop.f32.mrb[0].mxu0
    %v1997 = vadd.f32 0.0, %v1996
    %v1998 = vpop.f32.mrb[0].mxu0
    %1999 = vmatprep.mubr.bf16.mxu0 0
    %2000 = vmatmul.mubr.bf16.gmra.mrb[0].mxu0 %v1824
    %v2001 = vpop.f32.mrb[0].mxu0
    %v2002 = vadd.f32 0.0, %v2001
    %v2003 = vpop.f32.mrb[0].mxu0
    %v2004 = vpop.f32.mrb[0].mxu0
    %v2005 = vadd.f32 0.0, %v2004
    %v2006 = vpop.f32.mrb[0].mxu0
    %2007 = vmatprep.mubr.bf16.mxu0 0
    %2008 = vmatmul.mubr.bf16.gmra.mrb[0].mxu0 %v1827
    %v2009 = vpop.f32.mrb[0].mxu0
    %v2010 = vadd.f32 0.0, %v2009
    %v2011 = vpop.f32.mrb[0].mxu0
    %v2012 = vpop.f32.mrb[0].mxu0
    %v2013 = vadd.f32 0.0, %v2012
    %v2014 = vpop.f32.mrb[0].mxu0
    %2015 = vmatprep.mubr.bf16.mxu0 0
    %2016 = vmatmul.mubr.bf16.gmra.mrb[0].mxu0 %v1830
    %v2017 = vpop.f32.mrb[0].mxu0
    %v2018 = vadd.f32 0.0, %v2017
    %v2019 = vpop.f32.mrb[0].mxu0
    %v2020 = vpop.f32.mrb[0].mxu0
    %v2021 = vadd.f32 0.0, %v2020
    %v2022 = vpop.f32.mrb[0].mxu0
    %2023 = vmatprep.mubr.bf16.mxu0 0
    %2024 = vmatmul.mubr.bf16.gmra.mrb[0].mxu0 %v1833
    %v2025 = vpop.f32.mrb[0].mxu0
    %v2026 = vadd.f32 0.0, %v2025
    %v2027 = vpop.f32.mrb[0].mxu0
    %v2028 = vpop.f32.mrb[0].mxu0
    %v2029 = vadd.f32 0.0, %v2028
    %v2030 = vpop.f32.mrb[0].mxu0
    %2031 = vmatprep.mubr.bf16.mxu0 0
    %2032 = vmatmul.mubr.bf16.gmra.mrb[0].mxu0 %v1836
    %v2033 = vpop.f32.mrb[0].mxu0
    %v2034 = vadd.f32 0.0, %v2033
    %v2035 = vpop.f32.mrb[0].mxu0
    %v2036 = vpop.f32.mrb[0].mxu0
    %v2037 = vadd.f32 0.0, %v2036
    %v2038 = vpop.f32.mrb[0].mxu0
    %2039 = vdwg.mxu0
    %2040 = vmatprep.subr.bf16.mxu0 0
    %2041 = vmatpush1.bf16.msra.mxu0 %v1935
    %2042 = vmatprep.subr.bf16.mxu0 0
    %2043 = vmatpush1.bf16.msra.mxu0 %v1936
    %2044 = vmatprep.subr.bf16.mxu0 0
    %2045 = vmatpush1.bf16.msra.mxu0 %v1937
    %2046 = vmatprep.subr.bf16.mxu0 0
    %2047 = vmatpush1.bf16.msra.mxu0 %v1938
    %2048 = vmatprep.subr.bf16.mxu0 0
    %2049 = vmatpush1.bf16.msra.mxu0 %v1939
    %2050 = vmatprep.subr.bf16.mxu0 0
    %2051 = vmatpush1.bf16.msra.mxu0 %v1940
    %2052 = vmatprep.subr.bf16.mxu0 0
    %2053 = vmatpush1.bf16.msra.mxu0 %v1941
    %2054 = vmatprep.subr.bf16.mxu0 0
    %2055 = vmatpush1.bf16.msra.mxu0 %v1942
    %2056 = vmatprep.subr.bf16.mxu0 0
    %2057 = vmatpush1.bf16.msra.mxu0 0
    %2058 = vmatprep.subr.bf16.mxu0 0
    %2059 = vmatpush1.bf16.msra.mxu0 0
    %2060 = vmatprep.subr.bf16.mxu0 0
    %2061 = vmatpush1.bf16.msra.mxu0 0
    %2062 = vmatprep.subr.bf16.mxu0 0
    %2063 = vmatpush1.bf16.msra.mxu0 0
    %2064 = vmatprep.subr.bf16.mxu0 0
    %2065 = vmatpush1.bf16.msra.mxu0 0
    %2066 = vmatprep.subr.bf16.mxu0 0
    %2067 = vmatpush1.bf16.msra.mxu0 0
    %2068 = vmatprep.subr.bf16.mxu0 0
    %2069 = vmatpush1.bf16.msra.mxu0 0
    %2070 = vmatprep.subr.bf16.mxu0 0
    %2071 = vmatpush1.bf16.msra.mxu0 0
    %2072 = vmatprep.mubr.bf16.mxu0 0
    %2073 = vmatmul.mubr.bf16.gmra.mrb[0].mxu0 %v378
    %v2074 = vpop.f32.mrb[0].mxu0
    %v2075 = vadd.f32 %v1978, %v2074
    %v2076 = vpop.f32.mrb[0].mxu0
    %v2077 = vpop.f32.mrb[0].mxu0
    %v2078 = vadd.f32 %v1981, %v2077
    %v2079 = vpop.f32.mrb[0].mxu0
    %2080 = vmatprep.mubr.bf16.mxu0 0
    %2081 = vmatmul.mubr.bf16.gmra.mrb[0].mxu0 %v379
    %v2082 = vpop.f32.mrb[0].mxu0
    %v2083 = vadd.f32 %v1986, %v2082
    %v2084 = vpop.f32.mrb[0].mxu0
    %v2085 = vpop.f32.mrb[0].mxu0
    %v2086 = vadd.f32 %v1989, %v2085
    %v2087 = vpop.f32.mrb[0].mxu0
    %2088 = vmatprep.mubr.bf16.mxu0 0
    %2089 = vmatmul.mubr.bf16.gmra.mrb[0].mxu0 %v380
    %v2090 = vpop.f32.mrb[0].mxu0
    %v2091 = vadd.f32 %v1994, %v2090
    %v2092 = vpop.f32.mrb[0].mxu0
    %v2093 = vpop.f32.mrb[0].mxu0
    %v2094 = vadd.f32 %v1997, %v2093
    %v2095 = vpop.f32.mrb[0].mxu0
    %2096 = vmatprep.mubr.bf16.mxu0 0
    %2097 = vmatmul.mubr.bf16.gmra.mrb[0].mxu0 %v381
    %v2098 = vpop.f32.mrb[0].mxu0
    %v2099 = vadd.f32 %v2002, %v2098
    %v2100 = vpop.f32.mrb[0].mxu0
    %v2101 = vpop.f32.mrb[0].mxu0
    %v2102 = vadd.f32 %v2005, %v2101
    %v2103 = vpop.f32.mrb[0].mxu0
    %2104 = vmatprep.mubr.bf16.mxu0 0
    %2105 = vmatmul.mubr.bf16.gmra.mrb[0].mxu0 %v382
    %v2106 = vpop.f32.mrb[0].mxu0
    %v2107 = vadd.f32 %v2010, %v2106
    %v2108 = vpop.f32.mrb[0].mxu0
    %v2109 = vpop.f32.mrb[0].mxu0
    %v2110 = vadd.f32 %v2013, %v2109
    %v2111 = vpop.f32.mrb[0].mxu0
    %2112 = vmatprep.mubr.bf16.mxu0 0
    %2113 = vmatmul.mubr.bf16.gmra.mrb[0].mxu0 %v383
    %v2114 = vpop.f32.mrb[0].mxu0
    %v2115 = vadd.f32 %v2018, %v2114
    %v2116 = vpop.f32.mrb[0].mxu0
    %v2117 = vpop.f32.mrb[0].mxu0
    %v2118 = vadd.f32 %v2021, %v2117
    %v2119 = vpop.f32.mrb[0].mxu0
    %2120 = vmatprep.mubr.bf16.mxu0 0
    %2121 = vmatmul.mubr.bf16.gmra.mrb[0].mxu0 %v384
    %v2122 = vpop.f32.mrb[0].mxu0
    %v2123 = vadd.f32 %v2026, %v2122
    %v2124 = vpop.f32.mrb[0].mxu0
    %v2125 = vpop.f32.mrb[0].mxu0
    %v2126 = vadd.f32 %v2029, %v2125
    %v2127 = vpop.f32.mrb[0].mxu0
    %2128 = vmatprep.mubr.bf16.mxu0 0
    %2129 = vmatmul.mubr.bf16.gmra.mrb[0].mxu0 %v385
    %v2130 = vpop.f32.mrb[0].mxu0
    %v2131 = vadd.f32 %v2034, %v2130
    %v2132 = vpop.f32.mrb[0].mxu0
    %v2133 = vpop.f32.mrb[0].mxu0
    %v2134 = vadd.f32 %v2037, %v2133
    %v2135 = vpop.f32.mrb[0].mxu0
    %2136 = vdwg.mxu0
    %v2137 = vadd.f32 %v2075, %v495
    %v2138 = vadd.f32 %v2078, %v495
    %v2139 = vadd.f32 %v2083, %v495
    %v2140 = vadd.f32 %v2086, %v495
    %v2141 = vadd.f32 %v2091, %v495
    %v2142 = vadd.f32 %v2094, %v495
    %v2143 = vadd.f32 %v2099, %v495
    %v2144 = vadd.f32 %v2102, %v495
    %v2145 = vadd.f32 %v2107, %v495
    %v2146 = vadd.f32 %v2110, %v495
    %v2147 = vadd.f32 %v2115, %v495
    %v2148 = vadd.f32 %v2118, %v495
    %v2149 = vadd.f32 %v2123, %v495
    %v2150 = vadd.f32 %v2126, %v495
    %v2151 = vadd.f32 %v2131, %v495
    %v2152 = vadd.f32 %v2134, %v495
    %v2153 = vxor.u32 %v2137, 2147483648
    %v2154 = vxor.u32 %v2138, 2147483648
    %v2155 = vxor.u32 %v2139, 2147483648
    %v2156 = vxor.u32 %v2140, 2147483648
    %v2157 = vxor.u32 %v2141, 2147483648
    %v2158 = vxor.u32 %v2142, 2147483648
    %v2159 = vxor.u32 %v2143, 2147483648
    %v2160 = vxor.u32 %v2144, 2147483648
    %v2161 = vxor.u32 %v2145, 2147483648
    %v2162 = vxor.u32 %v2146, 2147483648
    %v2163 = vxor.u32 %v2147, 2147483648
    %v2164 = vxor.u32 %v2148, 2147483648
    %v2165 = vxor.u32 %v2149, 2147483648
    %v2166 = vxor.u32 %v2150, 2147483648
    %v2167 = vxor.u32 %v2151, 2147483648
    %v2168 = vxor.u32 %v2152, 2147483648
    %v2169 = vmul.f32 %v2153, 1.442695
    %v2170 = vpow.pop %v2169
    %v2171 = vmul.f32 %v2154, 1.442695
    %v2172 = vpow.pop %v2171
    %v2173 = vmul.f32 %v2155, 1.442695
    %v2174 = vpow.pop %v2173
    %v2175 = vmul.f32 %v2156, 1.442695
    %v2176 = vpow.pop %v2175
    %v2177 = vmul.f32 %v2157, 1.442695
    %v2178 = vpow.pop %v2177
    %v2179 = vmul.f32 %v2158, 1.442695
    %v2180 = vpow.pop %v2179
    %v2181 = vmul.f32 %v2159, 1.442695
    %v2182 = vpow.pop %v2181
    %v2183 = vmul.f32 %v2160, 1.442695
    %v2184 = vpow.pop %v2183
    %v2185 = vmul.f32 %v2161, 1.442695
    %v2186 = vpow.pop %v2185
    %v2187 = vmul.f32 %v2162, 1.442695
    %v2188 = vpow.pop %v2187
    %v2189 = vmul.f32 %v2163, 1.442695
    %v2190 = vpow.pop %v2189
    %v2191 = vmul.f32 %v2164, 1.442695
    %v2192 = vpow.pop %v2191
    %v2193 = vmul.f32 %v2165, 1.442695
    %v2194 = vpow.pop %v2193
    %v2195 = vmul.f32 %v2166, 1.442695
    %v2196 = vpow.pop %v2195
    %v2197 = vmul.f32 %v2167, 1.442695
    %v2198 = vpow.pop %v2197
    %v2199 = vmul.f32 %v2168, 1.442695
    %v2200 = vpow.pop %v2199
    %v2201 = vadd.f32 %v2170, 1.0
    %v2202 = vadd.f32 %v2172, 1.0
    %v2203 = vadd.f32 %v2174, 1.0
    %v2204 = vadd.f32 %v2176, 1.0
    %v2205 = vadd.f32 %v2178, 1.0
    %v2206 = vadd.f32 %v2180, 1.0
    %v2207 = vadd.f32 %v2182, 1.0
    %v2208 = vadd.f32 %v2184, 1.0
    %v2209 = vadd.f32 %v2186, 1.0
    %v2210 = vadd.f32 %v2188, 1.0
    %v2211 = vadd.f32 %v2190, 1.0
    %v2212 = vadd.f32 %v2192, 1.0
    %v2213 = vadd.f32 %v2194, 1.0
    %v2214 = vadd.f32 %v2196, 1.0
    %v2215 = vadd.f32 %v2198, 1.0
    %v2216 = vadd.f32 %v2200, 1.0
    %v2217 = vrcp.pop %v2201
    %v2218 = vmul.f32 1.0, %v2217
    %v2219 = vrcp.pop %v2202
    %v2220 = vmul.f32 1.0, %v2219
    %v2221 = vrcp.pop %v2203
    %v2222 = vmul.f32 1.0, %v2221
    %v2223 = vrcp.pop %v2204
    %v2224 = vmul.f32 1.0, %v2223
    %v2225 = vrcp.pop %v2205
    %v2226 = vmul.f32 1.0, %v2225
    %v2227 = vrcp.pop %v2206
    %v2228 = vmul.f32 1.0, %v2227
    %v2229 = vrcp.pop %v2207
    %v2230 = vmul.f32 1.0, %v2229
    %v2231 = vrcp.pop %v2208
    %v2232 = vmul.f32 1.0, %v2231
    %v2233 = vrcp.pop %v2209
    %v2234 = vmul.f32 1.0, %v2233
    %v2235 = vrcp.pop %v2210
    %v2236 = vmul.f32 1.0, %v2235
    %v2237 = vrcp.pop %v2211
    %v2238 = vmul.f32 1.0, %v2237
    %v2239 = vrcp.pop %v2212
    %v2240 = vmul.f32 1.0, %v2239
    %v2241 = vrcp.pop %v2213
    %v2242 = vmul.f32 1.0, %v2241
    %v2243 = vrcp.pop %v2214
    %v2244 = vmul.f32 1.0, %v2243
    %v2245 = vrcp.pop %v2215
    %v2246 = vmul.f32 1.0, %v2245
    %v2247 = vrcp.pop %v2216
    %v2248 = vmul.f32 1.0, %v2247
    %2265 = vrot.lane.b32.xlu0 %v2137, 32
    %v2266 = vpop.permute.xlu0 %2265
    %2267 = vrot.lane.b32.xlu0 %v2138, 32
    %v2268 = vpop.permute.xlu0 %2267
    %2269 = vrot.lane.b32.xlu0 %v2139, 32
    %v2270 = vpop.permute.xlu0 %2269
    %2271 = vrot.lane.b32.xlu0 %v2140, 32
    %v2272 = vpop.permute.xlu0 %2271
    %2273 = vrot.lane.b32.xlu0 %v2141, 32
    %v2274 = vpop.permute.xlu0 %2273
    %2275 = vrot.lane.b32.xlu0 %v2142, 32
    %v2276 = vpop.permute.xlu0 %2275
    %2277 = vrot.lane.b32.xlu0 %v2143, 32
    %v2278 = vpop.permute.xlu0 %2277
    %2279 = vrot.lane.b32.xlu0 %v2144, 32
    %v2280 = vpop.permute.xlu0 %2279
    %2281 = vrot.lane.b32.xlu0 %v2145, 32
    %v2282 = vpop.permute.xlu0 %2281
    %2283 = vrot.lane.b32.xlu0 %v2146, 32
    %v2284 = vpop.permute.xlu0 %2283
    %2285 = vrot.lane.b32.xlu0 %v2147, 32
    %v2286 = vpop.permute.xlu0 %2285
    %2287 = vrot.lane.b32.xlu0 %v2148, 32
    %v2288 = vpop.permute.xlu0 %2287
    %2289 = vrot.lane.b32.xlu0 %v2149, 32
    %v2290 = vpop.permute.xlu0 %2289
    %2291 = vrot.lane.b32.xlu0 %v2150, 32
    %v2292 = vpop.permute.xlu0 %2291
    %2293 = vrot.lane.b32.xlu0 %v2151, 32
    %v2294 = vpop.permute.xlu0 %2293
    %2295 = vrot.lane.b32.xlu0 %v2152, 32
    %v2296 = vpop.permute.xlu0 %2295
    %v2313 = vmul.f32 %v2218, %v2266
    %v2314 = vmul.f32 %v2220, %v2268
    %v2315 = vmul.f32 %v2222, %v2270
    %v2316 = vmul.f32 %v2224, %v2272
    %v2317 = vmul.f32 %v2226, %v2274
    %v2318 = vmul.f32 %v2228, %v2276
    %v2319 = vmul.f32 %v2230, %v2278
    %v2320 = vmul.f32 %v2232, %v2280
    %v2321 = vmul.f32 %v2234, %v2282
    %v2322 = vmul.f32 %v2236, %v2284
    %v2323 = vmul.f32 %v2238, %v2286
    %v2324 = vmul.f32 %v2240, %v2288
    %v2325 = vmul.f32 %v2242, %v2290
    %v2326 = vmul.f32 %v2244, %v2292
    %v2327 = vmul.f32 %v2246, %v2294
    %v2328 = vmul.f32 %v2248, %v2296
    %2345 = vrot.lane.b32.xlu0 %v2313, 64
    %v2346 = vpop.permute.xlu0 %2345
    %2347 = vrot.lane.b32.xlu0 %v2314, 64
    %v2348 = vpop.permute.xlu0 %2347
    %2349 = vrot.lane.b32.xlu0 %v2315, 64
    %v2350 = vpop.permute.xlu0 %2349
    %2351 = vrot.lane.b32.xlu0 %v2316, 64
    %v2352 = vpop.permute.xlu0 %2351
    %2353 = vrot.lane.b32.xlu0 %v2317, 64
    %v2354 = vpop.permute.xlu0 %2353
    %2355 = vrot.lane.b32.xlu0 %v2318, 64
    %v2356 = vpop.permute.xlu0 %2355
    %2357 = vrot.lane.b32.xlu0 %v2319, 64
    %v2358 = vpop.permute.xlu0 %2357
    %2359 = vrot.lane.b32.xlu0 %v2320, 64
    %v2360 = vpop.permute.xlu0 %2359
    %2361 = vrot.lane.b32.xlu0 %v2321, 64
    %v2362 = vpop.permute.xlu0 %2361
    %2363 = vrot.lane.b32.xlu0 %v2322, 64
    %v2364 = vpop.permute.xlu0 %2363
    %2365 = vrot.lane.b32.xlu0 %v2323, 64
    %v2366 = vpop.permute.xlu0 %2365
    %2367 = vrot.lane.b32.xlu0 %v2324, 64
    %v2368 = vpop.permute.xlu0 %2367
    %2369 = vrot.lane.b32.xlu0 %v2325, 64
    %v2370 = vpop.permute.xlu0 %2369
    %2371 = vrot.lane.b32.xlu0 %v2326, 64
    %v2372 = vpop.permute.xlu0 %2371
    %2373 = vrot.lane.b32.xlu0 %v2327, 64
    %v2374 = vpop.permute.xlu0 %2373
    %2375 = vrot.lane.b32.xlu0 %v2328, 64
    %v2376 = vpop.permute.xlu0 %2375
    %v2393 = vadd.f32 %v2137, %v2346
    %v2394 = vadd.f32 %v2138, %v2348
    %v2395 = vadd.f32 %v2139, %v2350
    %v2396 = vadd.f32 %v2140, %v2352
    %v2397 = vadd.f32 %v2141, %v2354
    %v2398 = vadd.f32 %v2142, %v2356
    %v2399 = vadd.f32 %v2143, %v2358
    %v2400 = vadd.f32 %v2144, %v2360
    %v2401 = vadd.f32 %v2145, %v2362
    %v2402 = vadd.f32 %v2146, %v2364
    %v2403 = vadd.f32 %v2147, %v2366
    %v2404 = vadd.f32 %v2148, %v2368
    %v2405 = vadd.f32 %v2149, %v2370
    %v2406 = vadd.f32 %v2150, %v2372
    %v2407 = vadd.f32 %v2151, %v2374
    %v2408 = vadd.f32 %v2152, %v2376
    %v2409 = vtanh.pop %v2393
    %v2410 = vtanh.pop %v2394
    %v2411 = vtanh.pop %v2395
    %v2412 = vtanh.pop %v2396
    %v2413 = vtanh.pop %v2397
    %v2414 = vtanh.pop %v2398
    %v2415 = vtanh.pop %v2399
    %v2416 = vtanh.pop %v2400
    %v2417 = vtanh.pop %v2401
    %v2418 = vtanh.pop %v2402
    %v2419 = vtanh.pop %v2403
    %v2420 = vtanh.pop %v2404
    %v2421 = vtanh.pop %v2405
    %v2422 = vtanh.pop %v2406
    %v2423 = vtanh.pop %v2407
    %v2424 = vtanh.pop %v2408
    %v2425 = vsub.f32 1.0, %v2218
    %v2426 = vsub.f32 1.0, %v2220
    %v2427 = vsub.f32 1.0, %v2222
    %v2428 = vsub.f32 1.0, %v2224
    %v2429 = vsub.f32 1.0, %v2226
    %v2430 = vsub.f32 1.0, %v2228
    %v2431 = vsub.f32 1.0, %v2230
    %v2432 = vsub.f32 1.0, %v2232
    %v2433 = vsub.f32 1.0, %v2234
    %v2434 = vsub.f32 1.0, %v2236
    %v2435 = vsub.f32 1.0, %v2238
    %v2436 = vsub.f32 1.0, %v2240
    %v2437 = vsub.f32 1.0, %v2242
    %v2438 = vsub.f32 1.0, %v2244
    %v2439 = vsub.f32 1.0, %v2246
    %v2440 = vsub.f32 1.0, %v2248
    %2457 = vrot.lane.b32.xlu0 %v2409, 96
    %v2458 = vpop.permute.xlu0 %2457
    %2459 = vrot.lane.b32.xlu0 %v2410, 96
    %v2460 = vpop.permute.xlu0 %2459
    %2461 = vrot.lane.b32.xlu0 %v2411, 96
    %v2462 = vpop.permute.xlu0 %2461
    %2463 = vrot.lane.b32.xlu0 %v2412, 96
    %v2464 = vpop.permute.xlu0 %2463
    %2465 = vrot.lane.b32.xlu0 %v2413, 96
    %v2466 = vpop.permute.xlu0 %2465
    %2467 = vrot.lane.b32.xlu0 %v2414, 96
    %v2468 = vpop.permute.xlu0 %2467
    %2469 = vrot.lane.b32.xlu0 %v2415, 96
    %v2470 = vpop.permute.xlu0 %2469
    %2471 = vrot.lane.b32.xlu0 %v2416, 96
    %v2472 = vpop.permute.xlu0 %2471
    %2473 = vrot.lane.b32.xlu0 %v2417, 96
    %v2474 = vpop.permute.xlu0 %2473
    %2475 = vrot.lane.b32.xlu0 %v2418, 96
    %v2476 = vpop.permute.xlu0 %2475
    %2477 = vrot.lane.b32.xlu0 %v2419, 96
    %v2478 = vpop.permute.xlu0 %2477
    %2479 = vrot.lane.b32.xlu0 %v2420, 96
    %v2480 = vpop.permute.xlu0 %2479
    %2481 = vrot.lane.b32.xlu0 %v2421, 96
    %v2482 = vpop.permute.xlu0 %2481
    %2483 = vrot.lane.b32.xlu0 %v2422, 96
    %v2484 = vpop.permute.xlu0 %2483
    %2485 = vrot.lane.b32.xlu0 %v2423, 96
    %v2486 = vpop.permute.xlu0 %2485
    %2487 = vrot.lane.b32.xlu0 %v2424, 96
    %v2488 = vpop.permute.xlu0 %2487
    %v2505 = vmul.f32 %v2425, %v2458
    %v2506 = vmul.f32 %v2426, %v2460
    %v2507 = vmul.f32 %v2427, %v2462
    %v2508 = vmul.f32 %v2428, %v2464
    %v2509 = vmul.f32 %v2429, %v2466
    %v2510 = vmul.f32 %v2430, %v2468
    %v2511 = vmul.f32 %v2431, %v2470
    %v2512 = vmul.f32 %v2432, %v2472
    %v2513 = vmul.f32 %v2433, %v2474
    %v2514 = vmul.f32 %v2434, %v2476
    %v2515 = vmul.f32 %v2435, %v2478
    %v2516 = vmul.f32 %v2436, %v2480
    %v2517 = vmul.f32 %v2437, %v2482
    %v2518 = vmul.f32 %v2438, %v2484
    %v2519 = vmul.f32 %v2439, %v2486
    %v2520 = vmul.f32 %v2440, %v2488
    %v2521 = vmul.f32 %v2218, %v1749
    %v2522 = vmul.f32 %v2220, %v1750
    %v2523 = vmul.f32 %v2222, %v1751
    %v2524 = vmul.f32 %v2224, %v1752
    %v2525 = vmul.f32 %v2226, %v1753
    %v2526 = vmul.f32 %v2228, %v1754
    %v2527 = vmul.f32 %v2230, %v1755
    %v2528 = vmul.f32 %v2232, %v1756
    %v2529 = vmul.f32 %v2234, %v1757
    %v2530 = vmul.f32 %v2236, %v1758
    %v2531 = vmul.f32 %v2238, %v1759
    %v2532 = vmul.f32 %v2240, %v1760
    %v2533 = vmul.f32 %v2242, %v1761
    %v2534 = vmul.f32 %v2244, %v1762
    %v2535 = vmul.f32 %v2246, %v1763
    %v2536 = vmul.f32 %v2248, %v1764
    %v2537 = vadd.f32 %v2505, %v2521
    %v2538 = vadd.f32 %v2506, %v2522
    %v2539 = vadd.f32 %v2507, %v2523
    %v2540 = vadd.f32 %v2508, %v2524
    %v2541 = vadd.f32 %v2509, %v2525
    %v2542 = vadd.f32 %v2510, %v2526
    %v2543 = vadd.f32 %v2511, %v2527
    %v2544 = vadd.f32 %v2512, %v2528
    %v2545 = vadd.f32 %v2513, %v2529
    %v2546 = vadd.f32 %v2514, %v2530
    %v2547 = vadd.f32 %v2515, %v2531
    %v2548 = vadd.f32 %v2516, %v2532
    %v2549 = vadd.f32 %v2517, %v2533
    %v2550 = vadd.f32 %v2518, %v2534
    %v2551 = vadd.f32 %v2519, %v2535
    %v2552 = vadd.f32 %v2520, %v2536
    %v2553 = vpack.c.bf16 %v2538, %v2537
    %v2554 = vpack.c.bf16 %v2540, %v2539
    %v2555 = vpack.c.bf16 %v2542, %v2541
    %v2556 = vpack.c.bf16 %v2544, %v2543
    %v2557 = vpack.c.bf16 %v2546, %v2545
    %v2558 = vpack.c.bf16 %v2548, %v2547
    %v2559 = vpack.c.bf16 %v2550, %v2549
    %v2560 = vpack.c.bf16 %v2552, %v2551
    %v2561 = vld [vmem:[%s5] sm:$0xf]
    %v2562 = vld [vmem:[%s5 + $0x4] sm:$0xf]
    %v2563 = vld [vmem:[%s5 + $0x8] sm:$0xf]
    %v2564 = vld [vmem:[%s5 + $0xc] sm:$0xf]
    %v2565 = vld [vmem:[%s8] sm:$0xf]
    %v2566 = vld [vmem:[%s8 + $0x4] sm:$0xf]
    %v2567 = vld [vmem:[%s8 + $0x8] sm:$0xf]
    %v2568 = vld [vmem:[%s8 + $0xc] sm:$0xf]
    %v2569 = vld [vmem:[%s8 + $0x10] sm:$0xf]
    %v2570 = vld [vmem:[%s8 + $0x14] sm:$0xf]
    %v2571 = vld [vmem:[%s8 + $0x18] sm:$0xf]
    %v2572 = vld [vmem:[%s8 + $0x1c] sm:$0xf]
    %v2573 = vld [vmem:[%s8 + $0x20] sm:$0xf]
    %v2574 = vld [vmem:[%s8 + $0x24] sm:$0xf]
    %v2575 = vld [vmem:[%s8 + $0x28] sm:$0xf]
    %v2576 = vld [vmem:[%s8 + $0x2c] sm:$0xf]
    %v2577 = vld [vmem:[%s8 + $0x30] sm:$0xf]
    %v2578 = vld [vmem:[%s8 + $0x34] sm:$0xf]
    %v2579 = vld [vmem:[%s8 + $0x38] sm:$0xf]
    %v2580 = vld [vmem:[%s8 + $0x3c] sm:$0xf]
    %v2581 = vld [vmem:[%s6] sm:$0xf]
    %v2582 = vld [vmem:[%s6 + $0x4] sm:$0xf]
    %v2583 = vld [vmem:[%s6 + $0x8] sm:$0xf]
    %v2584 = vld [vmem:[%s6 + $0xc] sm:$0xf]
    %v2601 = vunpack.c.l.b16 %v2565
    %v2602 = vunpack.c.l.b16 %v2566
    %v2603 = vunpack.c.l.b16 %v2567
    %v2604 = vunpack.c.l.b16 %v2568
    %v2605 = vunpack.c.l.b16 %v2569
    %v2606 = vunpack.c.l.b16 %v2570
    %v2607 = vunpack.c.l.b16 %v2571
    %v2608 = vunpack.c.l.b16 %v2572
    %v2609 = vunpack.c.l.b16 %v2573
    %v2610 = vunpack.c.l.b16 %v2574
    %v2611 = vunpack.c.l.b16 %v2575
    %v2612 = vunpack.c.l.b16 %v2576
    %v2613 = vunpack.c.l.b16 %v2577
    %v2614 = vunpack.c.l.b16 %v2578
    %v2615 = vunpack.c.l.b16 %v2579
    %v2616 = vunpack.c.l.b16 %v2580
    %v2617 = vpack.c.b16 %v2602, %v2601
    %v2618 = vpack.c.b16 %v2604, %v2603
    %v2619 = vpack.c.b16 %v2606, %v2605
    %v2620 = vpack.c.b16 %v2608, %v2607
    %v2621 = vpack.c.b16 %v2610, %v2609
    %v2622 = vpack.c.b16 %v2612, %v2611
    %v2623 = vpack.c.b16 %v2614, %v2613
    %v2624 = vpack.c.b16 %v2616, %v2615
    %v2629 = vunpack.c.l.b16 %v2581
    %v2630 = vunpack.c.l.b16 %v2582
    %v2631 = vunpack.c.l.b16 %v2583
    %v2632 = vunpack.c.l.b16 %v2584
    %v2633 = vpack.c.b16 %v2630, %v2629
    %v2634 = vpack.c.b16 %v2632, %v2631
    %v2638 = vsel %vm107, %v2617, 0
    %v2641 = vsel %vm107, %v2618, 0
    %v2644 = vsel %vm107, %v2619, 0
    %v2647 = vsel %vm107, %v2620, 0
    %v2650 = vsel %vm107, %v2621, 0
    %v2653 = vsel %vm107, %v2622, 0
    %v2656 = vsel %vm107, %v2623, 0
    %v2659 = vsel %vm107, %v2624, 0
    %2661 = vmatprep.subr.bf16.mxu0 0
    %2662 = vmatpush1.bf16.msra.mxu0 %v2633
    %2663 = vmatprep.subr.bf16.mxu0 0
    %2664 = vmatpush1.bf16.msra.mxu0 %v2634
    %2665 = vmatprep.subr.bf16.mxu0 0
    %2666 = vmatpush1.bf16.msra.mxu0 0
    %2667 = vmatprep.subr.bf16.mxu0 0
    %2668 = vmatpush1.bf16.msra.mxu0 0
    %2669 = vmatprep.subr.bf16.mxu0 0
    %2670 = vmatpush1.bf16.msra.mxu0 0
    %2671 = vmatprep.subr.bf16.mxu0 0
    %2672 = vmatpush1.bf16.msra.mxu0 0
    %2673 = vmatprep.subr.bf16.mxu0 0
    %2674 = vmatpush1.bf16.msra.mxu0 0
    %2675 = vmatprep.subr.bf16.mxu0 0
    %2676 = vmatpush1.bf16.msra.mxu0 0
    %2677 = vmatprep.subr.bf16.mxu0 0
    %2678 = vmatpush1.bf16.msra.mxu0 0
    %2679 = vmatprep.subr.bf16.mxu0 0
    %2680 = vmatpush1.bf16.msra.mxu0 0
    %2681 = vmatprep.subr.bf16.mxu0 0
    %2682 = vmatpush1.bf16.msra.mxu0 0
    %2683 = vmatprep.subr.bf16.mxu0 0
    %2684 = vmatpush1.bf16.msra.mxu0 0
    %2685 = vmatprep.subr.bf16.mxu0 0
    %2686 = vmatpush1.bf16.msra.mxu0 0
    %2687 = vmatprep.subr.bf16.mxu0 0
    %2688 = vmatpush1.bf16.msra.mxu0 0
    %2689 = vmatprep.subr.bf16.mxu0 0
    %2690 = vmatpush1.bf16.msra.mxu0 0
    %2691 = vmatprep.subr.bf16.mxu0 0
    %2692 = vmatpush1.bf16.msra.mxu0 0
    %2693 = vmatprep.mubr.bf16.mxu0 0
    %2694 = vmatmul.mubr.bf16.gmra.mrb[0].mxu0 %v2638
    %v2695 = vpop.f32.mrb[0].mxu0
    %v2696 = vadd.f32 0.0, %v2695
    %v2697 = vpop.f32.mrb[0].mxu0
    %v2698 = vpop.f32.mrb[0].mxu0
    %v2699 = vadd.f32 0.0, %v2698
    %v2700 = vpop.f32.mrb[0].mxu0
    %2701 = vmatprep.mubr.bf16.mxu0 0
    %2702 = vmatmul.mubr.bf16.gmra.mrb[0].mxu0 %v2641
    %v2703 = vpop.f32.mrb[0].mxu0
    %v2704 = vadd.f32 0.0, %v2703
    %v2705 = vpop.f32.mrb[0].mxu0
    %v2706 = vpop.f32.mrb[0].mxu0
    %v2707 = vadd.f32 0.0, %v2706
    %v2708 = vpop.f32.mrb[0].mxu0
    %2709 = vmatprep.mubr.bf16.mxu0 0
    %2710 = vmatmul.mubr.bf16.gmra.mrb[0].mxu0 %v2644
    %v2711 = vpop.f32.mrb[0].mxu0
    %v2712 = vadd.f32 0.0, %v2711
    %v2713 = vpop.f32.mrb[0].mxu0
    %v2714 = vpop.f32.mrb[0].mxu0
    %v2715 = vadd.f32 0.0, %v2714
    %v2716 = vpop.f32.mrb[0].mxu0
    %2717 = vmatprep.mubr.bf16.mxu0 0
    %2718 = vmatmul.mubr.bf16.gmra.mrb[0].mxu0 %v2647
    %v2719 = vpop.f32.mrb[0].mxu0
    %v2720 = vadd.f32 0.0, %v2719
    %v2721 = vpop.f32.mrb[0].mxu0
    %v2722 = vpop.f32.mrb[0].mxu0
    %v2723 = vadd.f32 0.0, %v2722
    %v2724 = vpop.f32.mrb[0].mxu0
    %2725 = vmatprep.mubr.bf16.mxu0 0
    %2726 = vmatmul.mubr.bf16.gmra.mrb[0].mxu0 %v2650
    %v2727 = vpop.f32.mrb[0].mxu0
    %v2728 = vadd.f32 0.0, %v2727
    %v2729 = vpop.f32.mrb[0].mxu0
    %v2730 = vpop.f32.mrb[0].mxu0
    %v2731 = vadd.f32 0.0, %v2730
    %v2732 = vpop.f32.mrb[0].mxu0
    %2733 = vmatprep.mubr.bf16.mxu0 0
    %2734 = vmatmul.mubr.bf16.gmra.mrb[0].mxu0 %v2653
    %v2735 = vpop.f32.mrb[0].mxu0
    %v2736 = vadd.f32 0.0, %v2735
    %v2737 = vpop.f32.mrb[0].mxu0
    %v2738 = vpop.f32.mrb[0].mxu0
    %v2739 = vadd.f32 0.0, %v2738
    %v2740 = vpop.f32.mrb[0].mxu0
    %2741 = vmatprep.mubr.bf16.mxu0 0
    %2742 = vmatmul.mubr.bf16.gmra.mrb[0].mxu0 %v2656
    %v2743 = vpop.f32.mrb[0].mxu0
    %v2744 = vadd.f32 0.0, %v2743
    %v2745 = vpop.f32.mrb[0].mxu0
    %v2746 = vpop.f32.mrb[0].mxu0
    %v2747 = vadd.f32 0.0, %v2746
    %v2748 = vpop.f32.mrb[0].mxu0
    %2749 = vmatprep.mubr.bf16.mxu0 0
    %2750 = vmatmul.mubr.bf16.gmra.mrb[0].mxu0 %v2659
    %v2751 = vpop.f32.mrb[0].mxu0
    %v2752 = vadd.f32 0.0, %v2751
    %v2753 = vpop.f32.mrb[0].mxu0
    %v2754 = vpop.f32.mrb[0].mxu0
    %v2755 = vadd.f32 0.0, %v2754
    %v2756 = vpop.f32.mrb[0].mxu0
    %2757 = vdwg.mxu0
    %2766 = vrot.lane.b32.xlu0 %v2553, 96
    %v2767 = vpop.permute.xlu0 %2766
    %2768 = vrot.lane.b32.xlu0 %v2554, 96
    %v2769 = vpop.permute.xlu0 %2768
    %2770 = vrot.lane.b32.xlu0 %v2555, 96
    %v2771 = vpop.permute.xlu0 %2770
    %2772 = vrot.lane.b32.xlu0 %v2556, 96
    %v2773 = vpop.permute.xlu0 %2772
    %2774 = vrot.lane.b32.xlu0 %v2557, 96
    %v2775 = vpop.permute.xlu0 %2774
    %2776 = vrot.lane.b32.xlu0 %v2558, 96
    %v2777 = vpop.permute.xlu0 %2776
    %2778 = vrot.lane.b32.xlu0 %v2559, 96
    %v2779 = vpop.permute.xlu0 %2778
    %2780 = vrot.lane.b32.xlu0 %v2560, 96
    %v2781 = vpop.permute.xlu0 %2780
    %v2786 = vunpack.c.l.b16 %v2561
    %v2787 = vunpack.c.l.b16 %v2562
    %v2788 = vunpack.c.l.b16 %v2563
    %v2789 = vunpack.c.l.b16 %v2564
    %v2790 = vpack.c.b16 %v2787, %v2786
    %v2791 = vpack.c.b16 %v2789, %v2788
    %v2795 = vsel %vm107, %v2767, 0
    %v2798 = vsel %vm107, %v2769, 0
    %v2801 = vsel %vm107, %v2771, 0
    %v2804 = vsel %vm107, %v2773, 0
    %v2807 = vsel %vm107, %v2775, 0
    %v2810 = vsel %vm107, %v2777, 0
    %v2813 = vsel %vm107, %v2779, 0
    %v2816 = vsel %vm107, %v2781, 0
    %2818 = vmatprep.subr.bf16.mxu0 0
    %2819 = vmatpush1.bf16.msra.mxu0 %v2790
    %2820 = vmatprep.subr.bf16.mxu0 0
    %2821 = vmatpush1.bf16.msra.mxu0 %v2791
    %2822 = vmatprep.subr.bf16.mxu0 0
    %2823 = vmatpush1.bf16.msra.mxu0 0
    %2824 = vmatprep.subr.bf16.mxu0 0
    %2825 = vmatpush1.bf16.msra.mxu0 0
    %2826 = vmatprep.subr.bf16.mxu0 0
    %2827 = vmatpush1.bf16.msra.mxu0 0
    %2828 = vmatprep.subr.bf16.mxu0 0
    %2829 = vmatpush1.bf16.msra.mxu0 0
    %2830 = vmatprep.subr.bf16.mxu0 0
    %2831 = vmatpush1.bf16.msra.mxu0 0
    %2832 = vmatprep.subr.bf16.mxu0 0
    %2833 = vmatpush1.bf16.msra.mxu0 0
    %2834 = vmatprep.subr.bf16.mxu0 0
    %2835 = vmatpush1.bf16.msra.mxu0 0
    %2836 = vmatprep.subr.bf16.mxu0 0
    %2837 = vmatpush1.bf16.msra.mxu0 0
    %2838 = vmatprep.subr.bf16.mxu0 0
    %2839 = vmatpush1.bf16.msra.mxu0 0
    %2840 = vmatprep.subr.bf16.mxu0 0
    %2841 = vmatpush1.bf16.msra.mxu0 0
    %2842 = vmatprep.subr.bf16.mxu0 0
    %2843 = vmatpush1.bf16.msra.mxu0 0
    %2844 = vmatprep.subr.bf16.mxu0 0
    %2845 = vmatpush1.bf16.msra.mxu0 0
    %2846 = vmatprep.subr.bf16.mxu0 0
    %2847 = vmatpush1.bf16.msra.mxu0 0
    %2848 = vmatprep.subr.bf16.mxu0 0
    %2849 = vmatpush1.bf16.msra.mxu0 0
    %2850 = vmatprep.mubr.bf16.mxu0 0
    %2851 = vmatmul.mubr.bf16.gmra.mrb[0].mxu0 %v2795
    %v2852 = vpop.f32.mrb[0].mxu0
    %v2853 = vadd.f32 %v2696, %v2852
    %v2854 = vpop.f32.mrb[0].mxu0
    %v2855 = vpop.f32.mrb[0].mxu0
    %v2856 = vadd.f32 %v2699, %v2855
    %v2857 = vpop.f32.mrb[0].mxu0
    %2858 = vmatprep.mubr.bf16.mxu0 0
    %2859 = vmatmul.mubr.bf16.gmra.mrb[0].mxu0 %v2798
    %v2860 = vpop.f32.mrb[0].mxu0
    %v2861 = vadd.f32 %v2704, %v2860
    %v2862 = vpop.f32.mrb[0].mxu0
    %v2863 = vpop.f32.mrb[0].mxu0
    %v2864 = vadd.f32 %v2707, %v2863
    %v2865 = vpop.f32.mrb[0].mxu0
    %2866 = vmatprep.mubr.bf16.mxu0 0
    %2867 = vmatmul.mubr.bf16.gmra.mrb[0].mxu0 %v2801
    %v2868 = vpop.f32.mrb[0].mxu0
    %v2869 = vadd.f32 %v2712, %v2868
    %v2870 = vpop.f32.mrb[0].mxu0
    %v2871 = vpop.f32.mrb[0].mxu0
    %v2872 = vadd.f32 %v2715, %v2871
    %v2873 = vpop.f32.mrb[0].mxu0
    %2874 = vmatprep.mubr.bf16.mxu0 0
    %2875 = vmatmul.mubr.bf16.gmra.mrb[0].mxu0 %v2804
    %v2876 = vpop.f32.mrb[0].mxu0
    %v2877 = vadd.f32 %v2720, %v2876
    %v2878 = vpop.f32.mrb[0].mxu0
    %v2879 = vpop.f32.mrb[0].mxu0
    %v2880 = vadd.f32 %v2723, %v2879
    %v2881 = vpop.f32.mrb[0].mxu0
    %2882 = vmatprep.mubr.bf16.mxu0 0
    %2883 = vmatmul.mubr.bf16.gmra.mrb[0].mxu0 %v2807
    %v2884 = vpop.f32.mrb[0].mxu0
    %v2885 = vadd.f32 %v2728, %v2884
    %v2886 = vpop.f32.mrb[0].mxu0
    %v2887 = vpop.f32.mrb[0].mxu0
    %v2888 = vadd.f32 %v2731, %v2887
    %v2889 = vpop.f32.mrb[0].mxu0
    %2890 = vmatprep.mubr.bf16.mxu0 0
    %2891 = vmatmul.mubr.bf16.gmra.mrb[0].mxu0 %v2810
    %v2892 = vpop.f32.mrb[0].mxu0
    %v2893 = vadd.f32 %v2736, %v2892
    %v2894 = vpop.f32.mrb[0].mxu0
    %v2895 = vpop.f32.mrb[0].mxu0
    %v2896 = vadd.f32 %v2739, %v2895
    %v2897 = vpop.f32.mrb[0].mxu0
    %2898 = vmatprep.mubr.bf16.mxu0 0
    %2899 = vmatmul.mubr.bf16.gmra.mrb[0].mxu0 %v2813
    %v2900 = vpop.f32.mrb[0].mxu0
    %v2901 = vadd.f32 %v2744, %v2900
    %v2902 = vpop.f32.mrb[0].mxu0
    %v2903 = vpop.f32.mrb[0].mxu0
    %v2904 = vadd.f32 %v2747, %v2903
    %v2905 = vpop.f32.mrb[0].mxu0
    %2906 = vmatprep.mubr.bf16.mxu0 0
    %2907 = vmatmul.mubr.bf16.gmra.mrb[0].mxu0 %v2816
    %v2908 = vpop.f32.mrb[0].mxu0
    %v2909 = vadd.f32 %v2752, %v2908
    %v2910 = vpop.f32.mrb[0].mxu0
    %v2911 = vpop.f32.mrb[0].mxu0
    %v2912 = vadd.f32 %v2755, %v2911
    %v2913 = vpop.f32.mrb[0].mxu0
    %2914 = vdwg.mxu0
    %v2915 = vld [vmem:[%s7] sm:$0x1]
    %v2917 = vlaneseq
    %v2918 = vshrl.u32 %v2917, 7
    %v2919 = vsub.s32 0, %v2918
    %v2920 = vrot.slane %v2915, %v2919
    %v2922 = vadd.f32 %v2853, %v2920
    %v2923 = vadd.f32 %v2856, %v2920
    %v2924 = vadd.f32 %v2861, %v2920
    %v2925 = vadd.f32 %v2864, %v2920
    %v2926 = vadd.f32 %v2869, %v2920
    %v2927 = vadd.f32 %v2872, %v2920
    %v2928 = vadd.f32 %v2877, %v2920
    %v2929 = vadd.f32 %v2880, %v2920
    %v2930 = vadd.f32 %v2885, %v2920
    %v2931 = vadd.f32 %v2888, %v2920
    %v2932 = vadd.f32 %v2893, %v2920
    %v2933 = vadd.f32 %v2896, %v2920
    %v2934 = vadd.f32 %v2901, %v2920
    %v2935 = vadd.f32 %v2904, %v2920
    %v2936 = vadd.f32 %v2909, %v2920
    %v2937 = vadd.f32 %v2912, %v2920
    %v2938 = vxor.u32 %v2922, 2147483648
    %v2939 = vxor.u32 %v2923, 2147483648
    %v2940 = vxor.u32 %v2924, 2147483648
    %v2941 = vxor.u32 %v2925, 2147483648
    %v2942 = vxor.u32 %v2926, 2147483648
    %v2943 = vxor.u32 %v2927, 2147483648
    %v2944 = vxor.u32 %v2928, 2147483648
    %v2945 = vxor.u32 %v2929, 2147483648
    %v2946 = vxor.u32 %v2930, 2147483648
    %v2947 = vxor.u32 %v2931, 2147483648
    %v2948 = vxor.u32 %v2932, 2147483648
    %v2949 = vxor.u32 %v2933, 2147483648
    %v2950 = vxor.u32 %v2934, 2147483648
    %v2951 = vxor.u32 %v2935, 2147483648
    %v2952 = vxor.u32 %v2936, 2147483648
    %v2953 = vxor.u32 %v2937, 2147483648
    %v2954 = vmul.f32 %v2938, 1.442695
    %v2955 = vpow.pop %v2954
    %v2956 = vmul.f32 %v2939, 1.442695
    %v2957 = vpow.pop %v2956
    %v2958 = vmul.f32 %v2940, 1.442695
    %v2959 = vpow.pop %v2958
    %v2960 = vmul.f32 %v2941, 1.442695
    %v2961 = vpow.pop %v2960
    %v2962 = vmul.f32 %v2942, 1.442695
    %v2963 = vpow.pop %v2962
    %v2964 = vmul.f32 %v2943, 1.442695
    %v2965 = vpow.pop %v2964
    %v2966 = vmul.f32 %v2944, 1.442695
    %v2967 = vpow.pop %v2966
    %v2968 = vmul.f32 %v2945, 1.442695
    %v2969 = vpow.pop %v2968
    %v2970 = vmul.f32 %v2946, 1.442695
    %v2971 = vpow.pop %v2970
    %v2972 = vmul.f32 %v2947, 1.442695
    %v2973 = vpow.pop %v2972
    %v2974 = vmul.f32 %v2948, 1.442695
    %v2975 = vpow.pop %v2974
    %v2976 = vmul.f32 %v2949, 1.442695
    %v2977 = vpow.pop %v2976
    %v2978 = vmul.f32 %v2950, 1.442695
    %v2979 = vpow.pop %v2978
    %v2980 = vmul.f32 %v2951, 1.442695
    %v2981 = vpow.pop %v2980
    %v2982 = vmul.f32 %v2952, 1.442695
    %v2983 = vpow.pop %v2982
    %v2984 = vmul.f32 %v2953, 1.442695
    %v2985 = vpow.pop %v2984
    %v2986 = vadd.f32 %v2955, 1.0
    %v2987 = vadd.f32 %v2957, 1.0
    %v2988 = vadd.f32 %v2959, 1.0
    %v2989 = vadd.f32 %v2961, 1.0
    %v2990 = vadd.f32 %v2963, 1.0
    %v2991 = vadd.f32 %v2965, 1.0
    %v2992 = vadd.f32 %v2967, 1.0
    %v2993 = vadd.f32 %v2969, 1.0
    %v2994 = vadd.f32 %v2971, 1.0
    %v2995 = vadd.f32 %v2973, 1.0
    %v2996 = vadd.f32 %v2975, 1.0
    %v2997 = vadd.f32 %v2977, 1.0
    %v2998 = vadd.f32 %v2979, 1.0
    %v2999 = vadd.f32 %v2981, 1.0
    %v3000 = vadd.f32 %v2983, 1.0
    %v3001 = vadd.f32 %v2985, 1.0
    %v3002 = vrcp.pop %v2986
    %v3003 = vmul.f32 1.0, %v3002
    %v3004 = vrcp.pop %v2987
    %v3005 = vmul.f32 1.0, %v3004
    %v3006 = vrcp.pop %v2988
    %v3007 = vmul.f32 1.0, %v3006
    %v3008 = vrcp.pop %v2989
    %v3009 = vmul.f32 1.0, %v3008
    %v3010 = vrcp.pop %v2990
    %v3011 = vmul.f32 1.0, %v3010
    %v3012 = vrcp.pop %v2991
    %v3013 = vmul.f32 1.0, %v3012
    %v3014 = vrcp.pop %v2992
    %v3015 = vmul.f32 1.0, %v3014
    %v3016 = vrcp.pop %v2993
    %v3017 = vmul.f32 1.0, %v3016
    %v3018 = vrcp.pop %v2994
    %v3019 = vmul.f32 1.0, %v3018
    %v3020 = vrcp.pop %v2995
    %v3021 = vmul.f32 1.0, %v3020
    %v3022 = vrcp.pop %v2996
    %v3023 = vmul.f32 1.0, %v3022
    %v3024 = vrcp.pop %v2997
    %v3025 = vmul.f32 1.0, %v3024
    %v3026 = vrcp.pop %v2998
    %v3027 = vmul.f32 1.0, %v3026
    %v3028 = vrcp.pop %v2999
    %v3029 = vmul.f32 1.0, %v3028
    %v3030 = vrcp.pop %v3000
    %v3031 = vmul.f32 1.0, %v3030
    %v3032 = vrcp.pop %v3001
    %v3033 = vmul.f32 1.0, %v3032
    %v3034 = vtanh.pop %v2922
    %v3035 = vtanh.pop %v2923
    %v3036 = vtanh.pop %v2924
    %v3037 = vtanh.pop %v2925
    %v3038 = vtanh.pop %v2926
    %v3039 = vtanh.pop %v2927
    %v3040 = vtanh.pop %v2928
    %v3041 = vtanh.pop %v2929
    %v3042 = vtanh.pop %v2930
    %v3043 = vtanh.pop %v2931
    %v3044 = vtanh.pop %v2932
    %v3045 = vtanh.pop %v2933
    %v3046 = vtanh.pop %v2934
    %v3047 = vtanh.pop %v2935
    %v3048 = vtanh.pop %v2936
    %v3049 = vtanh.pop %v2937
    %v3050 = vld [vmem:[%s9] sm:$0xff]
    %v3051 = vld [vmem:[%s9 + $0x8] sm:$0xff]
    %v3052 = vld [vmem:[%s9 + $0x10] sm:$0xff]
    %v3053 = vld [vmem:[%s9 + $0x18] sm:$0xff]
    %v3054 = vld [vmem:[%s9 + $0x20] sm:$0xff]
    %v3055 = vld [vmem:[%s9 + $0x28] sm:$0xff]
    %v3056 = vld [vmem:[%s9 + $0x30] sm:$0xff]
    %v3057 = vld [vmem:[%s9 + $0x38] sm:$0xff]
    %v3058 = vld [vmem:[%s9 + $0x40] sm:$0xff]
    %v3059 = vld [vmem:[%s9 + $0x48] sm:$0xff]
    %v3060 = vld [vmem:[%s9 + $0x50] sm:$0xff]
    %v3061 = vld [vmem:[%s9 + $0x58] sm:$0xff]
    %v3062 = vld [vmem:[%s9 + $0x60] sm:$0xff]
    %v3063 = vld [vmem:[%s9 + $0x68] sm:$0xff]
    %v3064 = vld [vmem:[%s9 + $0x70] sm:$0xff]
    %v3065 = vld [vmem:[%s9 + $0x78] sm:$0xff]
    %3082 = vrot.lane.b32.xlu0 %v3050, 32
    %v3083 = vpop.permute.xlu0 %3082
    %3084 = vrot.lane.b32.xlu0 %v3051, 32
    %v3085 = vpop.permute.xlu0 %3084
    %3086 = vrot.lane.b32.xlu0 %v3052, 32
    %v3087 = vpop.permute.xlu0 %3086
    %3088 = vrot.lane.b32.xlu0 %v3053, 32
    %v3089 = vpop.permute.xlu0 %3088
    %3090 = vrot.lane.b32.xlu0 %v3054, 32
    %v3091 = vpop.permute.xlu0 %3090
    %3092 = vrot.lane.b32.xlu0 %v3055, 32
    %v3093 = vpop.permute.xlu0 %3092
    %3094 = vrot.lane.b32.xlu0 %v3056, 32
    %v3095 = vpop.permute.xlu0 %3094
    %3096 = vrot.lane.b32.xlu0 %v3057, 32
    %v3097 = vpop.permute.xlu0 %3096
    %3098 = vrot.lane.b32.xlu0 %v3058, 32
    %v3099 = vpop.permute.xlu0 %3098
    %3100 = vrot.lane.b32.xlu0 %v3059, 32
    %v3101 = vpop.permute.xlu0 %3100
    %3102 = vrot.lane.b32.xlu0 %v3060, 32
    %v3103 = vpop.permute.xlu0 %3102
    %3104 = vrot.lane.b32.xlu0 %v3061, 32
    %v3105 = vpop.permute.xlu0 %3104
    %3106 = vrot.lane.b32.xlu0 %v3062, 32
    %v3107 = vpop.permute.xlu0 %3106
    %3108 = vrot.lane.b32.xlu0 %v3063, 32
    %v3109 = vpop.permute.xlu0 %3108
    %3110 = vrot.lane.b32.xlu0 %v3064, 32
    %v3111 = vpop.permute.xlu0 %3110
    %3112 = vrot.lane.b32.xlu0 %v3065, 32
    %v3113 = vpop.permute.xlu0 %3112
    %v3130 = vmul.f32 %v3003, %v3083
    %v3131 = vmul.f32 %v3005, %v3085
    %v3132 = vmul.f32 %v3007, %v3087
    %v3133 = vmul.f32 %v3009, %v3089
    %v3134 = vmul.f32 %v3011, %v3091
    %v3135 = vmul.f32 %v3013, %v3093
    %v3136 = vmul.f32 %v3015, %v3095
    %v3137 = vmul.f32 %v3017, %v3097
    %v3138 = vmul.f32 %v3019, %v3099
    %v3139 = vmul.f32 %v3021, %v3101
    %v3140 = vmul.f32 %v3023, %v3103
    %v3141 = vmul.f32 %v3025, %v3105
    %v3142 = vmul.f32 %v3027, %v3107
    %v3143 = vmul.f32 %v3029, %v3109
    %v3144 = vmul.f32 %v3031, %v3111
    %v3145 = vmul.f32 %v3033, %v3113
    %3162 = vrot.lane.b32.xlu0 %v3034, 64
    %v3163 = vpop.permute.xlu0 %3162
    %3164 = vrot.lane.b32.xlu0 %v3035, 64
    %v3165 = vpop.permute.xlu0 %3164
    %3166 = vrot.lane.b32.xlu0 %v3036, 64
    %v3167 = vpop.permute.xlu0 %3166
    %3168 = vrot.lane.b32.xlu0 %v3037, 64
    %v3169 = vpop.permute.xlu0 %3168
    %3170 = vrot.lane.b32.xlu0 %v3038, 64
    %v3171 = vpop.permute.xlu0 %3170
    %3172 = vrot.lane.b32.xlu0 %v3039, 64
    %v3173 = vpop.permute.xlu0 %3172
    %3174 = vrot.lane.b32.xlu0 %v3040, 64
    %v3175 = vpop.permute.xlu0 %3174
    %3176 = vrot.lane.b32.xlu0 %v3041, 64
    %v3177 = vpop.permute.xlu0 %3176
    %3178 = vrot.lane.b32.xlu0 %v3042, 64
    %v3179 = vpop.permute.xlu0 %3178
    %3180 = vrot.lane.b32.xlu0 %v3043, 64
    %v3181 = vpop.permute.xlu0 %3180
    %3182 = vrot.lane.b32.xlu0 %v3044, 64
    %v3183 = vpop.permute.xlu0 %3182
    %3184 = vrot.lane.b32.xlu0 %v3045, 64
    %v3185 = vpop.permute.xlu0 %3184
    %3186 = vrot.lane.b32.xlu0 %v3046, 64
    %v3187 = vpop.permute.xlu0 %3186
    %3188 = vrot.lane.b32.xlu0 %v3047, 64
    %v3189 = vpop.permute.xlu0 %3188
    %3190 = vrot.lane.b32.xlu0 %v3048, 64
    %v3191 = vpop.permute.xlu0 %3190
    %3192 = vrot.lane.b32.xlu0 %v3049, 64
    %v3193 = vpop.permute.xlu0 %3192
    %v3210 = vmul.f32 %v3003, %v3163
    %v3211 = vmul.f32 %v3005, %v3165
    %v3212 = vmul.f32 %v3007, %v3167
    %v3213 = vmul.f32 %v3009, %v3169
    %v3214 = vmul.f32 %v3011, %v3171
    %v3215 = vmul.f32 %v3013, %v3173
    %v3216 = vmul.f32 %v3015, %v3175
    %v3217 = vmul.f32 %v3017, %v3177
    %v3218 = vmul.f32 %v3019, %v3179
    %v3219 = vmul.f32 %v3021, %v3181
    %v3220 = vmul.f32 %v3023, %v3183
    %v3221 = vmul.f32 %v3025, %v3185
    %v3222 = vmul.f32 %v3027, %v3187
    %v3223 = vmul.f32 %v3029, %v3189
    %v3224 = vmul.f32 %v3031, %v3191
    %v3225 = vmul.f32 %v3033, %v3193
    %3242 = vrot.lane.b32.xlu0 %v3210, 32
    %v3243 = vpop.permute.xlu0 %3242
    %3244 = vrot.lane.b32.xlu0 %v3211, 32
    %v3245 = vpop.permute.xlu0 %3244
    %3246 = vrot.lane.b32.xlu0 %v3212, 32
    %v3247 = vpop.permute.xlu0 %3246
    %3248 = vrot.lane.b32.xlu0 %v3213, 32
    %v3249 = vpop.permute.xlu0 %3248
    %3250 = vrot.lane.b32.xlu0 %v3214, 32
    %v3251 = vpop.permute.xlu0 %3250
    %3252 = vrot.lane.b32.xlu0 %v3215, 32
    %v3253 = vpop.permute.xlu0 %3252
    %3254 = vrot.lane.b32.xlu0 %v3216, 32
    %v3255 = vpop.permute.xlu0 %3254
    %3256 = vrot.lane.b32.xlu0 %v3217, 32
    %v3257 = vpop.permute.xlu0 %3256
    %3258 = vrot.lane.b32.xlu0 %v3218, 32
    %v3259 = vpop.permute.xlu0 %3258
    %3260 = vrot.lane.b32.xlu0 %v3219, 32
    %v3261 = vpop.permute.xlu0 %3260
    %3262 = vrot.lane.b32.xlu0 %v3220, 32
    %v3263 = vpop.permute.xlu0 %3262
    %3264 = vrot.lane.b32.xlu0 %v3221, 32
    %v3265 = vpop.permute.xlu0 %3264
    %3266 = vrot.lane.b32.xlu0 %v3222, 32
    %v3267 = vpop.permute.xlu0 %3266
    %3268 = vrot.lane.b32.xlu0 %v3223, 32
    %v3269 = vpop.permute.xlu0 %3268
    %3270 = vrot.lane.b32.xlu0 %v3224, 32
    %v3271 = vpop.permute.xlu0 %3270
    %3272 = vrot.lane.b32.xlu0 %v3225, 32
    %v3273 = vpop.permute.xlu0 %3272
    %v3290 = vadd.f32 %v3130, %v3243
    %v3291 = vadd.f32 %v3131, %v3245
    %v3292 = vadd.f32 %v3132, %v3247
    %v3293 = vadd.f32 %v3133, %v3249
    %v3294 = vadd.f32 %v3134, %v3251
    %v3295 = vadd.f32 %v3135, %v3253
    %v3296 = vadd.f32 %v3136, %v3255
    %v3297 = vadd.f32 %v3137, %v3257
    %v3298 = vadd.f32 %v3138, %v3259
    %v3299 = vadd.f32 %v3139, %v3261
    %v3300 = vadd.f32 %v3140, %v3263
    %v3301 = vadd.f32 %v3141, %v3265
    %v3302 = vadd.f32 %v3142, %v3267
    %v3303 = vadd.f32 %v3143, %v3269
    %v3304 = vadd.f32 %v3144, %v3271
    %v3305 = vadd.f32 %v3145, %v3273
    %v3306 = vtanh.pop %v3290
    %v3307 = vtanh.pop %v3291
    %v3308 = vtanh.pop %v3292
    %v3309 = vtanh.pop %v3293
    %v3310 = vtanh.pop %v3294
    %v3311 = vtanh.pop %v3295
    %v3312 = vtanh.pop %v3296
    %v3313 = vtanh.pop %v3297
    %v3314 = vtanh.pop %v3298
    %v3315 = vtanh.pop %v3299
    %v3316 = vtanh.pop %v3300
    %v3317 = vtanh.pop %v3301
    %v3318 = vtanh.pop %v3302
    %v3319 = vtanh.pop %v3303
    %v3320 = vtanh.pop %v3304
    %v3321 = vtanh.pop %v3305
    %3338 = vrot.lane.b32.xlu0 %v3306, 64
    %v3339 = vpop.permute.xlu0 %3338
    %3340 = vrot.lane.b32.xlu0 %v3307, 64
    %v3341 = vpop.permute.xlu0 %3340
    %3342 = vrot.lane.b32.xlu0 %v3308, 64
    %v3343 = vpop.permute.xlu0 %3342
    %3344 = vrot.lane.b32.xlu0 %v3309, 64
    %v3345 = vpop.permute.xlu0 %3344
    %3346 = vrot.lane.b32.xlu0 %v3310, 64
    %v3347 = vpop.permute.xlu0 %3346
    %3348 = vrot.lane.b32.xlu0 %v3311, 64
    %v3349 = vpop.permute.xlu0 %3348
    %3350 = vrot.lane.b32.xlu0 %v3312, 64
    %v3351 = vpop.permute.xlu0 %3350
    %3352 = vrot.lane.b32.xlu0 %v3313, 64
    %v3353 = vpop.permute.xlu0 %3352
    %3354 = vrot.lane.b32.xlu0 %v3314, 64
    %v3355 = vpop.permute.xlu0 %3354
    %3356 = vrot.lane.b32.xlu0 %v3315, 64
    %v3357 = vpop.permute.xlu0 %3356
    %3358 = vrot.lane.b32.xlu0 %v3316, 64
    %v3359 = vpop.permute.xlu0 %3358
    %3360 = vrot.lane.b32.xlu0 %v3317, 64
    %v3361 = vpop.permute.xlu0 %3360
    %3362 = vrot.lane.b32.xlu0 %v3318, 64
    %v3363 = vpop.permute.xlu0 %3362
    %3364 = vrot.lane.b32.xlu0 %v3319, 64
    %v3365 = vpop.permute.xlu0 %3364
    %3366 = vrot.lane.b32.xlu0 %v3320, 64
    %v3367 = vpop.permute.xlu0 %3366
    %3368 = vrot.lane.b32.xlu0 %v3321, 64
    %v3369 = vpop.permute.xlu0 %3368
    %v3386 = vmul.f32 %v3003, %v3339
    %v3387 = vmul.f32 %v3005, %v3341
    %v3388 = vmul.f32 %v3007, %v3343
    %v3389 = vmul.f32 %v3009, %v3345
    %v3390 = vmul.f32 %v3011, %v3347
    %v3391 = vmul.f32 %v3013, %v3349
    %v3392 = vmul.f32 %v3015, %v3351
    %v3393 = vmul.f32 %v3017, %v3353
    %v3394 = vmul.f32 %v3019, %v3355
    %v3395 = vmul.f32 %v3021, %v3357
    %v3396 = vmul.f32 %v3023, %v3359
    %v3397 = vmul.f32 %v3025, %v3361
    %v3398 = vmul.f32 %v3027, %v3363
    %v3399 = vmul.f32 %v3029, %v3365
    %v3400 = vmul.f32 %v3031, %v3367
    %v3401 = vmul.f32 %v3033, %v3369
    %v3402 = vmax.f32 %v3386, 0.0
    %v3403 = vmax.f32 %v3387, 0.0
    %v3404 = vmax.f32 %v3388, 0.0
    %v3405 = vmax.f32 %v3389, 0.0
    %v3406 = vmax.f32 %v3390, 0.0
    %v3407 = vmax.f32 %v3391, 0.0
    %v3408 = vmax.f32 %v3392, 0.0
    %v3409 = vmax.f32 %v3393, 0.0
    %v3410 = vmax.f32 %v3394, 0.0
    %v3411 = vmax.f32 %v3395, 0.0
    %v3412 = vmax.f32 %v3396, 0.0
    %v3413 = vmax.f32 %v3397, 0.0
    %v3414 = vmax.f32 %v3398, 0.0
    %v3415 = vmax.f32 %v3399, 0.0
    %v3416 = vmax.f32 %v3400, 0.0
    %v3417 = vmax.f32 %v3401, 0.0
    %v3418 = vpack.c.bf16 %v3403, %v3402
    %v3419 = vpack.c.bf16 %v3405, %v3404
    %v3420 = vpack.c.bf16 %v3407, %v3406
    %v3421 = vpack.c.bf16 %v3409, %v3408
    %v3422 = vpack.c.bf16 %v3411, %v3410
    %v3423 = vpack.c.bf16 %v3413, %v3412
    %v3424 = vpack.c.bf16 %v3415, %v3414
    %v3425 = vpack.c.bf16 %v3417, %v3416
    %v3426 = vld [vmem:[%s10] sm:$0xf]
    %v3427 = vld [vmem:[%s10 + $0x4] sm:$0xf]
    %v3428 = vld [vmem:[%s10 + $0x8] sm:$0xf]
    %v3429 = vld [vmem:[%s10 + $0xc] sm:$0xf]
    %v3430 = vld [vmem:[%s11] sm:$0x1]
    %v3432 = vlaneseq
    %v3433 = vshrl.u32 %v3432, 7
    %v3434 = vsub.s32 0, %v3433
    %v3435 = vrot.slane %v3430, %v3434
    %3445 = vrot.lane.b32.xlu0 %v3418, 32
    %v3446 = vpop.permute.xlu0 %3445
    %3447 = vrot.lane.b32.xlu0 %v3419, 32
    %v3448 = vpop.permute.xlu0 %3447
    %3449 = vrot.lane.b32.xlu0 %v3420, 32
    %v3450 = vpop.permute.xlu0 %3449
    %3451 = vrot.lane.b32.xlu0 %v3421, 32
    %v3452 = vpop.permute.xlu0 %3451
    %3453 = vrot.lane.b32.xlu0 %v3422, 32
    %v3454 = vpop.permute.xlu0 %3453
    %3455 = vrot.lane.b32.xlu0 %v3423, 32
    %v3456 = vpop.permute.xlu0 %3455
    %3457 = vrot.lane.b32.xlu0 %v3424, 32
    %v3458 = vpop.permute.xlu0 %3457
    %3459 = vrot.lane.b32.xlu0 %v3425, 32
    %v3460 = vpop.permute.xlu0 %3459
    %v3465 = vunpack.c.l.b16 %v3426
    %v3466 = vunpack.c.l.b16 %v3427
    %v3467 = vunpack.c.l.b16 %v3428
    %v3468 = vunpack.c.l.b16 %v3429
    %v3469 = vpack.c.b16 %v3466, %v3465
    %v3470 = vpack.c.b16 %v3468, %v3467
    %v3474 = vsel %vm107, %v3446, 0
    %v3477 = vsel %vm107, %v3448, 0
    %v3480 = vsel %vm107, %v3450, 0
    %v3483 = vsel %vm107, %v3452, 0
    %v3486 = vsel %vm107, %v3454, 0
    %v3489 = vsel %vm107, %v3456, 0
    %v3492 = vsel %vm107, %v3458, 0
    %v3495 = vsel %vm107, %v3460, 0
    %3497 = vmatprep.subr.bf16.mxu0 0
    %3498 = vmatpush1.bf16.msra.mxu0 %v3469
    %3499 = vmatprep.subr.bf16.mxu0 0
    %3500 = vmatpush1.bf16.msra.mxu0 %v3470
    %3501 = vmatprep.subr.bf16.mxu0 0
    %3502 = vmatpush1.bf16.msra.mxu0 0
    %3503 = vmatprep.subr.bf16.mxu0 0
    %3504 = vmatpush1.bf16.msra.mxu0 0
    %3505 = vmatprep.subr.bf16.mxu0 0
    %3506 = vmatpush1.bf16.msra.mxu0 0
    %3507 = vmatprep.subr.bf16.mxu0 0
    %3508 = vmatpush1.bf16.msra.mxu0 0
    %3509 = vmatprep.subr.bf16.mxu0 0
    %3510 = vmatpush1.bf16.msra.mxu0 0
    %3511 = vmatprep.subr.bf16.mxu0 0
    %3512 = vmatpush1.bf16.msra.mxu0 0
    %3513 = vmatprep.subr.bf16.mxu0 0
    %3514 = vmatpush1.bf16.msra.mxu0 0
    %3515 = vmatprep.subr.bf16.mxu0 0
    %3516 = vmatpush1.bf16.msra.mxu0 0
    %3517 = vmatprep.subr.bf16.mxu0 0
    %3518 = vmatpush1.bf16.msra.mxu0 0
    %3519 = vmatprep.subr.bf16.mxu0 0
    %3520 = vmatpush1.bf16.msra.mxu0 0
    %3521 = vmatprep.subr.bf16.mxu0 0
    %3522 = vmatpush1.bf16.msra.mxu0 0
    %3523 = vmatprep.subr.bf16.mxu0 0
    %3524 = vmatpush1.bf16.msra.mxu0 0
    %3525 = vmatprep.subr.bf16.mxu0 0
    %3526 = vmatpush1.bf16.msra.mxu0 0
    %3527 = vmatprep.subr.bf16.mxu0 0
    %3528 = vmatpush1.bf16.msra.mxu0 0
    %3529 = vmatprep.mubr.bf16.mxu0 0
    %3530 = vmatmul.mubr.bf16.gmra.mrb[0].mxu0 %v3474
    %v3531 = vpop.f32.mrb[0].mxu0
    %v3532 = vadd.f32 %v3435, %v3531
    %v3533 = vpop.f32.mrb[0].mxu0
    %v3534 = vpop.f32.mrb[0].mxu0
    %v3535 = vadd.f32 %v3435, %v3534
    %v3536 = vpop.f32.mrb[0].mxu0
    %3537 = vmatprep.mubr.bf16.mxu0 0
    %3538 = vmatmul.mubr.bf16.gmra.mrb[0].mxu0 %v3477
    %v3539 = vpop.f32.mrb[0].mxu0
    %v3540 = vadd.f32 %v3435, %v3539
    %v3541 = vpop.f32.mrb[0].mxu0
    %v3542 = vpop.f32.mrb[0].mxu0
    %v3543 = vadd.f32 %v3435, %v3542
    %v3544 = vpop.f32.mrb[0].mxu0
    %3545 = vmatprep.mubr.bf16.mxu0 0
    %3546 = vmatmul.mubr.bf16.gmra.mrb[0].mxu0 %v3480
    %v3547 = vpop.f32.mrb[0].mxu0
    %v3548 = vadd.f32 %v3435, %v3547
    %v3549 = vpop.f32.mrb[0].mxu0
    %v3550 = vpop.f32.mrb[0].mxu0
    %v3551 = vadd.f32 %v3435, %v3550
    %v3552 = vpop.f32.mrb[0].mxu0
    %3553 = vmatprep.mubr.bf16.mxu0 0
    %3554 = vmatmul.mubr.bf16.gmra.mrb[0].mxu0 %v3483
    %v3555 = vpop.f32.mrb[0].mxu0
    %v3556 = vadd.f32 %v3435, %v3555
    %v3557 = vpop.f32.mrb[0].mxu0
    %v3558 = vpop.f32.mrb[0].mxu0
    %v3559 = vadd.f32 %v3435, %v3558
    %v3560 = vpop.f32.mrb[0].mxu0
    %3561 = vmatprep.mubr.bf16.mxu0 0
    %3562 = vmatmul.mubr.bf16.gmra.mrb[0].mxu0 %v3486
    %v3563 = vpop.f32.mrb[0].mxu0
    %v3564 = vadd.f32 %v3435, %v3563
    %v3565 = vpop.f32.mrb[0].mxu0
    %v3566 = vpop.f32.mrb[0].mxu0
    %v3567 = vadd.f32 %v3435, %v3566
    %v3568 = vpop.f32.mrb[0].mxu0
    %3569 = vmatprep.mubr.bf16.mxu0 0
    %3570 = vmatmul.mubr.bf16.gmra.mrb[0].mxu0 %v3489
    %v3571 = vpop.f32.mrb[0].mxu0
    %v3572 = vadd.f32 %v3435, %v3571
    %v3573 = vpop.f32.mrb[0].mxu0
    %v3574 = vpop.f32.mrb[0].mxu0
    %v3575 = vadd.f32 %v3435, %v3574
    %v3576 = vpop.f32.mrb[0].mxu0
    %3577 = vmatprep.mubr.bf16.mxu0 0
    %3578 = vmatmul.mubr.bf16.gmra.mrb[0].mxu0 %v3492
    %v3579 = vpop.f32.mrb[0].mxu0
    %v3580 = vadd.f32 %v3435, %v3579
    %v3581 = vpop.f32.mrb[0].mxu0
    %v3582 = vpop.f32.mrb[0].mxu0
    %v3583 = vadd.f32 %v3435, %v3582
    %v3584 = vpop.f32.mrb[0].mxu0
    %3585 = vmatprep.mubr.bf16.mxu0 0
    %3586 = vmatmul.mubr.bf16.gmra.mrb[0].mxu0 %v3495
    %v3587 = vpop.f32.mrb[0].mxu0
    %v3588 = vadd.f32 %v3435, %v3587
    %v3589 = vpop.f32.mrb[0].mxu0
    %v3590 = vpop.f32.mrb[0].mxu0
    %v3591 = vadd.f32 %v3435, %v3590
    %v3592 = vpop.f32.mrb[0].mxu0
    %3593 = vdwg.mxu0
    %3594 = vst [vmem:[#allocation2] sm:$0xff] %v3532
    %3595 = vst [vmem:[#allocation2 + $0x8] sm:$0xff] %v3535
    %3596 = vst [vmem:[#allocation2 + $0x10] sm:$0xff] %v3540
    %3597 = vst [vmem:[#allocation2 + $0x18] sm:$0xff] %v3543
    %3598 = vst [vmem:[#allocation2 + $0x20] sm:$0xff] %v3548
    %3599 = vst [vmem:[#allocation2 + $0x28] sm:$0xff] %v3551
    %3600 = vst [vmem:[#allocation2 + $0x30] sm:$0xff] %v3556
    %3601 = vst [vmem:[#allocation2 + $0x38] sm:$0xff] %v3559
    %3602 = vst [vmem:[#allocation2 + $0x40] sm:$0xff] %v3564
    %3603 = vst [vmem:[#allocation2 + $0x48] sm:$0xff] %v3567
    %3604 = vst [vmem:[#allocation2 + $0x50] sm:$0xff] %v3572
    %3605 = vst [vmem:[#allocation2 + $0x58] sm:$0xff] %v3575
    %3606 = vst [vmem:[#allocation2 + $0x60] sm:$0xff] %v3580
    %3607 = vst [vmem:[#allocation2 + $0x68] sm:$0xff] %v3583
    %3608 = vst [vmem:[#allocation2 + $0x70] sm:$0xff] %v3588
    %3609 = vst [vmem:[#allocation2 + $0x78] sm:$0xff] %v3591
    %v3610 = vpack.c.bf16 %v3535, %v3532
    %v3611 = vpack.c.bf16 %v3543, %v3540
    %v3612 = vpack.c.bf16 %v3551, %v3548
    %v3613 = vpack.c.bf16 %v3559, %v3556
    %v3614 = vpack.c.bf16 %v3567, %v3564
    %v3615 = vpack.c.bf16 %v3575, %v3572
    %v3616 = vpack.c.bf16 %v3583, %v3580
    %v3617 = vpack.c.bf16 %v3591, %v3588
    %3618 = vmatprep.subr.bf16.mxu0 0
    %3619 = vmatpush1.bf16.xpose.msra.mxu0 %v3610
    %3620 = vmatprep.subr.bf16.mxu0 0
    %3621 = vmatpush1.bf16.xpose.msra.mxu0 %v3611
    %3622 = vmatprep.subr.bf16.mxu0 0
    %3623 = vmatpush1.bf16.xpose.msra.mxu0 %v3612
    %3624 = vmatprep.subr.bf16.mxu0 0
    %3625 = vmatpush1.bf16.xpose.msra.mxu0 %v3613
    %3626 = vmatprep.subr.bf16.mxu0 0
    %3627 = vmatpush1.bf16.xpose.msra.mxu0 %v3614
    %3628 = vmatprep.subr.bf16.mxu0 0
    %3629 = vmatpush1.bf16.xpose.msra.mxu0 %v3615
    %3630 = vmatprep.subr.bf16.mxu0 0
    %3631 = vmatpush1.bf16.xpose.msra.mxu0 %v3616
    %3632 = vmatprep.subr.bf16.mxu0 0
    %3633 = vmatpush1.bf16.xpose.msra.mxu0 %v3617
    %3634 = vmatprep.subr.bf16.mxu0 0
    %3635 = vmatpush1.bf16.xpose.msra.mxu0 0
    %3636 = vmatprep.subr.bf16.mxu0 0
    %3637 = vmatpush1.bf16.xpose.msra.mxu0 0
    %3638 = vmatprep.subr.bf16.mxu0 0
    %3639 = vmatpush1.bf16.xpose.msra.mxu0 0
    %3640 = vmatprep.subr.bf16.mxu0 0
    %3641 = vmatpush1.bf16.xpose.msra.mxu0 0
    %3642 = vmatprep.subr.bf16.mxu0 0
    %3643 = vmatpush1.bf16.xpose.msra.mxu0 0
    %3644 = vmatprep.subr.bf16.mxu0 0
    %3645 = vmatpush1.bf16.xpose.msra.mxu0 0
    %3646 = vmatprep.subr.bf16.mxu0 0
    %3647 = vmatpush1.bf16.xpose.msra.mxu0 0
    %3648 = vmatprep.subr.bf16.mxu0 0
    %3649 = vmatpush1.bf16.xpose.msra.mxu0 0
    %3650 = vmatprep.mubr.bf16.mxu0 0
    %3651 = vmatmul.mubr.bf16.gmra.mrb[0].mxu0 %v3610
    %v3652 = vpop.f32.mrb[0].mxu0
    %v3653 = vadd.f32 0.0, %v3652
    %v3654 = vpop.f32.mrb[0].mxu0
    %v3655 = vpop.f32.mrb[0].mxu0
    %v3656 = vadd.f32 0.0, %v3655
    %v3657 = vpop.f32.mrb[0].mxu0
    %3658 = vmatprep.mubr.bf16.mxu0 0
    %3659 = vmatmul.mubr.bf16.gmra.mrb[0].mxu0 %v3611
    %v3660 = vpop.f32.mrb[0].mxu0
    %v3661 = vadd.f32 0.0, %v3660
    %v3662 = vpop.f32.mrb[0].mxu0
    %v3663 = vpop.f32.mrb[0].mxu0
    %v3664 = vadd.f32 0.0, %v3663
    %v3665 = vpop.f32.mrb[0].mxu0
    %3666 = vmatprep.mubr.bf16.mxu0 0
    %3667 = vmatmul.mubr.bf16.gmra.mrb[0].mxu0 %v3612
    %v3668 = vpop.f32.mrb[0].mxu0
    %v3669 = vadd.f32 0.0, %v3668
    %v3670 = vpop.f32.mrb[0].mxu0
    %v3671 = vpop.f32.mrb[0].mxu0
    %v3672 = vadd.f32 0.0, %v3671
    %v3673 = vpop.f32.mrb[0].mxu0
    %3674 = vmatprep.mubr.bf16.mxu0 0
    %3675 = vmatmul.mubr.bf16.gmra.mrb[0].mxu0 %v3613
    %v3676 = vpop.f32.mrb[0].mxu0
    %v3677 = vadd.f32 0.0, %v3676
    %v3678 = vpop.f32.mrb[0].mxu0
    %v3679 = vpop.f32.mrb[0].mxu0
    %v3680 = vadd.f32 0.0, %v3679
    %v3681 = vpop.f32.mrb[0].mxu0
    %3682 = vmatprep.mubr.bf16.mxu0 0
    %3683 = vmatmul.mubr.bf16.gmra.mrb[0].mxu0 %v3614
    %v3684 = vpop.f32.mrb[0].mxu0
    %v3685 = vadd.f32 0.0, %v3684
    %v3686 = vpop.f32.mrb[0].mxu0
    %v3687 = vpop.f32.mrb[0].mxu0
    %v3688 = vadd.f32 0.0, %v3687
    %v3689 = vpop.f32.mrb[0].mxu0
    %3690 = vmatprep.mubr.bf16.mxu0 0
    %3691 = vmatmul.mubr.bf16.gmra.mrb[0].mxu0 %v3615
    %v3692 = vpop.f32.mrb[0].mxu0
    %v3693 = vadd.f32 0.0, %v3692
    %v3694 = vpop.f32.mrb[0].mxu0
    %v3695 = vpop.f32.mrb[0].mxu0
    %v3696 = vadd.f32 0.0, %v3695
    %v3697 = vpop.f32.mrb[0].mxu0
    %3698 = vmatprep.mubr.bf16.mxu0 0
    %3699 = vmatmul.mubr.bf16.gmra.mrb[0].mxu0 %v3616
    %v3700 = vpop.f32.mrb[0].mxu0
    %v3701 = vadd.f32 0.0, %v3700
    %v3702 = vpop.f32.mrb[0].mxu0
    %v3703 = vpop.f32.mrb[0].mxu0
    %v3704 = vadd.f32 0.0, %v3703
    %v3705 = vpop.f32.mrb[0].mxu0
    %3706 = vmatprep.mubr.bf16.mxu0 0
    %3707 = vmatmul.mubr.bf16.gmra.mrb[0].mxu0 %v3617
    %v3708 = vpop.f32.mrb[0].mxu0
    %v3709 = vadd.f32 0.0, %v3708
    %v3710 = vpop.f32.mrb[0].mxu0
    %v3711 = vpop.f32.mrb[0].mxu0
    %v3712 = vadd.f32 0.0, %v3711
    %v3713 = vpop.f32.mrb[0].mxu0
    %3714 = vdwg.mxu0
    %v3715 = vxor.u32 %v3653, 2147483648
    %v3716 = vxor.u32 %v3656, 2147483648
    %v3717 = vxor.u32 %v3661, 2147483648
    %v3718 = vxor.u32 %v3664, 2147483648
    %v3719 = vxor.u32 %v3669, 2147483648
    %v3720 = vxor.u32 %v3672, 2147483648
    %v3721 = vxor.u32 %v3677, 2147483648
    %v3722 = vxor.u32 %v3680, 2147483648
    %v3723 = vxor.u32 %v3685, 2147483648
    %v3724 = vxor.u32 %v3688, 2147483648
    %v3725 = vxor.u32 %v3693, 2147483648
    %v3726 = vxor.u32 %v3696, 2147483648
    %v3727 = vxor.u32 %v3701, 2147483648
    %v3728 = vxor.u32 %v3704, 2147483648
    %v3729 = vxor.u32 %v3709, 2147483648
    %v3730 = vxor.u32 %v3712, 2147483648
    %v3731 = vmul.f32 %v3715, 1.442695
    %v3732 = vpow.pop %v3731
    %v3733 = vmul.f32 %v3716, 1.442695
    %v3734 = vpow.pop %v3733
    %v3735 = vmul.f32 %v3717, 1.442695
    %v3736 = vpow.pop %v3735
    %v3737 = vmul.f32 %v3718, 1.442695
    %v3738 = vpow.pop %v3737
    %v3739 = vmul.f32 %v3719, 1.442695
    %v3740 = vpow.pop %v3739
    %v3741 = vmul.f32 %v3720, 1.442695
    %v3742 = vpow.pop %v3741
    %v3743 = vmul.f32 %v3721, 1.442695
    %v3744 = vpow.pop %v3743
    %v3745 = vmul.f32 %v3722, 1.442695
    %v3746 = vpow.pop %v3745
    %v3747 = vmul.f32 %v3723, 1.442695
    %v3748 = vpow.pop %v3747
    %v3749 = vmul.f32 %v3724, 1.442695
    %v3750 = vpow.pop %v3749
    %v3751 = vmul.f32 %v3725, 1.442695
    %v3752 = vpow.pop %v3751
    %v3753 = vmul.f32 %v3726, 1.442695
    %v3754 = vpow.pop %v3753
    %v3755 = vmul.f32 %v3727, 1.442695
    %v3756 = vpow.pop %v3755
    %v3757 = vmul.f32 %v3728, 1.442695
    %v3758 = vpow.pop %v3757
    %v3759 = vmul.f32 %v3729, 1.442695
    %v3760 = vpow.pop %v3759
    %v3761 = vmul.f32 %v3730, 1.442695
    %v3762 = vpow.pop %v3761
    %v3763 = vadd.f32 %v3732, 1.0
    %v3764 = vadd.f32 %v3734, 1.0
    %v3765 = vadd.f32 %v3736, 1.0
    %v3766 = vadd.f32 %v3738, 1.0
    %v3767 = vadd.f32 %v3740, 1.0
    %v3768 = vadd.f32 %v3742, 1.0
    %v3769 = vadd.f32 %v3744, 1.0
    %v3770 = vadd.f32 %v3746, 1.0
    %v3771 = vadd.f32 %v3748, 1.0
    %v3772 = vadd.f32 %v3750, 1.0
    %v3773 = vadd.f32 %v3752, 1.0
    %v3774 = vadd.f32 %v3754, 1.0
    %v3775 = vadd.f32 %v3756, 1.0
    %v3776 = vadd.f32 %v3758, 1.0
    %v3777 = vadd.f32 %v3760, 1.0
    %v3778 = vadd.f32 %v3762, 1.0
    %v3779 = vrcp.pop %v3763
    %v3780 = vmul.f32 1.0, %v3779
    %v3781 = vrcp.pop %v3764
    %v3782 = vmul.f32 1.0, %v3781
    %v3783 = vrcp.pop %v3765
    %v3784 = vmul.f32 1.0, %v3783
    %v3785 = vrcp.pop %v3766
    %v3786 = vmul.f32 1.0, %v3785
    %v3787 = vrcp.pop %v3767
    %v3788 = vmul.f32 1.0, %v3787
    %v3789 = vrcp.pop %v3768
    %v3790 = vmul.f32 1.0, %v3789
    %v3791 = vrcp.pop %v3769
    %v3792 = vmul.f32 1.0, %v3791
    %v3793 = vrcp.pop %v3770
    %v3794 = vmul.f32 1.0, %v3793
    %v3795 = vrcp.pop %v3771
    %v3796 = vmul.f32 1.0, %v3795
    %v3797 = vrcp.pop %v3772
    %v3798 = vmul.f32 1.0, %v3797
    %v3799 = vrcp.pop %v3773
    %v3800 = vmul.f32 1.0, %v3799
    %v3801 = vrcp.pop %v3774
    %v3802 = vmul.f32 1.0, %v3801
    %v3803 = vrcp.pop %v3775
    %v3804 = vmul.f32 1.0, %v3803
    %v3805 = vrcp.pop %v3776
    %v3806 = vmul.f32 1.0, %v3805
    %v3807 = vrcp.pop %v3777
    %v3808 = vmul.f32 1.0, %v3807
    %v3809 = vrcp.pop %v3778
    %v3810 = vmul.f32 1.0, %v3809
    %v3811 = vpack.c.bf16 %v3782, %v3780
    %v3812 = vpack.c.bf16 %v3786, %v3784
    %v3813 = vpack.c.bf16 %v3790, %v3788
    %v3814 = vpack.c.bf16 %v3794, %v3792
    %v3815 = vpack.c.bf16 %v3798, %v3796
    %v3816 = vpack.c.bf16 %v3802, %v3800
    %v3817 = vpack.c.bf16 %v3806, %v3804
    %v3818 = vpack.c.bf16 %v3810, %v3808
    %v3827 = vunpack.c.l.b16 %v3811
    %v3828 = vunpack.c.h.b16 %v3811
    %v3829 = vunpack.c.l.b16 %v3812
    %v3830 = vunpack.c.h.b16 %v3812
    %v3831 = vunpack.c.l.b16 %v3813
    %v3832 = vunpack.c.h.b16 %v3813
    %v3833 = vunpack.c.l.b16 %v3814
    %v3834 = vunpack.c.h.b16 %v3814
    %v3835 = vunpack.c.l.b16 %v3815
    %v3836 = vunpack.c.h.b16 %v3815
    %v3837 = vunpack.c.l.b16 %v3816
    %v3838 = vunpack.c.h.b16 %v3816
    %v3839 = vunpack.c.l.b16 %v3817
    %v3840 = vunpack.c.h.b16 %v3817
    %v3841 = vunpack.c.l.b16 %v3818
    %v3842 = vunpack.c.h.b16 %v3818
    %v3843 = vpack.c.b16 %v3827, %v3827
    %v3844 = vpack.c.b16 %v3828, %v3828
    %v3845 = vpack.c.b16 %v3829, %v3829
    %v3846 = vpack.c.b16 %v3830, %v3830
    %v3847 = vpack.c.b16 %v3831, %v3831
    %v3848 = vpack.c.b16 %v3832, %v3832
    %v3849 = vpack.c.b16 %v3833, %v3833
    %v3850 = vpack.c.b16 %v3834, %v3834
    %v3851 = vpack.c.b16 %v3835, %v3835
    %v3852 = vpack.c.b16 %v3836, %v3836
    %v3853 = vpack.c.b16 %v3837, %v3837
    %v3854 = vpack.c.b16 %v3838, %v3838
    %v3855 = vpack.c.b16 %v3839, %v3839
    %v3856 = vpack.c.b16 %v3840, %v3840
    %v3857 = vpack.c.b16 %v3841, %v3841
    %v3858 = vpack.c.b16 %v3842, %v3842
    %3875 = vst [vmem:[#allocation4] sm:$0xf] %v3843
    %3876 = vst [vmem:[#allocation4 + $0x4] sm:$0xf] %v3844
    %3877 = vst [vmem:[#allocation4 + $0x8] sm:$0xf] %v3845
    %3878 = vst [vmem:[#allocation4 + $0xc] sm:$0xf] %v3846
    %3879 = vst [vmem:[#allocation4 + $0x10] sm:$0xf] %v3847
    %3880 = vst [vmem:[#allocation4 + $0x14] sm:$0xf] %v3848
    %3881 = vst [vmem:[#allocation4 + $0x18] sm:$0xf] %v3849
    %3882 = vst [vmem:[#allocation4 + $0x1c] sm:$0xf] %v3850
    %3883 = vst [vmem:[#allocation4 + $0x20] sm:$0xf] %v3851
    %3884 = vst [vmem:[#allocation4 + $0x24] sm:$0xf] %v3852
    %3885 = vst [vmem:[#allocation4 + $0x28] sm:$0xf] %v3853
    %3886 = vst [vmem:[#allocation4 + $0x2c] sm:$0xf] %v3854
    %3887 = vst [vmem:[#allocation4 + $0x30] sm:$0xf] %v3855
    %3888 = vst [vmem:[#allocation4 + $0x34] sm:$0xf] %v3856
    %3889 = vst [vmem:[#allocation4 + $0x38] sm:$0xf] %v3857
    %3890 = vst [vmem:[#allocation4 + $0x3c] sm:$0xf] %v3858
    // Predicated region
    $region50: #{tpu_custom_call.1} parent=1 // pred_check
      _
    $region51: #{tpu_custom_call.1} parent=1 // pred_check_branch
      %3892 = sbr.rel (0) target = $region53
    $region52: #{tpu_custom_call.1} parent=1 // pred_region
      %s3894 = ssub.s32 2048, 2048
      %3895 = vsyncadd [#allocation3], %s3894
      %s3896 = sshll.u32 [#allocation2], 4
      %s3897 = int_to_ptr.vmem [resolvable:$true] %s3896
      %3902 = dma.vmem_to_hbm [thread:$0]  %s3897, 2048, %s12, [#allocation3], 128, 128, 8
    $region53: #{tpu_custom_call.1} parent=1 // pred_fallthru
      _
    // Predicated region
    $region54: #{tpu_custom_call.1} parent=1 // pred_check
      _
    $region55: #{tpu_custom_call.1} parent=1 // pred_check_branch
      %3904 = sbr.rel (0) target = $region57
    $region56: #{tpu_custom_call.1} parent=1 // pred_region
      %s3906 = ssub.s32 1024, 1024
      %3907 = vsyncadd [#allocation5], %s3906
      %s3908 = sshll.u32 [#allocation4], 4
      %s3909 = int_to_ptr.vmem [resolvable:$true] %s3908
      %3914 = dma.vmem_to_hbm [thread:$0]  %s3909, 1024, %s13, [#allocation5], 64, 64, 4
    $region57: #{tpu_custom_call.1} parent=1 // pred_fallthru
      _
    // Predicated region
    $region58: #{tpu_custom_call.1} parent=1 // pred_check
      _
    $region59: #{tpu_custom_call.1} parent=1 // pred_check_branch
      %3916 = sbr.rel (0) target = $region61
    $region60: #{tpu_custom_call.1} parent=1 // pred_region
      %3917 = dma.done [#allocation3], 2048
    $region61: #{tpu_custom_call.1} parent=1 // pred_fallthru
      _
    // Predicated region
    $region62: #{tpu_custom_call.1} parent=1 // pred_check
      _
    $region63: #{tpu_custom_call.1} parent=1 // pred_check_branch
      %3919 = sbr.rel (0) target = $region65
    $region64: #{tpu_custom_call.1} parent=1 // pred_region
      %3920 = dma.done [#allocation5], 1024
    $region65: #{tpu_custom_call.1} parent=1 // pred_fallthru
      _
    %3921 = vsyncpa [#allocation3], 1
    %3922 = vsyncpa [#allocation5], 1

</llo_original>
